<compile_context>
chip_gen: v5e
topology: v5e:2x2
jax: 0.10.0
libtpu: 0.0.40
codegen_flags: <defaults>
</compile_context>

<pallas_src>
import jax
import jax.numpy as jnp
import numpy as np
from jax.experimental import pallas as pl
from jax.experimental.pallas import tpu as pltpu

# ----------------------- synthetic ESM2-style config -----------------------
VOCAB_AA = list('ARNDCQEGHILKMFPSTWYV')
NUM_SPECIALS = 4                                  # <cls>=0 <pad>=1 <eos>=2 <unk>=3
CLS_ID, EOS_ID = 0, 2
VOCAB_SIZE = NUM_SPECIALS + len(VOCAB_AA)         # 24
HIDDEN = 32
HEADS = 4
HEAD_DIM = HIDDEN // HEADS
HALF = HEAD_DIM // 2
FFN = 64
LAYERS = 2
PARAM_DTYPE = jnp.bfloat16                        # mirrors autocast bf16 path
LN_EPS = 1e-5
F32 = jnp.float32
SUBLANE_PAD = 16                                  # bf16 sublane packing granule

WEIGHT_ORDER = ('ln1_g', 'ln1_b', 'wqkv', 'bqkv', 'wo', 'bo',
                'ln2_g', 'ln2_b', 'w1', 'b1', 'w2', 'b2')


# ------------------------------ fused kernel --------------------------------
def _ln(x, g, b):
    mu = jnp.mean(x, axis=-1, keepdims=True)
    xc = x - mu
    var = jnp.mean(xc * xc, axis=-1, keepdims=True)
    return xc * jax.lax.rsqrt(var + LN_EPS) * g + b


def _make_esm2_kernel(bb, s_pad, s_valid):
    """bb sequences per grid block, seq padded to s_pad, s_valid real tokens."""
    bs = bb * s_pad
    qh = HEADS * HALF                              # 16 lanes per half-slab

    def kernel(x_ref, cos_ref, sin_ref,
               ln1g_ref, ln1b_ref, wqkv_ref, bqkv_ref, wo_ref, bo_ref,
               ln2g_ref, ln2b_ref, w1_ref, b1_ref, w2_ref, b2_ref,
               lnfg_ref, lnfb_ref, o_ref):
        # fold the batch block into the matmul M dimension: (bb, s_pad, D) -> (bs, D)
        x = x_ref[...].astype(F32).reshape(bs, HIDDEN)

        # rotary tables (hoisted out of the layer loop), tiled across the block
        cos = cos_ref[...] if bb == 1 else jnp.tile(cos_ref[...], (bb, 1))   # (bs, 16)
        sin = sin_ref[...] if bb == 1 else jnp.tile(sin_ref[...], (bb, 1))
        scale = HEAD_DIM ** -0.5
        cos_q, sin_q = cos * scale, sin * scale    # fold 1/sqrt(Dh) into q rotary

        # additive key-padding mask (padded positions -> -1e30), built once
        col = jax.lax.broadcasted_iota(jnp.int32, (1, s_pad), 1)
        kmask = jnp.where(col < s_valid, 0.0, -1e30).astype(F32)             # (1, s_pad)

        for l in range(LAYERS):                    # static unroll, weights indexed by l
            # ---------------- self-attention block (pre-LN, rotary) -------------
            h = _ln(x, ln1g_ref[l].astype(F32), ln1b_ref[l].astype(F32))
            # fused QKV projection on the whole batch block: one (bs, D)x(D, 3D) pass
            qkv = jnp.dot(h.astype(PARAM_DTYPE), wqkv_ref[l],
                          preferred_element_type=F32) + bqkv_ref[l].astype(F32)
            # permuted layout: [q half1 | q half2 | k half1 | k half2 | v]
            q1, q2 = qkv[:, 0 * qh:1 * qh], qkv[:, 1 * qh:2 * qh]
            k1, k2 = qkv[:, 2 * qh:3 * qh], qkv[:, 3 * qh:4 * qh]
            v = qkv[:, 4 * qh:]
            # rotary for ALL heads in one shot on 16-lane slabs; cast to bf16 once
            rq1 = (q1 * cos_q - q2 * sin_q).astype(PARAM_DTYPE).reshape(bb, s_pad, qh)
            rq2 = (q2 * cos_q + q1 * sin_q).astype(PARAM_DTYPE).reshape(bb, s_pad, qh)
            rk1 = (k1 * cos - k2 * sin).astype(PARAM_DTYPE).reshape(bb, s_pad, qh)
            rk2 = (k2 * cos + k1 * sin).astype(PARAM_DTYPE).reshape(bb, s_pad, qh)
            vb = v.astype(PARAM_DTYPE).reshape(bb, s_pad, HIDDEN)

            heads_out = []
            for hh in range(HEADS):                # per-head S x S attention
                c0 = hh * HALF
                s_ = (jnp.einsum('bsd,btd->bst',
                                 rq1[:, :, c0:c0 + HALF], rk1[:, :, c0:c0 + HALF],
                                 preferred_element_type=F32)
                      + jnp.einsum('bsd,btd->bst',
                                   rq2[:, :, c0:c0 + HALF], rk2[:, :, c0:c0 + HALF],
                                   preferred_element_type=F32))              # (bb,S,S)
                s_ = s_ + kmask                     # mask padded key positions
                m = jnp.max(s_, axis=-1, keepdims=True)
                p = jnp.exp(s_ - m)
                p = p * pl.reciprocal(jnp.sum(p, axis=-1, keepdims=True), approx=True)
                heads_out.append(
                    jnp.einsum('bst,btd->bsd', p.astype(PARAM_DTYPE),
                               vb[:, :, hh * HEAD_DIM:(hh + 1) * HEAD_DIM],
                               preferred_element_type=F32))                  # (bb,S,Dh)

            # ONE Wo matmul for all heads (head-concat is standard head-major layout)
            o_all = jnp.concatenate(heads_out, axis=-1).reshape(bs, HIDDEN)
            attn = jnp.dot(o_all.astype(PARAM_DTYPE), wo_ref[l],
                           preferred_element_type=F32) + bo_ref[l].astype(F32)
            x = x + attn                            # fused residual add

            # ----------------------- feed-forward block -------------------------
            h2 = _ln(x, ln2g_ref[l].astype(F32), ln2b_ref[l].astype(F32))
            g = jnp.dot(h2.astype(PARAM_DTYPE), w1_ref[l],
                        preferred_element_type=F32) + b1_ref[l].astype(F32)
            # TODO(synk): HF ESM2 uses exact (erf) GELU; tanh approximation kept
            # here (EUP-friendly, drift ~1e-3 vs the PyTorch reference).
            g = jax.nn.gelu(g, approximate=True)
            x = x + jnp.dot(g.astype(PARAM_DTYPE), w2_ref[l],
                            preferred_element_type=F32) + b2_ref[l].astype(F32)

        x = _ln(x, lnfg_ref[...].astype(F32), lnfb_ref[...].astype(F32))  # final LN
        o_ref[...] = x.reshape(bb, s_pad, HIDDEN).astype(o_ref.dtype)

    return kernel


def esm2_fused_forward(x_emb, cos_t, sin_t, stacked, ln_f_g, ln_f_b,
                       *, s_valid, num_blocks=2):
    """x_emb: (N, S_pad, D) bf16 -> (N, S_pad, D) f32; one pallas_call total."""
    n_in, s_pad, d = x_emb.shape
    nb = max(1, min(num_blocks, n_in))            # one fat block per TC on v7x
    bb = -(-n_in // nb)                           # sequences per block
    n_pad = nb * bb
    if n_pad != n_in:
        x_emb = jnp.pad(x_emb, ((0, n_pad - n_in), (0, 0), (0, 0)))

    def full_spec(arr):
        nd = arr.ndim
        # full-array block, constant index -> stays VMEM-resident across grid steps
        return pl.BlockSpec(arr.shape, lambda n, _nd=nd: (0,) * _nd)

    weight_args = [stacked[k] for k in WEIGHT_ORDER]
    in_specs = ([pl.BlockSpec((bb, s_pad, d), lambda n: (n, 0, 0)),
                 full_spec(cos_t), full_spec(sin_t)]
                + [full_spec(w) for w in weight_args]
                + [full_spec(ln_f_g), full_spec(ln_f_b)])
    out_spec = pl.BlockSpec((bb, s_pad, d), lambda n: (n, 0, 0))

    # small-but-accurate cost hint so XLA schedules surrounding ops around us
    flops = (2 * n_pad * s_pad * LAYERS * (HIDDEN * 3 * HIDDEN + HIDDEN * HIDDEN
                                           + 2 * HIDDEN * FFN)
             + 2 * n_pad * LAYERS * HEADS * 2 * s_pad * s_pad * HEAD_DIM)
    transc = n_pad * LAYERS * (HEADS * s_pad * s_pad + s_pad * FFN)
    bytes_acc = (x_emb.size * 2 + n_pad * s_pad * d * 4
                 + sum(int(np.prod(w.shape)) for w in weight_args) * 2
                 + 2 * cos_t.size * 4)

    out = pl.pallas_call(
        _make_esm2_kernel(bb, s_pad, s_valid),
        out_shape=jax.ShapeDtypeStruct((n_pad, s_pad, d), jnp.float32),
        grid=(nb,),
        in_specs=in_specs,
        out_specs=out_spec,
        compiler_params=pltpu.CompilerParams(
            dimension_semantics=("parallel",)),   # one block per TC on v7x
        cost_estimate=pl.CostEstimate(flops=int(flops),
                                      transcendentals=int(transc),
                                      bytes_accessed=int(bytes_acc)),
    )(x_emb, cos_t, sin_t, *weight_args, ln_f_g, ln_f_b)
    return out[:n_in]


# ------------------------------- JAX glue ----------------------------------
def rotary_tables(seq_len, dh):
    # Hoisted out of the forward pass: computed once at setup, tiled per head.
    inv_freq = 1.0 / (10000.0 ** (jnp.arange(0, dh, 2, dtype=jnp.float32) / dh))
    t = jnp.arange(seq_len, dtype=jnp.float32)
    freqs = jnp.einsum('s,d->sd', t, inv_freq)                 # (S_pad, dh//2)
    cos, sin = jnp.cos(freqs), jnp.sin(freqs)
    # tile to (S_pad, HEADS*HALF): matches the head-major permuted q/k half-slabs
    return jnp.tile(cos, (1, HEADS)), jnp.tile(sin, (1, HEADS))


def tokenize(prot):
    # prot: (N, L) int indices into VOCAB_AA.  ESM-style: <cls> seq <eos>.
    n = prot.shape[0]
    cls = jnp.full((n, 1), CLS_ID, dtype=jnp.int32)
    eos = jnp.full((n, 1), EOS_ID, dtype=jnp.int32)
    aa = prot.astype(jnp.int32) + NUM_SPECIALS
    return jnp.concatenate([cls, aa, eos], axis=1)             # (N, L+2)


def init_params(key):
    def dense(k, shape, scale=0.02):
        return (scale * jax.random.normal(k, shape, dtype=jnp.float32)).astype(PARAM_DTYPE)

    keys = jax.random.split(key, 1 + LAYERS)
    embed = dense(keys[0], (VOCAB_SIZE, HIDDEN))

    # column permutation for q/k: [h0..h3 first halves | h0..h3 second halves]
    perm = np.array([h * HEAD_DIM + j for h in range(HEADS) for j in range(HALF)]
                    + [h * HEAD_DIM + HALF + j for h in range(HEADS) for j in range(HALF)])

    wqkv, bqkv, wo, bo, w1, b1, w2, b2 = ([] for _ in range(8))
    for l in range(LAYERS):
        lk = jax.random.split(keys[1 + l], 6)
        wq = dense(lk[0], (HIDDEN, HIDDEN))
        wk = dense(lk[1], (HIDDEN, HIDDEN))
        wv = dense(lk[2], (HIDDEN, HIDDEN))
        # fused (D, 3D) with half-split permuted q/k columns, standard v columns
        wqkv.append(jnp.concatenate([wq[:, perm], wk[:, perm], wv], axis=1))
        bqkv.append(jnp.zeros((1, 3 * HIDDEN), PARAM_DTYPE))
        wo.append(dense(lk[3], (HIDDEN, HIDDEN)))
        bo.append(jnp.zeros((1, HIDDEN), PARAM_DTYPE))
        w1.append(dense(lk[4], (HIDDEN, FFN)))
        b1.append(jnp.zeros((1, FFN), PARAM_DTYPE))
        w2.append(dense(lk[5], (FFN, HIDDEN)))
        b2.append(jnp.zeros((1, HIDDEN), PARAM_DTYPE))

    stacked = dict(
        ln1_g=jnp.ones((LAYERS, 1, HIDDEN), PARAM_DTYPE),
        ln1_b=jnp.zeros((LAYERS, 1, HIDDEN), PARAM_DTYPE),
        wqkv=jnp.stack(wqkv), bqkv=jnp.stack(bqkv),
        wo=jnp.stack(wo), bo=jnp.stack(bo),
        ln2_g=jnp.ones((LAYERS, 1, HIDDEN), PARAM_DTYPE),
        ln2_b=jnp.zeros((LAYERS, 1, HIDDEN), PARAM_DTYPE),
        w1=jnp.stack(w1), b1=jnp.stack(b1),
        w2=jnp.stack(w2), b2=jnp.stack(b2),
    )
    return {'embed': embed, 'stacked': stacked,
            'ln_f_g': jnp.ones((1, HIDDEN), PARAM_DTYPE),
            'ln_f_b': jnp.zeros((1, HIDDEN), PARAM_DTYPE)}


@jax.jit
def esm2_embed(prot, params, cos_t, sin_t):
    """Mirrors ESM2.forward: encode all N sequences in one call -> (N,1,S,D) f32."""
    token_ids = tokenize(prot)                                          # (N, S)
    n, s = token_ids.shape
    s_pad = cos_t.shape[0]
    # Embedding lookup is a gather: kept in plain JAX glue.
    x = jnp.take(params['embed'], token_ids, axis=0).astype(PARAM_DTYPE)  # (N, S, D)
    x = jnp.pad(x, ((0, 0), (0, s_pad - s), (0, 0)))                    # pad S -> 16
    hidden = esm2_fused_forward(x, cos_t, sin_t, params['stacked'],
                                params['ln_f_g'], params['ln_f_b'],
                                s_valid=s)                              # (N, S_pad, D)
    return hidden[:, :s][:, None, :, :]                                 # (N, 1, S, D)


# TODO(synk): HF tokenizer, pretrained ESM2 checkpoint weights, and the CUDA
# autocast context have no Pallas equivalent; replaced by deterministic
# in-script tokenization and random bf16 parameters.

if __name__ == "__main__":
    key = jax.random.PRNGKey(0)
    kp, kd = jax.random.split(key)
    N, L = 2, 8
    S = L + 2
    S_PAD = -(-S // SUBLANE_PAD) * SUBLANE_PAD                           # 16
    prot = jax.random.randint(kd, (N, L), 0, len(VOCAB_AA), dtype=jnp.int32)
    params = init_params(kp)
    cos_t, sin_t = rotary_tables(S_PAD, HEAD_DIM)   # hoisted: computed once

    out = esm2_embed(prot, params, cos_t, sin_t)
    jax.block_until_ready(out)
    assert out.shape == (N, 1, S, HIDDEN) and out.dtype == jnp.float32
    assert bool(jnp.all(jnp.isfinite(out)))
    print("KERNEL_OK")
</pallas_src>

<mosaic_0001>
module attributes {stable_mosaic.version = 11 : i64} {
  func.func @kernel(%arg0: i32, %arg1: memref<1x16x32xbf16, #tpu.memory_space<vmem>>, %arg2: memref<16x16xf32, #tpu.memory_space<vmem>>, %arg3: memref<16x16xf32, #tpu.memory_space<vmem>>, %arg4: memref<2x1x32xbf16, #tpu.memory_space<vmem>>, %arg5: memref<2x1x32xbf16, #tpu.memory_space<vmem>>, %arg6: memref<2x32x96xbf16, #tpu.memory_space<vmem>>, %arg7: memref<2x1x96xbf16, #tpu.memory_space<vmem>>, %arg8: memref<2x32x32xbf16, #tpu.memory_space<vmem>>, %arg9: memref<2x1x32xbf16, #tpu.memory_space<vmem>>, %arg10: memref<2x1x32xbf16, #tpu.memory_space<vmem>>, %arg11: memref<2x1x32xbf16, #tpu.memory_space<vmem>>, %arg12: memref<2x32x64xbf16, #tpu.memory_space<vmem>>, %arg13: memref<2x1x64xbf16, #tpu.memory_space<vmem>>, %arg14: memref<2x64x32xbf16, #tpu.memory_space<vmem>>, %arg15: memref<2x1x32xbf16, #tpu.memory_space<vmem>>, %arg16: memref<1x32xbf16, #tpu.memory_space<vmem>>, %arg17: memref<1x32xbf16, #tpu.memory_space<vmem>>, %arg18: memref<1x16x32xf32, #tpu.memory_space<vmem>>) attributes {dimension_semantics = [#tpu.dimension_semantics<parallel>], iteration_bounds = array<i64: 2>, scalar_prefetch = 0 : i64, scratch_operands = 0 : i64, tpu.core_type = #tpu.core_type<tc>, window_params = [{transform_indices = @transform_0, window_bounds = array<i64: 1, 16, 32>}, {pipeline_mode = #tpu.pipeline_mode<synchronous>, transform_indices = @transform_1, window_bounds = array<i64: 16, 16>}, {pipeline_mode = #tpu.pipeline_mode<synchronous>, transform_indices = @transform_2, window_bounds = array<i64: 16, 16>}, {pipeline_mode = #tpu.pipeline_mode<synchronous>, transform_indices = @transform_3, window_bounds = array<i64: 2, 1, 32>}, {pipeline_mode = #tpu.pipeline_mode<synchronous>, transform_indices = @transform_4, window_bounds = array<i64: 2, 1, 32>}, {pipeline_mode = #tpu.pipeline_mode<synchronous>, transform_indices = @transform_5, window_bounds = array<i64: 2, 32, 96>}, {pipeline_mode = #tpu.pipeline_mode<synchronous>, transform_indices = @transform_6, window_bounds = array<i64: 2, 1, 96>}, {pipeline_mode = #tpu.pipeline_mode<synchronous>, transform_indices = @transform_7, window_bounds = array<i64: 2, 32, 32>}, {pipeline_mode = #tpu.pipeline_mode<synchronous>, transform_indices = @transform_8, window_bounds = array<i64: 2, 1, 32>}, {pipeline_mode = #tpu.pipeline_mode<synchronous>, transform_indices = @transform_9, window_bounds = array<i64: 2, 1, 32>}, {pipeline_mode = #tpu.pipeline_mode<synchronous>, transform_indices = @transform_10, window_bounds = array<i64: 2, 1, 32>}, {pipeline_mode = #tpu.pipeline_mode<synchronous>, transform_indices = @transform_11, window_bounds = array<i64: 2, 32, 64>}, {pipeline_mode = #tpu.pipeline_mode<synchronous>, transform_indices = @transform_12, window_bounds = array<i64: 2, 1, 64>}, {pipeline_mode = #tpu.pipeline_mode<synchronous>, transform_indices = @transform_13, window_bounds = array<i64: 2, 64, 32>}, {pipeline_mode = #tpu.pipeline_mode<synchronous>, transform_indices = @transform_14, window_bounds = array<i64: 2, 1, 32>}, {pipeline_mode = #tpu.pipeline_mode<synchronous>, transform_indices = @transform_15, window_bounds = array<i64: 1, 32>}, {pipeline_mode = #tpu.pipeline_mode<synchronous>, transform_indices = @transform_16, window_bounds = array<i64: 1, 32>}, {transform_indices = @transform_17, window_bounds = array<i64: 1, 16, 32>}]} {
    %c0 = arith.constant 0 : index
    %c0_0 = arith.constant 0 : index
    %c0_1 = arith.constant 0 : index
    %0 = vector.load %arg1[%c0, %c0_0, %c0_1] : memref<1x16x32xbf16, #tpu.memory_space<vmem>>, vector<1x16x32xbf16>
    %1 = arith.extf %0 : vector<1x16x32xbf16> to vector<1x16x32xf32>
    %2 = vector.shape_cast %1 : vector<1x16x32xf32> to vector<16x32xf32>
    %c0_2 = arith.constant 0 : index
    %c0_3 = arith.constant 0 : index
    %3 = vector.load %arg2[%c0_2, %c0_3] : memref<16x16xf32, #tpu.memory_space<vmem>>, vector<16x16xf32>
    %c0_4 = arith.constant 0 : index
    %c0_5 = arith.constant 0 : index
    %4 = vector.load %arg3[%c0_4, %c0_5] : memref<16x16xf32, #tpu.memory_space<vmem>>, vector<16x16xf32>
    %cst = arith.constant 0.353553385 : f32
    %5 = vector.broadcast %cst : f32 to vector<16x16xf32>
    %6 = arith.mulf %3, %5 : vector<16x16xf32>
    %cst_6 = arith.constant 0.353553385 : f32
    %7 = vector.broadcast %cst_6 : f32 to vector<16x16xf32>
    %8 = arith.mulf %4, %7 : vector<16x16xf32>
    %9 = tpu.iota {dimensions = array<i32: 1>} : vector<1x16xi32>
    %c10_i32 = arith.constant 10 : i32
    %10 = vector.broadcast %c10_i32 : i32 to vector<1x16xi32>
    %11 = arith.cmpi slt, %9, %10 : vector<1x16xi32>
    %cst_7 = arith.constant 0.000000e+00 : f32
    %cst_8 = arith.constant -1.000000e+30 : f32
    %12 = vector.broadcast %cst_7 : f32 to vector<1x16xf32>
    %13 = vector.broadcast %cst_8 : f32 to vector<1x16xf32>
    %14 = arith.select %11, %12, %13 : vector<1x16xi1>, vector<1x16xf32>
    %c0_9 = arith.constant 0 : index
    %c0_10 = arith.constant 0 : index
    %c0_11 = arith.constant 0 : index
    %15 = vector.load %arg4[%c0_9, %c0_10, %c0_11] : memref<2x1x32xbf16, #tpu.memory_space<vmem>>, vector<1x1x32xbf16>
    %16 = vector.shape_cast %15 : vector<1x1x32xbf16> to vector<1x32xbf16>
    %17 = arith.extf %16 : vector<1x32xbf16> to vector<1x32xf32>
    %c0_12 = arith.constant 0 : index
    %c0_13 = arith.constant 0 : index
    %c0_14 = arith.constant 0 : index
    %18 = vector.load %arg5[%c0_12, %c0_13, %c0_14] : memref<2x1x32xbf16, #tpu.memory_space<vmem>>, vector<1x1x32xbf16>
    %19 = vector.shape_cast %18 : vector<1x1x32xbf16> to vector<1x32xbf16>
    %20 = arith.extf %19 : vector<1x32xbf16> to vector<1x32xf32>
    %cst_15 = arith.constant dense<0.000000e+00> : vector<16xf32>
    %21 = vector.multi_reduction <add>, %2, %cst_15 [1] : vector<16x32xf32> to vector<16xf32>
    %22 = vector.shape_cast %21 : vector<16xf32> to vector<16x1xf32>
    %cst_16 = arith.constant 3.200000e+01 : f32
    %23 = vector.broadcast %cst_16 : f32 to vector<16x1xf32>
    %24 = arith.divf %22, %23 : vector<16x1xf32>
    %25 = vector.broadcast %24 : vector<16x1xf32> to vector<16x32xf32>
    %26 = arith.subf %2, %25 : vector<16x32xf32>
    %27 = arith.mulf %26, %26 : vector<16x32xf32>
    %cst_17 = arith.constant dense<0.000000e+00> : vector<16xf32>
    %28 = vector.multi_reduction <add>, %27, %cst_17 [1] : vector<16x32xf32> to vector<16xf32>
    %29 = vector.shape_cast %28 : vector<16xf32> to vector<16x1xf32>
    %cst_18 = arith.constant 3.200000e+01 : f32
    %30 = vector.broadcast %cst_18 : f32 to vector<16x1xf32>
    %31 = arith.divf %29, %30 : vector<16x1xf32>
    %cst_19 = arith.constant 9.99999974E-6 : f32
    %32 = vector.broadcast %cst_19 : f32 to vector<16x1xf32>
    %33 = arith.addf %31, %32 : vector<16x1xf32>
    %34 = math.rsqrt %33 : vector<16x1xf32>
    %35 = vector.broadcast %34 : vector<16x1xf32> to vector<16x32xf32>
    %36 = arith.mulf %26, %35 : vector<16x32xf32>
    %37 = vector.broadcast %17 : vector<1x32xf32> to vector<16x32xf32>
    %38 = arith.mulf %36, %37 : vector<16x32xf32>
    %39 = vector.broadcast %20 : vector<1x32xf32> to vector<16x32xf32>
    %40 = arith.addf %38, %39 : vector<16x32xf32>
    %41 = arith.truncf %40 : vector<16x32xf32> to vector<16x32xbf16>
    %c0_20 = arith.constant 0 : index
    %c0_21 = arith.constant 0 : index
    %c0_22 = arith.constant 0 : index
    %42 = vector.load %arg6[%c0_20, %c0_21, %c0_22] : memref<2x32x96xbf16, #tpu.memory_space<vmem>>, vector<1x32x96xbf16>
    %43 = vector.shape_cast %42 : vector<1x32x96xbf16> to vector<32x96xbf16>
    %cst_23 = arith.constant dense<0.000000e+00> : vector<16x96xf32>
    %44 = tpu.matmul %41, %43, %cst_23 {dimension_numbers = #tpu.dot_dimension_numbers<[1], [0], [0], [1], [0, 0, 1, 1], [], []>} : vector<16x32xbf16>, vector<32x96xbf16>, vector<16x96xf32> -> vector<16x96xf32>
    %c0_24 = arith.constant 0 : index
    %c0_25 = arith.constant 0 : index
    %c0_26 = arith.constant 0 : index
    %45 = vector.load %arg7[%c0_24, %c0_25, %c0_26] : memref<2x1x96xbf16, #tpu.memory_space<vmem>>, vector<1x1x96xbf16>
    %46 = vector.shape_cast %45 : vector<1x1x96xbf16> to vector<1x96xbf16>
    %47 = arith.extf %46 : vector<1x96xbf16> to vector<1x96xf32>
    %48 = vector.broadcast %47 : vector<1x96xf32> to vector<16x96xf32>
    %49 = arith.addf %44, %48 : vector<16x96xf32>
    %50 = vector.extract_strided_slice %49 {offsets = [0, 0], sizes = [16, 16], strides = [1, 1]} : vector<16x96xf32> to vector<16x16xf32>
    %51 = vector.extract_strided_slice %49 {offsets = [0, 16], sizes = [16, 16], strides = [1, 1]} : vector<16x96xf32> to vector<16x16xf32>
    %52 = vector.extract_strided_slice %49 {offsets = [0, 32], sizes = [16, 16], strides = [1, 1]} : vector<16x96xf32> to vector<16x16xf32>
    %53 = vector.extract_strided_slice %49 {offsets = [0, 48], sizes = [16, 16], strides = [1, 1]} : vector<16x96xf32> to vector<16x16xf32>
    %54 = vector.extract_strided_slice %49 {offsets = [0, 64], sizes = [16, 32], strides = [1, 1]} : vector<16x96xf32> to vector<16x32xf32>
    %55 = arith.mulf %50, %6 : vector<16x16xf32>
    %56 = arith.mulf %51, %8 : vector<16x16xf32>
    %57 = arith.subf %55, %56 : vector<16x16xf32>
    %58 = arith.truncf %57 : vector<16x16xf32> to vector<16x16xbf16>
    %59 = vector.shape_cast %58 : vector<16x16xbf16> to vector<1x16x16xbf16>
    %60 = arith.mulf %51, %6 : vector<16x16xf32>
    %61 = arith.mulf %50, %8 : vector<16x16xf32>
    %62 = arith.addf %60, %61 : vector<16x16xf32>
    %63 = arith.truncf %62 : vector<16x16xf32> to vector<16x16xbf16>
    %64 = vector.shape_cast %63 : vector<16x16xbf16> to vector<1x16x16xbf16>
    %65 = arith.mulf %52, %3 : vector<16x16xf32>
    %66 = arith.mulf %53, %4 : vector<16x16xf32>
    %67 = arith.subf %65, %66 : vector<16x16xf32>
    %68 = arith.truncf %67 : vector<16x16xf32> to vector<16x16xbf16>
    %69 = vector.shape_cast %68 : vector<16x16xbf16> to vector<1x16x16xbf16>
    %70 = arith.mulf %53, %3 : vector<16x16xf32>
    %71 = arith.mulf %52, %4 : vector<16x16xf32>
    %72 = arith.addf %70, %71 : vector<16x16xf32>
    %73 = arith.truncf %72 : vector<16x16xf32> to vector<16x16xbf16>
    %74 = vector.shape_cast %73 : vector<16x16xbf16> to vector<1x16x16xbf16>
    %75 = arith.truncf %54 : vector<16x32xf32> to vector<16x32xbf16>
    %76 = vector.shape_cast %75 : vector<16x32xbf16> to vector<1x16x32xbf16>
    %77 = vector.extract_strided_slice %59 {offsets = [0, 0, 0], sizes = [1, 16, 4], strides = [1, 1, 1]} : vector<1x16x16xbf16> to vector<1x16x4xbf16>
    %78 = vector.extract_strided_slice %69 {offsets = [0, 0, 0], sizes = [1, 16, 4], strides = [1, 1, 1]} : vector<1x16x16xbf16> to vector<1x16x4xbf16>
    "tpu.trace_start"() <{level = 10 : i32, message = "bsd,btd->bst"}> : () -> ()
    %cst_27 = arith.constant dense<0.000000e+00> : vector<1x16x16xf32>
    %79 = tpu.matmul %77, %78, %cst_27 {dimension_numbers = #tpu.dot_dimension_numbers<[2], [2], [1], [1], [0, 0, 0, 1, 1, 1], [0], [0]>} : vector<1x16x4xbf16>, vector<1x16x4xbf16>, vector<1x16x16xf32> -> vector<1x16x16xf32>
    "tpu.trace_stop"() : () -> ()
    %80 = vector.extract_strided_slice %64 {offsets = [0, 0, 0], sizes = [1, 16, 4], strides = [1, 1, 1]} : vector<1x16x16xbf16> to vector<1x16x4xbf16>
    %81 = vector.extract_strided_slice %74 {offsets = [0, 0, 0], sizes = [1, 16, 4], strides = [1, 1, 1]} : vector<1x16x16xbf16> to vector<1x16x4xbf16>
    "tpu.trace_start"() <{level = 10 : i32, message = "bsd,btd->bst"}> : () -> ()
    %cst_28 = arith.constant dense<0.000000e+00> : vector<1x16x16xf32>
    %82 = tpu.matmul %80, %81, %cst_28 {dimension_numbers = #tpu.dot_dimension_numbers<[2], [2], [1], [1], [0, 0, 0, 1, 1, 1], [0], [0]>} : vector<1x16x4xbf16>, vector<1x16x4xbf16>, vector<1x16x16xf32> -> vector<1x16x16xf32>
    "tpu.trace_stop"() : () -> ()
    %83 = arith.addf %79, %82 : vector<1x16x16xf32>
    %84 = vector.shape_cast %14 : vector<1x16xf32> to vector<1x1x16xf32>
    %85 = vector.broadcast %84 : vector<1x1x16xf32> to vector<1x16x16xf32>
    %86 = arith.addf %83, %85 : vector<1x16x16xf32>
    %cst_29 = arith.constant dense<0xFF800000> : vector<1x16xf32>
    %87 = vector.multi_reduction <maximumf>, %86, %cst_29 [2] : vector<1x16x16xf32> to vector<1x16xf32>
    %88 = vector.shape_cast %87 : vector<1x16xf32> to vector<1x16x1xf32>
    %89 = vector.broadcast %88 : vector<1x16x1xf32> to vector<1x16x16xf32>
    %90 = arith.subf %86, %89 : vector<1x16x16xf32>
    %91 = math.exp %90 : vector<1x16x16xf32>
    %cst_30 = arith.constant dense<0.000000e+00> : vector<1x16xf32>
    %92 = vector.multi_reduction <add>, %91, %cst_30 [2] : vector<1x16x16xf32> to vector<1x16xf32>
    %93 = vector.shape_cast %92 : vector<1x16xf32> to vector<1x16x1xf32>
    %94 = tpu.reciprocal %93 {approx = true} : vector<1x16x1xf32> -> vector<1x16x1xf32>
    %95 = vector.broadcast %94 : vector<1x16x1xf32> to vector<1x16x16xf32>
    %96 = arith.mulf %91, %95 : vector<1x16x16xf32>
    %97 = arith.truncf %96 : vector<1x16x16xf32> to vector<1x16x16xbf16>
    %98 = vector.extract_strided_slice %76 {offsets = [0, 0, 0], sizes = [1, 16, 8], strides = [1, 1, 1]} : vector<1x16x32xbf16> to vector<1x16x8xbf16>
    "tpu.trace_start"() <{level = 10 : i32, message = "bst,btd->bsd"}> : () -> ()
    %cst_31 = arith.constant dense<0.000000e+00> : vector<1x16x8xf32>
    %99 = tpu.matmul %97, %98, %cst_31 {dimension_numbers = #tpu.dot_dimension_numbers<[2], [1], [1], [2], [0, 0, 0, 1, 1, 2], [0], [0]>} : vector<1x16x16xbf16>, vector<1x16x8xbf16>, vector<1x16x8xf32> -> vector<1x16x8xf32>
    "tpu.trace_stop"() : () -> ()
    %100 = vector.extract_strided_slice %59 {offsets = [0, 0, 4], sizes = [1, 16, 4], strides = [1, 1, 1]} : vector<1x16x16xbf16> to vector<1x16x4xbf16>
    %101 = vector.extract_strided_slice %69 {offsets = [0, 0, 4], sizes = [1, 16, 4], strides = [1, 1, 1]} : vector<1x16x16xbf16> to vector<1x16x4xbf16>
    "tpu.trace_start"() <{level = 10 : i32, message = "bsd,btd->bst"}> : () -> ()
    %cst_32 = arith.constant dense<0.000000e+00> : vector<1x16x16xf32>
    %102 = tpu.matmul %100, %101, %cst_32 {dimension_numbers = #tpu.dot_dimension_numbers<[2], [2], [1], [1], [0, 0, 0, 1, 1, 1], [0], [0]>} : vector<1x16x4xbf16>, vector<1x16x4xbf16>, vector<1x16x16xf32> -> vector<1x16x16xf32>
    "tpu.trace_stop"() : () -> ()
    %103 = vector.extract_strided_slice %64 {offsets = [0, 0, 4], sizes = [1, 16, 4], strides = [1, 1, 1]} : vector<1x16x16xbf16> to vector<1x16x4xbf16>
    %104 = vector.extract_strided_slice %74 {offsets = [0, 0, 4], sizes = [1, 16, 4], strides = [1, 1, 1]} : vector<1x16x16xbf16> to vector<1x16x4xbf16>
    "tpu.trace_start"() <{level = 10 : i32, message = "bsd,btd->bst"}> : () -> ()
    %cst_33 = arith.constant dense<0.000000e+00> : vector<1x16x16xf32>
    %105 = tpu.matmul %103, %104, %cst_33 {dimension_numbers = #tpu.dot_dimension_numbers<[2], [2], [1], [1], [0, 0, 0, 1, 1, 1], [0], [0]>} : vector<1x16x4xbf16>, vector<1x16x4xbf16>, vector<1x16x16xf32> -> vector<1x16x16xf32>
    "tpu.trace_stop"() : () -> ()
    %106 = arith.addf %102, %105 : vector<1x16x16xf32>
    %107 = vector.shape_cast %14 : vector<1x16xf32> to vector<1x1x16xf32>
    %108 = vector.broadcast %107 : vector<1x1x16xf32> to vector<1x16x16xf32>
    %109 = arith.addf %106, %108 : vector<1x16x16xf32>
    %cst_34 = arith.constant dense<0xFF800000> : vector<1x16xf32>
    %110 = vector.multi_reduction <maximumf>, %109, %cst_34 [2] : vector<1x16x16xf32> to vector<1x16xf32>
    %111 = vector.shape_cast %110 : vector<1x16xf32> to vector<1x16x1xf32>
    %112 = vector.broadcast %111 : vector<1x16x1xf32> to vector<1x16x16xf32>
    %113 = arith.subf %109, %112 : vector<1x16x16xf32>
    %114 = math.exp %113 : vector<1x16x16xf32>
    %cst_35 = arith.constant dense<0.000000e+00> : vector<1x16xf32>
    %115 = vector.multi_reduction <add>, %114, %cst_35 [2] : vector<1x16x16xf32> to vector<1x16xf32>
    %116 = vector.shape_cast %115 : vector<1x16xf32> to vector<1x16x1xf32>
    %117 = tpu.reciprocal %116 {approx = true} : vector<1x16x1xf32> -> vector<1x16x1xf32>
    %118 = vector.broadcast %117 : vector<1x16x1xf32> to vector<1x16x16xf32>
    %119 = arith.mulf %114, %118 : vector<1x16x16xf32>
    %120 = arith.truncf %119 : vector<1x16x16xf32> to vector<1x16x16xbf16>
    %121 = vector.extract_strided_slice %76 {offsets = [0, 0, 8], sizes = [1, 16, 8], strides = [1, 1, 1]} : vector<1x16x32xbf16> to vector<1x16x8xbf16>
    "tpu.trace_start"() <{level = 10 : i32, message = "bst,btd->bsd"}> : () -> ()
    %cst_36 = arith.constant dense<0.000000e+00> : vector<1x16x8xf32>
    %122 = tpu.matmul %120, %121, %cst_36 {dimension_numbers = #tpu.dot_dimension_numbers<[2], [1], [1], [2], [0, 0, 0, 1, 1, 2], [0], [0]>} : vector<1x16x16xbf16>, vector<1x16x8xbf16>, vector<1x16x8xf32> -> vector<1x16x8xf32>
    "tpu.trace_stop"() : () -> ()
    %123 = vector.extract_strided_slice %59 {offsets = [0, 0, 8], sizes = [1, 16, 4], strides = [1, 1, 1]} : vector<1x16x16xbf16> to vector<1x16x4xbf16>
    %124 = vector.extract_strided_slice %69 {offsets = [0, 0, 8], sizes = [1, 16, 4], strides = [1, 1, 1]} : vector<1x16x16xbf16> to vector<1x16x4xbf16>
    "tpu.trace_start"() <{level = 10 : i32, message = "bsd,btd->bst"}> : () -> ()
    %cst_37 = arith.constant dense<0.000000e+00> : vector<1x16x16xf32>
    %125 = tpu.matmul %123, %124, %cst_37 {dimension_numbers = #tpu.dot_dimension_numbers<[2], [2], [1], [1], [0, 0, 0, 1, 1, 1], [0], [0]>} : vector<1x16x4xbf16>, vector<1x16x4xbf16>, vector<1x16x16xf32> -> vector<1x16x16xf32>
    "tpu.trace_stop"() : () -> ()
    %126 = vector.extract_strided_slice %64 {offsets = [0, 0, 8], sizes = [1, 16, 4], strides = [1, 1, 1]} : vector<1x16x16xbf16> to vector<1x16x4xbf16>
    %127 = vector.extract_strided_slice %74 {offsets = [0, 0, 8], sizes = [1, 16, 4], strides = [1, 1, 1]} : vector<1x16x16xbf16> to vector<1x16x4xbf16>
    "tpu.trace_start"() <{level = 10 : i32, message = "bsd,btd->bst"}> : () -> ()
    %cst_38 = arith.constant dense<0.000000e+00> : vector<1x16x16xf32>
    %128 = tpu.matmul %126, %127, %cst_38 {dimension_numbers = #tpu.dot_dimension_numbers<[2], [2], [1], [1], [0, 0, 0, 1, 1, 1], [0], [0]>} : vector<1x16x4xbf16>, vector<1x16x4xbf16>, vector<1x16x16xf32> -> vector<1x16x16xf32>
    "tpu.trace_stop"() : () -> ()
    %129 = arith.addf %125, %128 : vector<1x16x16xf32>
    %130 = vector.shape_cast %14 : vector<1x16xf32> to vector<1x1x16xf32>
    %131 = vector.broadcast %130 : vector<1x1x16xf32> to vector<1x16x16xf32>
    %132 = arith.addf %129, %131 : vector<1x16x16xf32>
    %cst_39 = arith.constant dense<0xFF800000> : vector<1x16xf32>
    %133 = vector.multi_reduction <maximumf>, %132, %cst_39 [2] : vector<1x16x16xf32> to vector<1x16xf32>
    %134 = vector.shape_cast %133 : vector<1x16xf32> to vector<1x16x1xf32>
    %135 = vector.broadcast %134 : vector<1x16x1xf32> to vector<1x16x16xf32>
    %136 = arith.subf %132, %135 : vector<1x16x16xf32>
    %137 = math.exp %136 : vector<1x16x16xf32>
    %cst_40 = arith.constant dense<0.000000e+00> : vector<1x16xf32>
    %138 = vector.multi_reduction <add>, %137, %cst_40 [2] : vector<1x16x16xf32> to vector<1x16xf32>
    %139 = vector.shape_cast %138 : vector<1x16xf32> to vector<1x16x1xf32>
    %140 = tpu.reciprocal %139 {approx = true} : vector<1x16x1xf32> -> vector<1x16x1xf32>
    %141 = vector.broadcast %140 : vector<1x16x1xf32> to vector<1x16x16xf32>
    %142 = arith.mulf %137, %141 : vector<1x16x16xf32>
    %143 = arith.truncf %142 : vector<1x16x16xf32> to vector<1x16x16xbf16>
    %144 = vector.extract_strided_slice %76 {offsets = [0, 0, 16], sizes = [1, 16, 8], strides = [1, 1, 1]} : vector<1x16x32xbf16> to vector<1x16x8xbf16>
    "tpu.trace_start"() <{level = 10 : i32, message = "bst,btd->bsd"}> : () -> ()
    %cst_41 = arith.constant dense<0.000000e+00> : vector<1x16x8xf32>
    %145 = tpu.matmul %143, %144, %cst_41 {dimension_numbers = #tpu.dot_dimension_numbers<[2], [1], [1], [2], [0, 0, 0, 1, 1, 2], [0], [0]>} : vector<1x16x16xbf16>, vector<1x16x8xbf16>, vector<1x16x8xf32> -> vector<1x16x8xf32>
    "tpu.trace_stop"() : () -> ()
    %146 = vector.extract_strided_slice %59 {offsets = [0, 0, 12], sizes = [1, 16, 4], strides = [1, 1, 1]} : vector<1x16x16xbf16> to vector<1x16x4xbf16>
    %147 = vector.extract_strided_slice %69 {offsets = [0, 0, 12], sizes = [1, 16, 4], strides = [1, 1, 1]} : vector<1x16x16xbf16> to vector<1x16x4xbf16>
    "tpu.trace_start"() <{level = 10 : i32, message = "bsd,btd->bst"}> : () -> ()
    %cst_42 = arith.constant dense<0.000000e+00> : vector<1x16x16xf32>
    %148 = tpu.matmul %146, %147, %cst_42 {dimension_numbers = #tpu.dot_dimension_numbers<[2], [2], [1], [1], [0, 0, 0, 1, 1, 1], [0], [0]>} : vector<1x16x4xbf16>, vector<1x16x4xbf16>, vector<1x16x16xf32> -> vector<1x16x16xf32>
    "tpu.trace_stop"() : () -> ()
    %149 = vector.extract_strided_slice %64 {offsets = [0, 0, 12], sizes = [1, 16, 4], strides = [1, 1, 1]} : vector<1x16x16xbf16> to vector<1x16x4xbf16>
    %150 = vector.extract_strided_slice %74 {offsets = [0, 0, 12], sizes = [1, 16, 4], strides = [1, 1, 1]} : vector<1x16x16xbf16> to vector<1x16x4xbf16>
    "tpu.trace_start"() <{level = 10 : i32, message = "bsd,btd->bst"}> : () -> ()
    %cst_43 = arith.constant dense<0.000000e+00> : vector<1x16x16xf32>
    %151 = tpu.matmul %149, %150, %cst_43 {dimension_numbers = #tpu.dot_dimension_numbers<[2], [2], [1], [1], [0, 0, 0, 1, 1, 1], [0], [0]>} : vector<1x16x4xbf16>, vector<1x16x4xbf16>, vector<1x16x16xf32> -> vector<1x16x16xf32>
    "tpu.trace_stop"() : () -> ()
    %152 = arith.addf %148, %151 : vector<1x16x16xf32>
    %153 = vector.shape_cast %14 : vector<1x16xf32> to vector<1x1x16xf32>
    %154 = vector.broadcast %153 : vector<1x1x16xf32> to vector<1x16x16xf32>
    %155 = arith.addf %152, %154 : vector<1x16x16xf32>
    %cst_44 = arith.constant dense<0xFF800000> : vector<1x16xf32>
    %156 = vector.multi_reduction <maximumf>, %155, %cst_44 [2] : vector<1x16x16xf32> to vector<1x16xf32>
    %157 = vector.shape_cast %156 : vector<1x16xf32> to vector<1x16x1xf32>
    %158 = vector.broadcast %157 : vector<1x16x1xf32> to vector<1x16x16xf32>
    %159 = arith.subf %155, %158 : vector<1x16x16xf32>
    %160 = math.exp %159 : vector<1x16x16xf32>
    %cst_45 = arith.constant dense<0.000000e+00> : vector<1x16xf32>
    %161 = vector.multi_reduction <add>, %160, %cst_45 [2] : vector<1x16x16xf32> to vector<1x16xf32>
    %162 = vector.shape_cast %161 : vector<1x16xf32> to vector<1x16x1xf32>
    %163 = tpu.reciprocal %162 {approx = true} : vector<1x16x1xf32> -> vector<1x16x1xf32>
    %164 = vector.broadcast %163 : vector<1x16x1xf32> to vector<1x16x16xf32>
    %165 = arith.mulf %160, %164 : vector<1x16x16xf32>
    %166 = arith.truncf %165 : vector<1x16x16xf32> to vector<1x16x16xbf16>
    %167 = vector.extract_strided_slice %76 {offsets = [0, 0, 24], sizes = [1, 16, 8], strides = [1, 1, 1]} : vector<1x16x32xbf16> to vector<1x16x8xbf16>
    "tpu.trace_start"() <{level = 10 : i32, message = "bst,btd->bsd"}> : () -> ()
    %cst_46 = arith.constant dense<0.000000e+00> : vector<1x16x8xf32>
    %168 = tpu.matmul %166, %167, %cst_46 {dimension_numbers = #tpu.dot_dimension_numbers<[2], [1], [1], [2], [0, 0, 0, 1, 1, 2], [0], [0]>} : vector<1x16x16xbf16>, vector<1x16x8xbf16>, vector<1x16x8xf32> -> vector<1x16x8xf32>
    "tpu.trace_stop"() : () -> ()
    %169 = tpu.concatenate %99, %122, %145, %168 in 2 : vector<1x16x8xf32>, vector<1x16x8xf32>, vector<1x16x8xf32>, vector<1x16x8xf32> -> vector<1x16x32xf32>
    %170 = vector.shape_cast %169 : vector<1x16x32xf32> to vector<16x32xf32>
    %171 = arith.truncf %170 : vector<16x32xf32> to vector<16x32xbf16>
    %c0_47 = arith.constant 0 : index
    %c0_48 = arith.constant 0 : index
    %c0_49 = arith.constant 0 : index
    %172 = vector.load %arg8[%c0_47, %c0_48, %c0_49] : memref<2x32x32xbf16, #tpu.memory_space<vmem>>, vector<1x32x32xbf16>
    %173 = vector.shape_cast %172 : vector<1x32x32xbf16> to vector<32x32xbf16>
    %cst_50 = arith.constant dense<0.000000e+00> : vector<16x32xf32>
    %174 = tpu.matmul %171, %173, %cst_50 {dimension_numbers = #tpu.dot_dimension_numbers<[1], [0], [0], [1], [0, 0, 1, 1], [], []>} : vector<16x32xbf16>, vector<32x32xbf16>, vector<16x32xf32> -> vector<16x32xf32>
    %c0_51 = arith.constant 0 : index
    %c0_52 = arith.constant 0 : index
    %c0_53 = arith.constant 0 : index
    %175 = vector.load %arg9[%c0_51, %c0_52, %c0_53] : memref<2x1x32xbf16, #tpu.memory_space<vmem>>, vector<1x1x32xbf16>
    %176 = vector.shape_cast %175 : vector<1x1x32xbf16> to vector<1x32xbf16>
    %177 = arith.extf %176 : vector<1x32xbf16> to vector<1x32xf32>
    %178 = vector.broadcast %177 : vector<1x32xf32> to vector<16x32xf32>
    %179 = arith.addf %174, %178 : vector<16x32xf32>
    %180 = arith.addf %2, %179 : vector<16x32xf32>
    %c0_54 = arith.constant 0 : index
    %c0_55 = arith.constant 0 : index
    %c0_56 = arith.constant 0 : index
    %181 = vector.load %arg10[%c0_54, %c0_55, %c0_56] : memref<2x1x32xbf16, #tpu.memory_space<vmem>>, vector<1x1x32xbf16>
    %182 = vector.shape_cast %181 : vector<1x1x32xbf16> to vector<1x32xbf16>
    %183 = arith.extf %182 : vector<1x32xbf16> to vector<1x32xf32>
    %c0_57 = arith.constant 0 : index
    %c0_58 = arith.constant 0 : index
    %c0_59 = arith.constant 0 : index
    %184 = vector.load %arg11[%c0_57, %c0_58, %c0_59] : memref<2x1x32xbf16, #tpu.memory_space<vmem>>, vector<1x1x32xbf16>
    %185 = vector.shape_cast %184 : vector<1x1x32xbf16> to vector<1x32xbf16>
    %186 = arith.extf %185 : vector<1x32xbf16> to vector<1x32xf32>
    %cst_60 = arith.constant dense<0.000000e+00> : vector<16xf32>
    %187 = vector.multi_reduction <add>, %180, %cst_60 [1] : vector<16x32xf32> to vector<16xf32>
    %188 = vector.shape_cast %187 : vector<16xf32> to vector<16x1xf32>
    %cst_61 = arith.constant 3.200000e+01 : f32
    %189 = vector.broadcast %cst_61 : f32 to vector<16x1xf32>
    %190 = arith.divf %188, %189 : vector<16x1xf32>
    %191 = vector.broadcast %190 : vector<16x1xf32> to vector<16x32xf32>
    %192 = arith.subf %180, %191 : vector<16x32xf32>
    %193 = arith.mulf %192, %192 : vector<16x32xf32>
    %cst_62 = arith.constant dense<0.000000e+00> : vector<16xf32>
    %194 = vector.multi_reduction <add>, %193, %cst_62 [1] : vector<16x32xf32> to vector<16xf32>
    %195 = vector.shape_cast %194 : vector<16xf32> to vector<16x1xf32>
    %cst_63 = arith.constant 3.200000e+01 : f32
    %196 = vector.broadcast %cst_63 : f32 to vector<16x1xf32>
    %197 = arith.divf %195, %196 : vector<16x1xf32>
    %cst_64 = arith.constant 9.99999974E-6 : f32
    %198 = vector.broadcast %cst_64 : f32 to vector<16x1xf32>
    %199 = arith.addf %197, %198 : vector<16x1xf32>
    %200 = math.rsqrt %199 : vector<16x1xf32>
    %201 = vector.broadcast %200 : vector<16x1xf32> to vector<16x32xf32>
    %202 = arith.mulf %192, %201 : vector<16x32xf32>
    %203 = vector.broadcast %183 : vector<1x32xf32> to vector<16x32xf32>
    %204 = arith.mulf %202, %203 : vector<16x32xf32>
    %205 = vector.broadcast %186 : vector<1x32xf32> to vector<16x32xf32>
    %206 = arith.addf %204, %205 : vector<16x32xf32>
    %207 = arith.truncf %206 : vector<16x32xf32> to vector<16x32xbf16>
    %c0_65 = arith.constant 0 : index
    %c0_66 = arith.constant 0 : index
    %c0_67 = arith.constant 0 : index
    %208 = vector.load %arg12[%c0_65, %c0_66, %c0_67] : memref<2x32x64xbf16, #tpu.memory_space<vmem>>, vector<1x32x64xbf16>
    %209 = vector.shape_cast %208 : vector<1x32x64xbf16> to vector<32x64xbf16>
    %cst_68 = arith.constant dense<0.000000e+00> : vector<16x64xf32>
    %210 = tpu.matmul %207, %209, %cst_68 {dimension_numbers = #tpu.dot_dimension_numbers<[1], [0], [0], [1], [0, 0, 1, 1], [], []>} : vector<16x32xbf16>, vector<32x64xbf16>, vector<16x64xf32> -> vector<16x64xf32>
    %c0_69 = arith.constant 0 : index
    %c0_70 = arith.constant 0 : index
    %c0_71 = arith.constant 0 : index
    %211 = vector.load %arg13[%c0_69, %c0_70, %c0_71] : memref<2x1x64xbf16, #tpu.memory_space<vmem>>, vector<1x1x64xbf16>
    %212 = vector.shape_cast %211 : vector<1x1x64xbf16> to vector<1x64xbf16>
    %213 = arith.extf %212 : vector<1x64xbf16> to vector<1x64xf32>
    %214 = vector.broadcast %213 : vector<1x64xf32> to vector<16x64xf32>
    %215 = arith.addf %210, %214 : vector<16x64xf32>
    %216 = arith.mulf %215, %215 : vector<16x64xf32>
    %217 = arith.mulf %215, %216 : vector<16x64xf32>
    %cst_72 = arith.constant 4.471500e-02 : f32
    %218 = vector.broadcast %cst_72 : f32 to vector<16x64xf32>
    %219 = arith.mulf %218, %217 : vector<16x64xf32>
    %220 = arith.addf %215, %219 : vector<16x64xf32>
    %cst_73 = arith.constant 0.797884583 : f32
    %221 = vector.broadcast %cst_73 : f32 to vector<16x64xf32>
    %222 = arith.mulf %221, %220 : vector<16x64xf32>
    %223 = math.tanh %222 : vector<16x64xf32>
    %cst_74 = arith.constant 1.000000e+00 : f32
    %224 = vector.broadcast %cst_74 : f32 to vector<16x64xf32>
    %225 = arith.addf %224, %223 : vector<16x64xf32>
    %cst_75 = arith.constant 5.000000e-01 : f32
    %226 = vector.broadcast %cst_75 : f32 to vector<16x64xf32>
    %227 = arith.mulf %226, %225 : vector<16x64xf32>
    %228 = arith.mulf %215, %227 : vector<16x64xf32>
    %229 = arith.truncf %228 : vector<16x64xf32> to vector<16x64xbf16>
    %c0_76 = arith.constant 0 : index
    %c0_77 = arith.constant 0 : index
    %c0_78 = arith.constant 0 : index
    %230 = vector.load %arg14[%c0_76, %c0_77, %c0_78] : memref<2x64x32xbf16, #tpu.memory_space<vmem>>, vector<1x64x32xbf16>
    %231 = vector.shape_cast %230 : vector<1x64x32xbf16> to vector<64x32xbf16>
    %cst_79 = arith.constant dense<0.000000e+00> : vector<16x32xf32>
    %232 = tpu.matmul %229, %231, %cst_79 {dimension_numbers = #tpu.dot_dimension_numbers<[1], [0], [0], [1], [0, 0, 1, 1], [], []>} : vector<16x64xbf16>, vector<64x32xbf16>, vector<16x32xf32> -> vector<16x32xf32>
    %233 = arith.addf %180, %232 : vector<16x32xf32>
    %c0_80 = arith.constant 0 : index
    %c0_81 = arith.constant 0 : index
    %c0_82 = arith.constant 0 : index
    %234 = vector.load %arg15[%c0_80, %c0_81, %c0_82] : memref<2x1x32xbf16, #tpu.memory_space<vmem>>, vector<1x1x32xbf16>
    %235 = vector.shape_cast %234 : vector<1x1x32xbf16> to vector<1x32xbf16>
    %236 = arith.extf %235 : vector<1x32xbf16> to vector<1x32xf32>
    %237 = vector.broadcast %236 : vector<1x32xf32> to vector<16x32xf32>
    %238 = arith.addf %233, %237 : vector<16x32xf32>
    %c1 = arith.constant 1 : index
    %c0_83 = arith.constant 0 : index
    %c0_84 = arith.constant 0 : index
    %239 = vector.load %arg4[%c1, %c0_83, %c0_84] : memref<2x1x32xbf16, #tpu.memory_space<vmem>>, vector<1x1x32xbf16>
    %240 = vector.shape_cast %239 : vector<1x1x32xbf16> to vector<1x32xbf16>
    %241 = arith.extf %240 : vector<1x32xbf16> to vector<1x32xf32>
    %c1_85 = arith.constant 1 : index
    %c0_86 = arith.constant 0 : index
    %c0_87 = arith.constant 0 : index
    %242 = vector.load %arg5[%c1_85, %c0_86, %c0_87] : memref<2x1x32xbf16, #tpu.memory_space<vmem>>, vector<1x1x32xbf16>
    %243 = vector.shape_cast %242 : vector<1x1x32xbf16> to vector<1x32xbf16>
    %244 = arith.extf %243 : vector<1x32xbf16> to vector<1x32xf32>
    %cst_88 = arith.constant dense<0.000000e+00> : vector<16xf32>
    %245 = vector.multi_reduction <add>, %238, %cst_88 [1] : vector<16x32xf32> to vector<16xf32>
    %246 = vector.shape_cast %245 : vector<16xf32> to vector<16x1xf32>
    %cst_89 = arith.constant 3.200000e+01 : f32
    %247 = vector.broadcast %cst_89 : f32 to vector<16x1xf32>
    %248 = arith.divf %246, %247 : vector<16x1xf32>
    %249 = vector.broadcast %248 : vector<16x1xf32> to vector<16x32xf32>
    %250 = arith.subf %238, %249 : vector<16x32xf32>
    %251 = arith.mulf %250, %250 : vector<16x32xf32>
    %cst_90 = arith.constant dense<0.000000e+00> : vector<16xf32>
    %252 = vector.multi_reduction <add>, %251, %cst_90 [1] : vector<16x32xf32> to vector<16xf32>
    %253 = vector.shape_cast %252 : vector<16xf32> to vector<16x1xf32>
    %cst_91 = arith.constant 3.200000e+01 : f32
    %254 = vector.broadcast %cst_91 : f32 to vector<16x1xf32>
    %255 = arith.divf %253, %254 : vector<16x1xf32>
    %cst_92 = arith.constant 9.99999974E-6 : f32
    %256 = vector.broadcast %cst_92 : f32 to vector<16x1xf32>
    %257 = arith.addf %255, %256 : vector<16x1xf32>
    %258 = math.rsqrt %257 : vector<16x1xf32>
    %259 = vector.broadcast %258 : vector<16x1xf32> to vector<16x32xf32>
    %260 = arith.mulf %250, %259 : vector<16x32xf32>
    %261 = vector.broadcast %241 : vector<1x32xf32> to vector<16x32xf32>
    %262 = arith.mulf %260, %261 : vector<16x32xf32>
    %263 = vector.broadcast %244 : vector<1x32xf32> to vector<16x32xf32>
    %264 = arith.addf %262, %263 : vector<16x32xf32>
    %265 = arith.truncf %264 : vector<16x32xf32> to vector<16x32xbf16>
    %c1_93 = arith.constant 1 : index
    %c0_94 = arith.constant 0 : index
    %c0_95 = arith.constant 0 : index
    %266 = vector.load %arg6[%c1_93, %c0_94, %c0_95] : memref<2x32x96xbf16, #tpu.memory_space<vmem>>, vector<1x32x96xbf16>
    %267 = vector.shape_cast %266 : vector<1x32x96xbf16> to vector<32x96xbf16>
    %cst_96 = arith.constant dense<0.000000e+00> : vector<16x96xf32>
    %268 = tpu.matmul %265, %267, %cst_96 {dimension_numbers = #tpu.dot_dimension_numbers<[1], [0], [0], [1], [0, 0, 1, 1], [], []>} : vector<16x32xbf16>, vector<32x96xbf16>, vector<16x96xf32> -> vector<16x96xf32>
    %c1_97 = arith.constant 1 : index
    %c0_98 = arith.constant 0 : index
    %c0_99 = arith.constant 0 : index
    %269 = vector.load %arg7[%c1_97, %c0_98, %c0_99] : memref<2x1x96xbf16, #tpu.memory_space<vmem>>, vector<1x1x96xbf16>
    %270 = vector.shape_cast %269 : vector<1x1x96xbf16> to vector<1x96xbf16>
    %271 = arith.extf %270 : vector<1x96xbf16> to vector<1x96xf32>
    %272 = vector.broadcast %271 : vector<1x96xf32> to vector<16x96xf32>
    %273 = arith.addf %268, %272 : vector<16x96xf32>
    %274 = vector.extract_strided_slice %273 {offsets = [0, 0], sizes = [16, 16], strides = [1, 1]} : vector<16x96xf32> to vector<16x16xf32>
    %275 = vector.extract_strided_slice %273 {offsets = [0, 16], sizes = [16, 16], strides = [1, 1]} : vector<16x96xf32> to vector<16x16xf32>
    %276 = vector.extract_strided_slice %273 {offsets = [0, 32], sizes = [16, 16], strides = [1, 1]} : vector<16x96xf32> to vector<16x16xf32>
    %277 = vector.extract_strided_slice %273 {offsets = [0, 48], sizes = [16, 16], strides = [1, 1]} : vector<16x96xf32> to vector<16x16xf32>
    %278 = vector.extract_strided_slice %273 {offsets = [0, 64], sizes = [16, 32], strides = [1, 1]} : vector<16x96xf32> to vector<16x32xf32>
    %279 = arith.mulf %274, %6 : vector<16x16xf32>
    %280 = arith.mulf %275, %8 : vector<16x16xf32>
    %281 = arith.subf %279, %280 : vector<16x16xf32>
    %282 = arith.truncf %281 : vector<16x16xf32> to vector<16x16xbf16>
    %283 = vector.shape_cast %282 : vector<16x16xbf16> to vector<1x16x16xbf16>
    %284 = arith.mulf %275, %6 : vector<16x16xf32>
    %285 = arith.mulf %274, %8 : vector<16x16xf32>
    %286 = arith.addf %284, %285 : vector<16x16xf32>
    %287 = arith.truncf %286 : vector<16x16xf32> to vector<16x16xbf16>
    %288 = vector.shape_cast %287 : vector<16x16xbf16> to vector<1x16x16xbf16>
    %289 = arith.mulf %276, %3 : vector<16x16xf32>
    %290 = arith.mulf %277, %4 : vector<16x16xf32>
    %291 = arith.subf %289, %290 : vector<16x16xf32>
    %292 = arith.truncf %291 : vector<16x16xf32> to vector<16x16xbf16>
    %293 = vector.shape_cast %292 : vector<16x16xbf16> to vector<1x16x16xbf16>
    %294 = arith.mulf %277, %3 : vector<16x16xf32>
    %295 = arith.mulf %276, %4 : vector<16x16xf32>
    %296 = arith.addf %294, %295 : vector<16x16xf32>
    %297 = arith.truncf %296 : vector<16x16xf32> to vector<16x16xbf16>
    %298 = vector.shape_cast %297 : vector<16x16xbf16> to vector<1x16x16xbf16>
    %299 = arith.truncf %278 : vector<16x32xf32> to vector<16x32xbf16>
    %300 = vector.shape_cast %299 : vector<16x32xbf16> to vector<1x16x32xbf16>
    %301 = vector.extract_strided_slice %283 {offsets = [0, 0, 0], sizes = [1, 16, 4], strides = [1, 1, 1]} : vector<1x16x16xbf16> to vector<1x16x4xbf16>
    %302 = vector.extract_strided_slice %293 {offsets = [0, 0, 0], sizes = [1, 16, 4], strides = [1, 1, 1]} : vector<1x16x16xbf16> to vector<1x16x4xbf16>
    "tpu.trace_start"() <{level = 10 : i32, message = "bsd,btd->bst"}> : () -> ()
    %cst_100 = arith.constant dense<0.000000e+00> : vector<1x16x16xf32>
    %303 = tpu.matmul %301, %302, %cst_100 {dimension_numbers = #tpu.dot_dimension_numbers<[2], [2], [1], [1], [0, 0, 0, 1, 1, 1], [0], [0]>} : vector<1x16x4xbf16>, vector<1x16x4xbf16>, vector<1x16x16xf32> -> vector<1x16x16xf32>
    "tpu.trace_stop"() : () -> ()
    %304 = vector.extract_strided_slice %288 {offsets = [0, 0, 0], sizes = [1, 16, 4], strides = [1, 1, 1]} : vector<1x16x16xbf16> to vector<1x16x4xbf16>
    %305 = vector.extract_strided_slice %298 {offsets = [0, 0, 0], sizes = [1, 16, 4], strides = [1, 1, 1]} : vector<1x16x16xbf16> to vector<1x16x4xbf16>
    "tpu.trace_start"() <{level = 10 : i32, message = "bsd,btd->bst"}> : () -> ()
    %cst_101 = arith.constant dense<0.000000e+00> : vector<1x16x16xf32>
    %306 = tpu.matmul %304, %305, %cst_101 {dimension_numbers = #tpu.dot_dimension_numbers<[2], [2], [1], [1], [0, 0, 0, 1, 1, 1], [0], [0]>} : vector<1x16x4xbf16>, vector<1x16x4xbf16>, vector<1x16x16xf32> -> vector<1x16x16xf32>
    "tpu.trace_stop"() : () -> ()
    %307 = arith.addf %303, %306 : vector<1x16x16xf32>
    %308 = vector.shape_cast %14 : vector<1x16xf32> to vector<1x1x16xf32>
    %309 = vector.broadcast %308 : vector<1x1x16xf32> to vector<1x16x16xf32>
    %310 = arith.addf %307, %309 : vector<1x16x16xf32>
    %cst_102 = arith.constant dense<0xFF800000> : vector<1x16xf32>
    %311 = vector.multi_reduction <maximumf>, %310, %cst_102 [2] : vector<1x16x16xf32> to vector<1x16xf32>
    %312 = vector.shape_cast %311 : vector<1x16xf32> to vector<1x16x1xf32>
    %313 = vector.broadcast %312 : vector<1x16x1xf32> to vector<1x16x16xf32>
    %314 = arith.subf %310, %313 : vector<1x16x16xf32>
    %315 = math.exp %314 : vector<1x16x16xf32>
    %cst_103 = arith.constant dense<0.000000e+00> : vector<1x16xf32>
    %316 = vector.multi_reduction <add>, %315, %cst_103 [2] : vector<1x16x16xf32> to vector<1x16xf32>
    %317 = vector.shape_cast %316 : vector<1x16xf32> to vector<1x16x1xf32>
    %318 = tpu.reciprocal %317 {approx = true} : vector<1x16x1xf32> -> vector<1x16x1xf32>
    %319 = vector.broadcast %318 : vector<1x16x1xf32> to vector<1x16x16xf32>
    %320 = arith.mulf %315, %319 : vector<1x16x16xf32>
    %321 = arith.truncf %320 : vector<1x16x16xf32> to vector<1x16x16xbf16>
    %322 = vector.extract_strided_slice %300 {offsets = [0, 0, 0], sizes = [1, 16, 8], strides = [1, 1, 1]} : vector<1x16x32xbf16> to vector<1x16x8xbf16>
    "tpu.trace_start"() <{level = 10 : i32, message = "bst,btd->bsd"}> : () -> ()
    %cst_104 = arith.constant dense<0.000000e+00> : vector<1x16x8xf32>
    %323 = tpu.matmul %321, %322, %cst_104 {dimension_numbers = #tpu.dot_dimension_numbers<[2], [1], [1], [2], [0, 0, 0, 1, 1, 2], [0], [0]>} : vector<1x16x16xbf16>, vector<1x16x8xbf16>, vector<1x16x8xf32> -> vector<1x16x8xf32>
    "tpu.trace_stop"() : () -> ()
    %324 = vector.extract_strided_slice %283 {offsets = [0, 0, 4], sizes = [1, 16, 4], strides = [1, 1, 1]} : vector<1x16x16xbf16> to vector<1x16x4xbf16>
    %325 = vector.extract_strided_slice %293 {offsets = [0, 0, 4], sizes = [1, 16, 4], strides = [1, 1, 1]} : vector<1x16x16xbf16> to vector<1x16x4xbf16>
    "tpu.trace_start"() <{level = 10 : i32, message = "bsd,btd->bst"}> : () -> ()
    %cst_105 = arith.constant dense<0.000000e+00> : vector<1x16x16xf32>
    %326 = tpu.matmul %324, %325, %cst_105 {dimension_numbers = #tpu.dot_dimension_numbers<[2], [2], [1], [1], [0, 0, 0, 1, 1, 1], [0], [0]>} : vector<1x16x4xbf16>, vector<1x16x4xbf16>, vector<1x16x16xf32> -> vector<1x16x16xf32>
    "tpu.trace_stop"() : () -> ()
    %327 = vector.extract_strided_slice %288 {offsets = [0, 0, 4], sizes = [1, 16, 4], strides = [1, 1, 1]} : vector<1x16x16xbf16> to vector<1x16x4xbf16>
    %328 = vector.extract_strided_slice %298 {offsets = [0, 0, 4], sizes = [1, 16, 4], strides = [1, 1, 1]} : vector<1x16x16xbf16> to vector<1x16x4xbf16>
    "tpu.trace_start"() <{level = 10 : i32, message = "bsd,btd->bst"}> : () -> ()
    %cst_106 = arith.constant dense<0.000000e+00> : vector<1x16x16xf32>
    %329 = tpu.matmul %327, %328, %cst_106 {dimension_numbers = #tpu.dot_dimension_numbers<[2], [2], [1], [1], [0, 0, 0, 1, 1, 1], [0], [0]>} : vector<1x16x4xbf16>, vector<1x16x4xbf16>, vector<1x16x16xf32> -> vector<1x16x16xf32>
    "tpu.trace_stop"() : () -> ()
    %330 = arith.addf %326, %329 : vector<1x16x16xf32>
    %331 = vector.shape_cast %14 : vector<1x16xf32> to vector<1x1x16xf32>
    %332 = vector.broadcast %331 : vector<1x1x16xf32> to vector<1x16x16xf32>
    %333 = arith.addf %330, %332 : vector<1x16x16xf32>
    %cst_107 = arith.constant dense<0xFF800000> : vector<1x16xf32>
    %334 = vector.multi_reduction <maximumf>, %333, %cst_107 [2] : vector<1x16x16xf32> to vector<1x16xf32>
    %335 = vector.shape_cast %334 : vector<1x16xf32> to vector<1x16x1xf32>
    %336 = vector.broadcast %335 : vector<1x16x1xf32> to vector<1x16x16xf32>
    %337 = arith.subf %333, %336 : vector<1x16x16xf32>
    %338 = math.exp %337 : vector<1x16x16xf32>
    %cst_108 = arith.constant dense<0.000000e+00> : vector<1x16xf32>
    %339 = vector.multi_reduction <add>, %338, %cst_108 [2] : vector<1x16x16xf32> to vector<1x16xf32>
    %340 = vector.shape_cast %339 : vector<1x16xf32> to vector<1x16x1xf32>
    %341 = tpu.reciprocal %340 {approx = true} : vector<1x16x1xf32> -> vector<1x16x1xf32>
    %342 = vector.broadcast %341 : vector<1x16x1xf32> to vector<1x16x16xf32>
    %343 = arith.mulf %338, %342 : vector<1x16x16xf32>
    %344 = arith.truncf %343 : vector<1x16x16xf32> to vector<1x16x16xbf16>
    %345 = vector.extract_strided_slice %300 {offsets = [0, 0, 8], sizes = [1, 16, 8], strides = [1, 1, 1]} : vector<1x16x32xbf16> to vector<1x16x8xbf16>
    "tpu.trace_start"() <{level = 10 : i32, message = "bst,btd->bsd"}> : () -> ()
    %cst_109 = arith.constant dense<0.000000e+00> : vector<1x16x8xf32>
    %346 = tpu.matmul %344, %345, %cst_109 {dimension_numbers = #tpu.dot_dimension_numbers<[2], [1], [1], [2], [0, 0, 0, 1, 1, 2], [0], [0]>} : vector<1x16x16xbf16>, vector<1x16x8xbf16>, vector<1x16x8xf32> -> vector<1x16x8xf32>
    "tpu.trace_stop"() : () -> ()
    %347 = vector.extract_strided_slice %283 {offsets = [0, 0, 8], sizes = [1, 16, 4], strides = [1, 1, 1]} : vector<1x16x16xbf16> to vector<1x16x4xbf16>
    %348 = vector.extract_strided_slice %293 {offsets = [0, 0, 8], sizes = [1, 16, 4], strides = [1, 1, 1]} : vector<1x16x16xbf16> to vector<1x16x4xbf16>
    "tpu.trace_start"() <{level = 10 : i32, message = "bsd,btd->bst"}> : () -> ()
    %cst_110 = arith.constant dense<0.000000e+00> : vector<1x16x16xf32>
    %349 = tpu.matmul %347, %348, %cst_110 {dimension_numbers = #tpu.dot_dimension_numbers<[2], [2], [1], [1], [0, 0, 0, 1, 1, 1], [0], [0]>} : vector<1x16x4xbf16>, vector<1x16x4xbf16>, vector<1x16x16xf32> -> vector<1x16x16xf32>
    "tpu.trace_stop"() : () -> ()
    %350 = vector.extract_strided_slice %288 {offsets = [0, 0, 8], sizes = [1, 16, 4], strides = [1, 1, 1]} : vector<1x16x16xbf16> to vector<1x16x4xbf16>
    %351 = vector.extract_strided_slice %298 {offsets = [0, 0, 8], sizes = [1, 16, 4], strides = [1, 1, 1]} : vector<1x16x16xbf16> to vector<1x16x4xbf16>
    "tpu.trace_start"() <{level = 10 : i32, message = "bsd,btd->bst"}> : () -> ()
    %cst_111 = arith.constant dense<0.000000e+00> : vector<1x16x16xf32>
    %352 = tpu.matmul %350, %351, %cst_111 {dimension_numbers = #tpu.dot_dimension_numbers<[2], [2], [1], [1], [0, 0, 0, 1, 1, 1], [0], [0]>} : vector<1x16x4xbf16>, vector<1x16x4xbf16>, vector<1x16x16xf32> -> vector<1x16x16xf32>
    "tpu.trace_stop"() : () -> ()
    %353 = arith.addf %349, %352 : vector<1x16x16xf32>
    %354 = vector.shape_cast %14 : vector<1x16xf32> to vector<1x1x16xf32>
    %355 = vector.broadcast %354 : vector<1x1x16xf32> to vector<1x16x16xf32>
    %356 = arith.addf %353, %355 : vector<1x16x16xf32>
    %cst_112 = arith.constant dense<0xFF800000> : vector<1x16xf32>
    %357 = vector.multi_reduction <maximumf>, %356, %cst_112 [2] : vector<1x16x16xf32> to vector<1x16xf32>
    %358 = vector.shape_cast %357 : vector<1x16xf32> to vector<1x16x1xf32>
    %359 = vector.broadcast %358 : vector<1x16x1xf32> to vector<1x16x16xf32>
    %360 = arith.subf %356, %359 : vector<1x16x16xf32>
    %361 = math.exp %360 : vector<1x16x16xf32>
    %cst_113 = arith.constant dense<0.000000e+00> : vector<1x16xf32>
    %362 = vector.multi_reduction <add>, %361, %cst_113 [2] : vector<1x16x16xf32> to vector<1x16xf32>
    %363 = vector.shape_cast %362 : vector<1x16xf32> to vector<1x16x1xf32>
    %364 = tpu.reciprocal %363 {approx = true} : vector<1x16x1xf32> -> vector<1x16x1xf32>
    %365 = vector.broadcast %364 : vector<1x16x1xf32> to vector<1x16x16xf32>
    %366 = arith.mulf %361, %365 : vector<1x16x16xf32>
    %367 = arith.truncf %366 : vector<1x16x16xf32> to vector<1x16x16xbf16>
    %368 = vector.extract_strided_slice %300 {offsets = [0, 0, 16], sizes = [1, 16, 8], strides = [1, 1, 1]} : vector<1x16x32xbf16> to vector<1x16x8xbf16>
    "tpu.trace_start"() <{level = 10 : i32, message = "bst,btd->bsd"}> : () -> ()
    %cst_114 = arith.constant dense<0.000000e+00> : vector<1x16x8xf32>
    %369 = tpu.matmul %367, %368, %cst_114 {dimension_numbers = #tpu.dot_dimension_numbers<[2], [1], [1], [2], [0, 0, 0, 1, 1, 2], [0], [0]>} : vector<1x16x16xbf16>, vector<1x16x8xbf16>, vector<1x16x8xf32> -> vector<1x16x8xf32>
    "tpu.trace_stop"() : () -> ()
    %370 = vector.extract_strided_slice %283 {offsets = [0, 0, 12], sizes = [1, 16, 4], strides = [1, 1, 1]} : vector<1x16x16xbf16> to vector<1x16x4xbf16>
    %371 = vector.extract_strided_slice %293 {offsets = [0, 0, 12], sizes = [1, 16, 4], strides = [1, 1, 1]} : vector<1x16x16xbf16> to vector<1x16x4xbf16>
    "tpu.trace_start"() <{level = 10 : i32, message = "bsd,btd->bst"}> : () -> ()
    %cst_115 = arith.constant dense<0.000000e+00> : vector<1x16x16xf32>
    %372 = tpu.matmul %370, %371, %cst_115 {dimension_numbers = #tpu.dot_dimension_numbers<[2], [2], [1], [1], [0, 0, 0, 1, 1, 1], [0], [0]>} : vector<1x16x4xbf16>, vector<1x16x4xbf16>, vector<1x16x16xf32> -> vector<1x16x16xf32>
    "tpu.trace_stop"() : () -> ()
    %373 = vector.extract_strided_slice %288 {offsets = [0, 0, 12], sizes = [1, 16, 4], strides = [1, 1, 1]} : vector<1x16x16xbf16> to vector<1x16x4xbf16>
    %374 = vector.extract_strided_slice %298 {offsets = [0, 0, 12], sizes = [1, 16, 4], strides = [1, 1, 1]} : vector<1x16x16xbf16> to vector<1x16x4xbf16>
    "tpu.trace_start"() <{level = 10 : i32, message = "bsd,btd->bst"}> : () -> ()
    %cst_116 = arith.constant dense<0.000000e+00> : vector<1x16x16xf32>
    %375 = tpu.matmul %373, %374, %cst_116 {dimension_numbers = #tpu.dot_dimension_numbers<[2], [2], [1], [1], [0, 0, 0, 1, 1, 1], [0], [0]>} : vector<1x16x4xbf16>, vector<1x16x4xbf16>, vector<1x16x16xf32> -> vector<1x16x16xf32>
    "tpu.trace_stop"() : () -> ()
    %376 = arith.addf %372, %375 : vector<1x16x16xf32>
    %377 = vector.shape_cast %14 : vector<1x16xf32> to vector<1x1x16xf32>
    %378 = vector.broadcast %377 : vector<1x1x16xf32> to vector<1x16x16xf32>
    %379 = arith.addf %376, %378 : vector<1x16x16xf32>
    %cst_117 = arith.constant dense<0xFF800000> : vector<1x16xf32>
    %380 = vector.multi_reduction <maximumf>, %379, %cst_117 [2] : vector<1x16x16xf32> to vector<1x16xf32>
    %381 = vector.shape_cast %380 : vector<1x16xf32> to vector<1x16x1xf32>
    %382 = vector.broadcast %381 : vector<1x16x1xf32> to vector<1x16x16xf32>
    %383 = arith.subf %379, %382 : vector<1x16x16xf32>
    %384 = math.exp %383 : vector<1x16x16xf32>
    %cst_118 = arith.constant dense<0.000000e+00> : vector<1x16xf32>
    %385 = vector.multi_reduction <add>, %384, %cst_118 [2] : vector<1x16x16xf32> to vector<1x16xf32>
    %386 = vector.shape_cast %385 : vector<1x16xf32> to vector<1x16x1xf32>
    %387 = tpu.reciprocal %386 {approx = true} : vector<1x16x1xf32> -> vector<1x16x1xf32>
    %388 = vector.broadcast %387 : vector<1x16x1xf32> to vector<1x16x16xf32>
    %389 = arith.mulf %384, %388 : vector<1x16x16xf32>
    %390 = arith.truncf %389 : vector<1x16x16xf32> to vector<1x16x16xbf16>
    %391 = vector.extract_strided_slice %300 {offsets = [0, 0, 24], sizes = [1, 16, 8], strides = [1, 1, 1]} : vector<1x16x32xbf16> to vector<1x16x8xbf16>
    "tpu.trace_start"() <{level = 10 : i32, message = "bst,btd->bsd"}> : () -> ()
    %cst_119 = arith.constant dense<0.000000e+00> : vector<1x16x8xf32>
    %392 = tpu.matmul %390, %391, %cst_119 {dimension_numbers = #tpu.dot_dimension_numbers<[2], [1], [1], [2], [0, 0, 0, 1, 1, 2], [0], [0]>} : vector<1x16x16xbf16>, vector<1x16x8xbf16>, vector<1x16x8xf32> -> vector<1x16x8xf32>
    "tpu.trace_stop"() : () -> ()
    %393 = tpu.concatenate %323, %346, %369, %392 in 2 : vector<1x16x8xf32>, vector<1x16x8xf32>, vector<1x16x8xf32>, vector<1x16x8xf32> -> vector<1x16x32xf32>
    %394 = vector.shape_cast %393 : vector<1x16x32xf32> to vector<16x32xf32>
    %395 = arith.truncf %394 : vector<16x32xf32> to vector<16x32xbf16>
    %c1_120 = arith.constant 1 : index
    %c0_121 = arith.constant 0 : index
    %c0_122 = arith.constant 0 : index
    %396 = vector.load %arg8[%c1_120, %c0_121, %c0_122] : memref<2x32x32xbf16, #tpu.memory_space<vmem>>, vector<1x32x32xbf16>
    %397 = vector.shape_cast %396 : vector<1x32x32xbf16> to vector<32x32xbf16>
    %cst_123 = arith.constant dense<0.000000e+00> : vector<16x32xf32>
    %398 = tpu.matmul %395, %397, %cst_123 {dimension_numbers = #tpu.dot_dimension_numbers<[1], [0], [0], [1], [0, 0, 1, 1], [], []>} : vector<16x32xbf16>, vector<32x32xbf16>, vector<16x32xf32> -> vector<16x32xf32>
    %c1_124 = arith.constant 1 : index
    %c0_125 = arith.constant 0 : index
    %c0_126 = arith.constant 0 : index
    %399 = vector.load %arg9[%c1_124, %c0_125, %c0_126] : memref<2x1x32xbf16, #tpu.memory_space<vmem>>, vector<1x1x32xbf16>
    %400 = vector.shape_cast %399 : vector<1x1x32xbf16> to vector<1x32xbf16>
    %401 = arith.extf %400 : vector<1x32xbf16> to vector<1x32xf32>
    %402 = vector.broadcast %401 : vector<1x32xf32> to vector<16x32xf32>
    %403 = arith.addf %398, %402 : vector<16x32xf32>
    %404 = arith.addf %238, %403 : vector<16x32xf32>
    %c1_127 = arith.constant 1 : index
    %c0_128 = arith.constant 0 : index
    %c0_129 = arith.constant 0 : index
    %405 = vector.load %arg10[%c1_127, %c0_128, %c0_129] : memref<2x1x32xbf16, #tpu.memory_space<vmem>>, vector<1x1x32xbf16>
    %406 = vector.shape_cast %405 : vector<1x1x32xbf16> to vector<1x32xbf16>
    %407 = arith.extf %406 : vector<1x32xbf16> to vector<1x32xf32>
    %c1_130 = arith.constant 1 : index
    %c0_131 = arith.constant 0 : index
    %c0_132 = arith.constant 0 : index
    %408 = vector.load %arg11[%c1_130, %c0_131, %c0_132] : memref<2x1x32xbf16, #tpu.memory_space<vmem>>, vector<1x1x32xbf16>
    %409 = vector.shape_cast %408 : vector<1x1x32xbf16> to vector<1x32xbf16>
    %410 = arith.extf %409 : vector<1x32xbf16> to vector<1x32xf32>
    %cst_133 = arith.constant dense<0.000000e+00> : vector<16xf32>
    %411 = vector.multi_reduction <add>, %404, %cst_133 [1] : vector<16x32xf32> to vector<16xf32>
    %412 = vector.shape_cast %411 : vector<16xf32> to vector<16x1xf32>
    %cst_134 = arith.constant 3.200000e+01 : f32
    %413 = vector.broadcast %cst_134 : f32 to vector<16x1xf32>
    %414 = arith.divf %412, %413 : vector<16x1xf32>
    %415 = vector.broadcast %414 : vector<16x1xf32> to vector<16x32xf32>
    %416 = arith.subf %404, %415 : vector<16x32xf32>
    %417 = arith.mulf %416, %416 : vector<16x32xf32>
    %cst_135 = arith.constant dense<0.000000e+00> : vector<16xf32>
    %418 = vector.multi_reduction <add>, %417, %cst_135 [1] : vector<16x32xf32> to vector<16xf32>
    %419 = vector.shape_cast %418 : vector<16xf32> to vector<16x1xf32>
    %cst_136 = arith.constant 3.200000e+01 : f32
    %420 = vector.broadcast %cst_136 : f32 to vector<16x1xf32>
    %421 = arith.divf %419, %420 : vector<16x1xf32>
    %cst_137 = arith.constant 9.99999974E-6 : f32
    %422 = vector.broadcast %cst_137 : f32 to vector<16x1xf32>
    %423 = arith.addf %421, %422 : vector<16x1xf32>
    %424 = math.rsqrt %423 : vector<16x1xf32>
    %425 = vector.broadcast %424 : vector<16x1xf32> to vector<16x32xf32>
    %426 = arith.mulf %416, %425 : vector<16x32xf32>
    %427 = vector.broadcast %407 : vector<1x32xf32> to vector<16x32xf32>
    %428 = arith.mulf %426, %427 : vector<16x32xf32>
    %429 = vector.broadcast %410 : vector<1x32xf32> to vector<16x32xf32>
    %430 = arith.addf %428, %429 : vector<16x32xf32>
    %431 = arith.truncf %430 : vector<16x32xf32> to vector<16x32xbf16>
    %c1_138 = arith.constant 1 : index
    %c0_139 = arith.constant 0 : index
    %c0_140 = arith.constant 0 : index
    %432 = vector.load %arg12[%c1_138, %c0_139, %c0_140] : memref<2x32x64xbf16, #tpu.memory_space<vmem>>, vector<1x32x64xbf16>
    %433 = vector.shape_cast %432 : vector<1x32x64xbf16> to vector<32x64xbf16>
    %cst_141 = arith.constant dense<0.000000e+00> : vector<16x64xf32>
    %434 = tpu.matmul %431, %433, %cst_141 {dimension_numbers = #tpu.dot_dimension_numbers<[1], [0], [0], [1], [0, 0, 1, 1], [], []>} : vector<16x32xbf16>, vector<32x64xbf16>, vector<16x64xf32> -> vector<16x64xf32>
    %c1_142 = arith.constant 1 : index
    %c0_143 = arith.constant 0 : index
    %c0_144 = arith.constant 0 : index
    %435 = vector.load %arg13[%c1_142, %c0_143, %c0_144] : memref<2x1x64xbf16, #tpu.memory_space<vmem>>, vector<1x1x64xbf16>
    %436 = vector.shape_cast %435 : vector<1x1x64xbf16> to vector<1x64xbf16>
    %437 = arith.extf %436 : vector<1x64xbf16> to vector<1x64xf32>
    %438 = vector.broadcast %437 : vector<1x64xf32> to vector<16x64xf32>
    %439 = arith.addf %434, %438 : vector<16x64xf32>
    %440 = arith.mulf %439, %439 : vector<16x64xf32>
    %441 = arith.mulf %439, %440 : vector<16x64xf32>
    %cst_145 = arith.constant 4.471500e-02 : f32
    %442 = vector.broadcast %cst_145 : f32 to vector<16x64xf32>
    %443 = arith.mulf %442, %441 : vector<16x64xf32>
    %444 = arith.addf %439, %443 : vector<16x64xf32>
    %cst_146 = arith.constant 0.797884583 : f32
    %445 = vector.broadcast %cst_146 : f32 to vector<16x64xf32>
    %446 = arith.mulf %445, %444 : vector<16x64xf32>
    %447 = math.tanh %446 : vector<16x64xf32>
    %cst_147 = arith.constant 1.000000e+00 : f32
    %448 = vector.broadcast %cst_147 : f32 to vector<16x64xf32>
    %449 = arith.addf %448, %447 : vector<16x64xf32>
    %cst_148 = arith.constant 5.000000e-01 : f32
    %450 = vector.broadcast %cst_148 : f32 to vector<16x64xf32>
    %451 = arith.mulf %450, %449 : vector<16x64xf32>
    %452 = arith.mulf %439, %451 : vector<16x64xf32>
    %453 = arith.truncf %452 : vector<16x64xf32> to vector<16x64xbf16>
    %c1_149 = arith.constant 1 : index
    %c0_150 = arith.constant 0 : index
    %c0_151 = arith.constant 0 : index
    %454 = vector.load %arg14[%c1_149, %c0_150, %c0_151] : memref<2x64x32xbf16, #tpu.memory_space<vmem>>, vector<1x64x32xbf16>
    %455 = vector.shape_cast %454 : vector<1x64x32xbf16> to vector<64x32xbf16>
    %cst_152 = arith.constant dense<0.000000e+00> : vector<16x32xf32>
    %456 = tpu.matmul %453, %455, %cst_152 {dimension_numbers = #tpu.dot_dimension_numbers<[1], [0], [0], [1], [0, 0, 1, 1], [], []>} : vector<16x64xbf16>, vector<64x32xbf16>, vector<16x32xf32> -> vector<16x32xf32>
    %457 = arith.addf %404, %456 : vector<16x32xf32>
    %c1_153 = arith.constant 1 : index
    %c0_154 = arith.constant 0 : index
    %c0_155 = arith.constant 0 : index
    %458 = vector.load %arg15[%c1_153, %c0_154, %c0_155] : memref<2x1x32xbf16, #tpu.memory_space<vmem>>, vector<1x1x32xbf16>
    %459 = vector.shape_cast %458 : vector<1x1x32xbf16> to vector<1x32xbf16>
    %460 = arith.extf %459 : vector<1x32xbf16> to vector<1x32xf32>
    %461 = vector.broadcast %460 : vector<1x32xf32> to vector<16x32xf32>
    %462 = arith.addf %457, %461 : vector<16x32xf32>
    %c0_156 = arith.constant 0 : index
    %c0_157 = arith.constant 0 : index
    %463 = vector.load %arg16[%c0_156, %c0_157] : memref<1x32xbf16, #tpu.memory_space<vmem>>, vector<1x32xbf16>
    %464 = arith.extf %463 : vector<1x32xbf16> to vector<1x32xf32>
    %c0_158 = arith.constant 0 : index
    %c0_159 = arith.constant 0 : index
    %465 = vector.load %arg17[%c0_158, %c0_159] : memref<1x32xbf16, #tpu.memory_space<vmem>>, vector<1x32xbf16>
    %466 = arith.extf %465 : vector<1x32xbf16> to vector<1x32xf32>
    %cst_160 = arith.constant dense<0.000000e+00> : vector<16xf32>
    %467 = vector.multi_reduction <add>, %462, %cst_160 [1] : vector<16x32xf32> to vector<16xf32>
    %468 = vector.shape_cast %467 : vector<16xf32> to vector<16x1xf32>
    %cst_161 = arith.constant 3.200000e+01 : f32
    %469 = vector.broadcast %cst_161 : f32 to vector<16x1xf32>
    %470 = arith.divf %468, %469 : vector<16x1xf32>
    %471 = vector.broadcast %470 : vector<16x1xf32> to vector<16x32xf32>
    %472 = arith.subf %462, %471 : vector<16x32xf32>
    %473 = arith.mulf %472, %472 : vector<16x32xf32>
    %cst_162 = arith.constant dense<0.000000e+00> : vector<16xf32>
    %474 = vector.multi_reduction <add>, %473, %cst_162 [1] : vector<16x32xf32> to vector<16xf32>
    %475 = vector.shape_cast %474 : vector<16xf32> to vector<16x1xf32>
    %cst_163 = arith.constant 3.200000e+01 : f32
    %476 = vector.broadcast %cst_163 : f32 to vector<16x1xf32>
    %477 = arith.divf %475, %476 : vector<16x1xf32>
    %cst_164 = arith.constant 9.99999974E-6 : f32
    %478 = vector.broadcast %cst_164 : f32 to vector<16x1xf32>
    %479 = arith.addf %477, %478 : vector<16x1xf32>
    %480 = math.rsqrt %479 : vector<16x1xf32>
    %481 = vector.broadcast %480 : vector<16x1xf32> to vector<16x32xf32>
    %482 = arith.mulf %472, %481 : vector<16x32xf32>
    %483 = vector.broadcast %464 : vector<1x32xf32> to vector<16x32xf32>
    %484 = arith.mulf %482, %483 : vector<16x32xf32>
    %485 = vector.broadcast %466 : vector<1x32xf32> to vector<16x32xf32>
    %486 = arith.addf %484, %485 : vector<16x32xf32>
    %487 = vector.shape_cast %486 : vector<16x32xf32> to vector<1x16x32xf32>
    %c0_165 = arith.constant 0 : index
    %c0_166 = arith.constant 0 : index
    %c0_167 = arith.constant 0 : index
    %488 = vector.load %arg18[%c0_165, %c0_166, %c0_167] : memref<1x16x32xf32, #tpu.memory_space<vmem>>, vector<1x16x32xf32>
    tpu.vector_store %arg18[%c0_165, %c0_166, %c0_167], %487 {strides = array<i32>} : memref<1x16x32xf32, #tpu.memory_space<vmem>>, vector<1x16x32xf32>,
    return
  }
  func.func @transform_0(%arg0: i32) -> (i32, i32, i32) {
    %c0_i32 = arith.constant 0 : i32
    %c0_i32_0 = arith.constant 0 : i32
    %c0_i32_1 = arith.constant 0 : i32
    return %arg0, %c0_i32, %c0_i32_0 : i32, i32, i32
  }
  func.func @transform_1(%arg0: i32) -> (i32, i32) {
    %c0_i32 = arith.constant 0 : i32
    %c0_i32_0 = arith.constant 0 : i32
    %c0_i32_1 = arith.constant 0 : i32
    return %c0_i32, %c0_i32_0 : i32, i32
  }
  func.func @transform_2(%arg0: i32) -> (i32, i32) {
    %c0_i32 = arith.constant 0 : i32
    %c0_i32_0 = arith.constant 0 : i32
    %c0_i32_1 = arith.constant 0 : i32
    return %c0_i32, %c0_i32_0 : i32, i32
  }
  func.func @transform_3(%arg0: i32) -> (i32, i32, i32) {
    %c0_i32 = arith.constant 0 : i32
    %c0_i32_0 = arith.constant 0 : i32
    %c0_i32_1 = arith.constant 0 : i32
    %c0_i32_2 = arith.constant 0 : i32
    return %c0_i32, %c0_i32_0, %c0_i32_1 : i32, i32, i32
  }
  func.func @transform_4(%arg0: i32) -> (i32, i32, i32) {
    %c0_i32 = arith.constant 0 : i32
    %c0_i32_0 = arith.constant 0 : i32
    %c0_i32_1 = arith.constant 0 : i32
    %c0_i32_2 = arith.constant 0 : i32
    return %c0_i32, %c0_i32_0, %c0_i32_1 : i32, i32, i32
  }
  func.func @transform_5(%arg0: i32) -> (i32, i32, i32) {
    %c0_i32 = arith.constant 0 : i32
    %c0_i32_0 = arith.constant 0 : i32
    %c0_i32_1 = arith.constant 0 : i32
    %c0_i32_2 = arith.constant 0 : i32
    return %c0_i32, %c0_i32_0, %c0_i32_1 : i32, i32, i32
  }
  func.func @transform_6(%arg0: i32) -> (i32, i32, i32) {
    %c0_i32 = arith.constant 0 : i32
    %c0_i32_0 = arith.constant 0 : i32
    %c0_i32_1 = arith.constant 0 : i32
    %c0_i32_2 = arith.constant 0 : i32
    return %c0_i32, %c0_i32_0, %c0_i32_1 : i32, i32, i32
  }
  func.func @transform_7(%arg0: i32) -> (i32, i32, i32) {
    %c0_i32 = arith.constant 0 : i32
    %c0_i32_0 = arith.constant 0 : i32
    %c0_i32_1 = arith.constant 0 : i32
    %c0_i32_2 = arith.constant 0 : i32
    return %c0_i32, %c0_i32_0, %c0_i32_1 : i32, i32, i32
  }
  func.func @transform_8(%arg0: i32) -> (i32, i32, i32) {
    %c0_i32 = arith.constant 0 : i32
    %c0_i32_0 = arith.constant 0 : i32
    %c0_i32_1 = arith.constant 0 : i32
    %c0_i32_2 = arith.constant 0 : i32
    return %c0_i32, %c0_i32_0, %c0_i32_1 : i32, i32, i32
  }
  func.func @transform_9(%arg0: i32) -> (i32, i32, i32) {
    %c0_i32 = arith.constant 0 : i32
    %c0_i32_0 = arith.constant 0 : i32
    %c0_i32_1 = arith.constant 0 : i32
    %c0_i32_2 = arith.constant 0 : i32
    return %c0_i32, %c0_i32_0, %c0_i32_1 : i32, i32, i32
  }
  func.func @transform_10(%arg0: i32) -> (i32, i32, i32) {
    %c0_i32 = arith.constant 0 : i32
    %c0_i32_0 = arith.constant 0 : i32
    %c0_i32_1 = arith.constant 0 : i32
    %c0_i32_2 = arith.constant 0 : i32
    return %c0_i32, %c0_i32_0, %c0_i32_1 : i32, i32, i32
  }
  func.func @transform_11(%arg0: i32) -> (i32, i32, i32) {
    %c0_i32 = arith.constant 0 : i32
    %c0_i32_0 = arith.constant 0 : i32
    %c0_i32_1 = arith.constant 0 : i32
    %c0_i32_2 = arith.constant 0 : i32
    return %c0_i32, %c0_i32_0, %c0_i32_1 : i32, i32, i32
  }
  func.func @transform_12(%arg0: i32) -> (i32, i32, i32) {
    %c0_i32 = arith.constant 0 : i32
    %c0_i32_0 = arith.constant 0 : i32
    %c0_i32_1 = arith.constant 0 : i32
    %c0_i32_2 = arith.constant 0 : i32
    return %c0_i32, %c0_i32_0, %c0_i32_1 : i32, i32, i32
  }
  func.func @transform_13(%arg0: i32) -> (i32, i32, i32) {
    %c0_i32 = arith.constant 0 : i32
    %c0_i32_0 = arith.constant 0 : i32
    %c0_i32_1 = arith.constant 0 : i32
    %c0_i32_2 = arith.constant 0 : i32
    return %c0_i32, %c0_i32_0, %c0_i32_1 : i32, i32, i32
  }
  func.func @transform_14(%arg0: i32) -> (i32, i32, i32) {
    %c0_i32 = arith.constant 0 : i32
    %c0_i32_0 = arith.constant 0 : i32
    %c0_i32_1 = arith.constant 0 : i32
    %c0_i32_2 = arith.constant 0 : i32
    return %c0_i32, %c0_i32_0, %c0_i32_1 : i32, i32, i32
  }
  func.func @transform_15(%arg0: i32) -> (i32, i32) {
    %c0_i32 = arith.constant 0 : i32
    %c0_i32_0 = arith.constant 0 : i32
    %c0_i32_1 = arith.constant 0 : i32
    return %c0_i32, %c0_i32_0 : i32, i32
  }
  func.func @transform_16(%arg0: i32) -> (i32, i32) {
    %c0_i32 = arith.constant 0 : i32
    %c0_i32_0 = arith.constant 0 : i32
    %c0_i32_1 = arith.constant 0 : i32
    return %c0_i32, %c0_i32_0 : i32, i32
  }
  func.func @transform_17(%arg0: i32) -> (i32, i32, i32) {
    %c0_i32 = arith.constant 0 : i32
    %c0_i32_0 = arith.constant 0 : i32
    %c0_i32_1 = arith.constant 0 : i32
    return %arg0, %c0_i32, %c0_i32_0 : i32, i32, i32
  }
}

</mosaic_0001>

<llo_original>
// kernel: esm2_embed.1
$region0: #{esm2_embed.1}
  #allocation0 [shape = 'u32[]', space=smem, size = 0x4, offset = 0x4, fixed_abs, tag = 'smem constant byte address 0x4 - core index']
  #allocation1 [shape = 'u32[72,128]{1,0:T(1,128)}', space=vmem, size = 0x9000, scoped, tag = 'internal scratch']
  %s0 = inlined_call_operand.vmem [shape: bf16[2,16,32], index: 0, kind: input, shape index: {}]
  %s1 = inlined_call_operand.vmem [shape: f32[16,16], index: 1, kind: input, shape index: {}]
  %s2 = inlined_call_operand.vmem [shape: f32[16,16], index: 2, kind: input, shape index: {}]
  %s3 = inlined_call_operand.vmem [shape: bf16[2,1,32], index: 3, kind: input, shape index: {}]
  %s4 = inlined_call_operand.vmem [shape: bf16[2,1,32], index: 4, kind: input, shape index: {}]
  %s5 = inlined_call_operand.vmem [shape: bf16[2,32,96], index: 5, kind: input, shape index: {}]
  %s6 = inlined_call_operand.vmem [shape: bf16[2,1,96], index: 6, kind: input, shape index: {}]
  %s7 = inlined_call_operand.vmem [shape: bf16[2,32,32], index: 7, kind: input, shape index: {}]
  %s8 = inlined_call_operand.vmem [shape: bf16[2,1,32], index: 8, kind: input, shape index: {}]
  %s9 = inlined_call_operand.vmem [shape: bf16[2,1,32], index: 9, kind: input, shape index: {}]
  %s10 = inlined_call_operand.vmem [shape: bf16[2,1,32], index: 10, kind: input, shape index: {}]
  %s11 = inlined_call_operand.vmem [shape: bf16[2,32,64], index: 11, kind: input, shape index: {}]
  %s12 = inlined_call_operand.vmem [shape: bf16[2,1,64], index: 12, kind: input, shape index: {}]
  %s13 = inlined_call_operand.vmem [shape: bf16[2,64,32], index: 13, kind: input, shape index: {}]
  %s14 = inlined_call_operand.vmem [shape: bf16[2,1,32], index: 14, kind: input, shape index: {}]
  %s15 = inlined_call_operand.vmem [shape: bf16[1,32], index: 15, kind: input, shape index: {}]
  %s16 = inlined_call_operand.vmem [shape: bf16[1,32], index: 16, kind: input, shape index: {}]
  %s17 = inlined_call_operand.vmem [shape: f32[2,16,32], index: 17, kind: output, shape index: {}]
  %s18 = sld [smem:[#allocation0]]
  $region101: #{esm2_embed.1} parent=0
    _
  %s20 = ssub.s32 1, %s18
  %s21 = scalar_select 0, %s20, %s18
  loop: start=0, step=1, limit=4
  $region2: #{esm2_embed.1} parent=0 // loop_pre_header
    _
  $region3: #{esm2_embed.1} parent=0 // loop_header
    %s23 = sphi 0, %s27
    %p24 = scmp.ge.s32.totalorder %s23, 4
    %s33 = sphi 0, %s35
    %s36 = sphi 0, %s33
    %s37 = sphi 0, %s36
    %s53 = sphi 0, %s37
    %s57 = sphi 0, %s57
    %s59 = sphi 0, %s57
    %s60 = sphi 0, %s59
    %s74 = sphi 0, %s60
    %s78 = sphi 0, %s78
    %s80 = sphi 0, %s78
    %s81 = sphi 0, %s80
    %s95 = sphi 0, %s81
    %s99 = sphi 0, %s99
    %s101 = sphi 0, %s99
    %s102 = sphi 0, %s101
    %s116 = sphi 0, %s102
    %s120 = sphi 0, %s120
    %s122 = sphi 0, %s120
    %s123 = sphi 0, %s122
    %s137 = sphi 0, %s123
    %s141 = sphi 0, %s141
    %s143 = sphi 0, %s141
    %s144 = sphi 0, %s143
    %s158 = sphi 0, %s144
    %s162 = sphi 0, %s162
    %s164 = sphi 0, %s162
    %s165 = sphi 0, %s164
    %s179 = sphi 0, %s165
    %s183 = sphi 0, %s183
    %s185 = sphi 0, %s183
    %s186 = sphi 0, %s185
    %s200 = sphi 0, %s186
    %s204 = sphi 0, %s204
    %s206 = sphi 0, %s204
    %s207 = sphi 0, %s206
    %s221 = sphi 0, %s207
    %s225 = sphi 0, %s225
    %s227 = sphi 0, %s225
    %s228 = sphi 0, %s227
    %s242 = sphi 0, %s228
    %s246 = sphi 0, %s246
    %s248 = sphi 0, %s246
    %s249 = sphi 0, %s248
    %s263 = sphi 0, %s249
    %s267 = sphi 0, %s267
    %s269 = sphi 0, %s267
    %s270 = sphi 0, %s269
    %s284 = sphi 0, %s270
    %s288 = sphi 0, %s288
    %s290 = sphi 0, %s288
    %s291 = sphi 0, %s290
    %s305 = sphi 0, %s291
    %s309 = sphi 0, %s309
    %s311 = sphi 0, %s309
    %s312 = sphi 0, %s311
    %s326 = sphi 0, %s312
    %s330 = sphi 0, %s330
    %s332 = sphi 0, %s330
    %s333 = sphi 0, %s332
    %s347 = sphi 0, %s333
    %s351 = sphi 0, %s351
    %s353 = sphi 0, %s351
    %s354 = sphi 0, %s353
    %s368 = sphi 0, %s354
    %s372 = sphi 0, %s372
    %s374 = sphi 0, %s372
    %s375 = sphi 0, %s374
    %s389 = sphi 0, %s375
    %s395 = sphi 0, %s397
    %s398 = sphi 0, %s395
    %s399 = sphi 0, %s398
    %s415 = sphi 0, %s399
  $region4: #{esm2_embed.1} parent=0 // loop_header_branch
    %26 = sbr.rel (%p24) target = $region8
  $region5: #{esm2_embed.1} parent=0 // loop_body
    %s28 = ssub.s32 %s23, 1
    %s29 = ssub.s32 %s23, 2
    %s30 = sadd.s32 %s23, 1
    %s31 = ssub.s32 %s23, %s30
    %p32 = scmp.eq.s32.totalorder %s31, 0
    %s34 = sadd.s32 %s33, 1
    %s35 = scalar_select %p32, %s33, %s34
    %p38 = pneg %p32
    %p39 = scmp.eq.s32.totalorder %s23, 1
    %p40 = por %p38, %p39
    %p41 = scmp.ne.s32.totalorder %s33, %s36
    %p42 = scmp.eq.s32.totalorder %s23, 0
    %p43 = por %p41, %p42
    %p44 = scmp.ne.s32.totalorder %s33, %s36
    %p45 = scmp.eq.s32.totalorder %s28, 1
    %p46 = por %p44, %p45
    %p47 = scmp.ne.s32.totalorder %s36, %s37
    %p48 = scmp.eq.s32.totalorder %s28, 0
    %p49 = por %p47, %p48
    %p50 = scmp.ne.s32.totalorder %s36, %s37
    %p51 = scmp.eq.s32.totalorder %s29, 1
    %p52 = por %p50, %p51
    %p54 = scmp.ne.s32.totalorder %s37, %s53
    %p55 = scmp.eq.s32.totalorder %s29, 0
    %p56 = por %p54, %p55
    %s58 = sadd.s32 %s57, 1
    %p61 = scmp.eq.s32.totalorder %s23, 1
    %p62 = scmp.ne.s32.totalorder %s57, %s59
    %p63 = scmp.eq.s32.totalorder %s23, 0
    %p64 = por %p62, %p63
    %p65 = scmp.ne.s32.totalorder %s57, %s59
    %p66 = scmp.eq.s32.totalorder %s28, 1
    %p67 = por %p65, %p66
    %p68 = scmp.ne.s32.totalorder %s59, %s60
    %p69 = scmp.eq.s32.totalorder %s28, 0
    %p70 = por %p68, %p69
    %p71 = scmp.ne.s32.totalorder %s59, %s60
    %p72 = scmp.eq.s32.totalorder %s29, 1
    %p73 = por %p71, %p72
    %p75 = scmp.ne.s32.totalorder %s60, %s74
    %p76 = scmp.eq.s32.totalorder %s29, 0
    %p77 = por %p75, %p76
    %s79 = sadd.s32 %s78, 1
    %p82 = scmp.eq.s32.totalorder %s23, 1
    %p83 = scmp.ne.s32.totalorder %s78, %s80
    %p84 = scmp.eq.s32.totalorder %s23, 0
    %p85 = por %p83, %p84
    %p86 = scmp.ne.s32.totalorder %s78, %s80
    %p87 = scmp.eq.s32.totalorder %s28, 1
    %p88 = por %p86, %p87
    %p89 = scmp.ne.s32.totalorder %s80, %s81
    %p90 = scmp.eq.s32.totalorder %s28, 0
    %p91 = por %p89, %p90
    %p92 = scmp.ne.s32.totalorder %s80, %s81
    %p93 = scmp.eq.s32.totalorder %s29, 1
    %p94 = por %p92, %p93
    %p96 = scmp.ne.s32.totalorder %s81, %s95
    %p97 = scmp.eq.s32.totalorder %s29, 0
    %p98 = por %p96, %p97
    %s100 = sadd.s32 %s99, 1
    %p103 = scmp.eq.s32.totalorder %s23, 1
    %p104 = scmp.ne.s32.totalorder %s99, %s101
    %p105 = scmp.eq.s32.totalorder %s23, 0
    %p106 = por %p104, %p105
    %p107 = scmp.ne.s32.totalorder %s99, %s101
    %p108 = scmp.eq.s32.totalorder %s28, 1
    %p109 = por %p107, %p108
    %p110 = scmp.ne.s32.totalorder %s101, %s102
    %p111 = scmp.eq.s32.totalorder %s28, 0
    %p112 = por %p110, %p111
    %p113 = scmp.ne.s32.totalorder %s101, %s102
    %p114 = scmp.eq.s32.totalorder %s29, 1
    %p115 = por %p113, %p114
    %p117 = scmp.ne.s32.totalorder %s102, %s116
    %p118 = scmp.eq.s32.totalorder %s29, 0
    %p119 = por %p117, %p118
    %s121 = sadd.s32 %s120, 1
    %p124 = scmp.eq.s32.totalorder %s23, 1
    %p125 = scmp.ne.s32.totalorder %s120, %s122
    %p126 = scmp.eq.s32.totalorder %s23, 0
    %p127 = por %p125, %p126
    %p128 = scmp.ne.s32.totalorder %s120, %s122
    %p129 = scmp.eq.s32.totalorder %s28, 1
    %p130 = por %p128, %p129
    %p131 = scmp.ne.s32.totalorder %s122, %s123
    %p132 = scmp.eq.s32.totalorder %s28, 0
    %p133 = por %p131, %p132
    %p134 = scmp.ne.s32.totalorder %s122, %s123
    %p135 = scmp.eq.s32.totalorder %s29, 1
    %p136 = por %p134, %p135
    %p138 = scmp.ne.s32.totalorder %s123, %s137
    %p139 = scmp.eq.s32.totalorder %s29, 0
    %p140 = por %p138, %p139
    %s142 = sadd.s32 %s141, 1
    %p145 = scmp.eq.s32.totalorder %s23, 1
    %p146 = scmp.ne.s32.totalorder %s141, %s143
    %p147 = scmp.eq.s32.totalorder %s23, 0
    %p148 = por %p146, %p147
    %p149 = scmp.ne.s32.totalorder %s141, %s143
    %p150 = scmp.eq.s32.totalorder %s28, 1
    %p151 = por %p149, %p150
    %p152 = scmp.ne.s32.totalorder %s143, %s144
    %p153 = scmp.eq.s32.totalorder %s28, 0
    %p154 = por %p152, %p153
    %p155 = scmp.ne.s32.totalorder %s143, %s144
    %p156 = scmp.eq.s32.totalorder %s29, 1
    %p157 = por %p155, %p156
    %p159 = scmp.ne.s32.totalorder %s144, %s158
    %p160 = scmp.eq.s32.totalorder %s29, 0
    %p161 = por %p159, %p160
    %s163 = sadd.s32 %s162, 1
    %p166 = scmp.eq.s32.totalorder %s23, 1
    %p167 = scmp.ne.s32.totalorder %s162, %s164
    %p168 = scmp.eq.s32.totalorder %s23, 0
    %p169 = por %p167, %p168
    %p170 = scmp.ne.s32.totalorder %s162, %s164
    %p171 = scmp.eq.s32.totalorder %s28, 1
    %p172 = por %p170, %p171
    %p173 = scmp.ne.s32.totalorder %s164, %s165
    %p174 = scmp.eq.s32.totalorder %s28, 0
    %p175 = por %p173, %p174
    %p176 = scmp.ne.s32.totalorder %s164, %s165
    %p177 = scmp.eq.s32.totalorder %s29, 1
    %p178 = por %p176, %p177
    %p180 = scmp.ne.s32.totalorder %s165, %s179
    %p181 = scmp.eq.s32.totalorder %s29, 0
    %p182 = por %p180, %p181
    %s184 = sadd.s32 %s183, 1
    %p187 = scmp.eq.s32.totalorder %s23, 1
    %p188 = scmp.ne.s32.totalorder %s183, %s185
    %p189 = scmp.eq.s32.totalorder %s23, 0
    %p190 = por %p188, %p189
    %p191 = scmp.ne.s32.totalorder %s183, %s185
    %p192 = scmp.eq.s32.totalorder %s28, 1
    %p193 = por %p191, %p192
    %p194 = scmp.ne.s32.totalorder %s185, %s186
    %p195 = scmp.eq.s32.totalorder %s28, 0
    %p196 = por %p194, %p195
    %p197 = scmp.ne.s32.totalorder %s185, %s186
    %p198 = scmp.eq.s32.totalorder %s29, 1
    %p199 = por %p197, %p198
    %p201 = scmp.ne.s32.totalorder %s186, %s200
    %p202 = scmp.eq.s32.totalorder %s29, 0
    %p203 = por %p201, %p202
    %s205 = sadd.s32 %s204, 1
    %p208 = scmp.eq.s32.totalorder %s23, 1
    %p209 = scmp.ne.s32.totalorder %s204, %s206
    %p210 = scmp.eq.s32.totalorder %s23, 0
    %p211 = por %p209, %p210
    %p212 = scmp.ne.s32.totalorder %s204, %s206
    %p213 = scmp.eq.s32.totalorder %s28, 1
    %p214 = por %p212, %p213
    %p215 = scmp.ne.s32.totalorder %s206, %s207
    %p216 = scmp.eq.s32.totalorder %s28, 0
    %p217 = por %p215, %p216
    %p218 = scmp.ne.s32.totalorder %s206, %s207
    %p219 = scmp.eq.s32.totalorder %s29, 1
    %p220 = por %p218, %p219
    %p222 = scmp.ne.s32.totalorder %s207, %s221
    %p223 = scmp.eq.s32.totalorder %s29, 0
    %p224 = por %p222, %p223
    %s226 = sadd.s32 %s225, 1
    %p229 = scmp.eq.s32.totalorder %s23, 1
    %p230 = scmp.ne.s32.totalorder %s225, %s227
    %p231 = scmp.eq.s32.totalorder %s23, 0
    %p232 = por %p230, %p231
    %p233 = scmp.ne.s32.totalorder %s225, %s227
    %p234 = scmp.eq.s32.totalorder %s28, 1
    %p235 = por %p233, %p234
    %p236 = scmp.ne.s32.totalorder %s227, %s228
    %p237 = scmp.eq.s32.totalorder %s28, 0
    %p238 = por %p236, %p237
    %p239 = scmp.ne.s32.totalorder %s227, %s228
    %p240 = scmp.eq.s32.totalorder %s29, 1
    %p241 = por %p239, %p240
    %p243 = scmp.ne.s32.totalorder %s228, %s242
    %p244 = scmp.eq.s32.totalorder %s29, 0
    %p245 = por %p243, %p244
    %s247 = sadd.s32 %s246, 1
    %p250 = scmp.eq.s32.totalorder %s23, 1
    %p251 = scmp.ne.s32.totalorder %s246, %s248
    %p252 = scmp.eq.s32.totalorder %s23, 0
    %p253 = por %p251, %p252
    %p254 = scmp.ne.s32.totalorder %s246, %s248
    %p255 = scmp.eq.s32.totalorder %s28, 1
    %p256 = por %p254, %p255
    %p257 = scmp.ne.s32.totalorder %s248, %s249
    %p258 = scmp.eq.s32.totalorder %s28, 0
    %p259 = por %p257, %p258
    %p260 = scmp.ne.s32.totalorder %s248, %s249
    %p261 = scmp.eq.s32.totalorder %s29, 1
    %p262 = por %p260, %p261
    %p264 = scmp.ne.s32.totalorder %s249, %s263
    %p265 = scmp.eq.s32.totalorder %s29, 0
    %p266 = por %p264, %p265
    %s268 = sadd.s32 %s267, 1
    %p271 = scmp.eq.s32.totalorder %s23, 1
    %p272 = scmp.ne.s32.totalorder %s267, %s269
    %p273 = scmp.eq.s32.totalorder %s23, 0
    %p274 = por %p272, %p273
    %p275 = scmp.ne.s32.totalorder %s267, %s269
    %p276 = scmp.eq.s32.totalorder %s28, 1
    %p277 = por %p275, %p276
    %p278 = scmp.ne.s32.totalorder %s269, %s270
    %p279 = scmp.eq.s32.totalorder %s28, 0
    %p280 = por %p278, %p279
    %p281 = scmp.ne.s32.totalorder %s269, %s270
    %p282 = scmp.eq.s32.totalorder %s29, 1
    %p283 = por %p281, %p282
    %p285 = scmp.ne.s32.totalorder %s270, %s284
    %p286 = scmp.eq.s32.totalorder %s29, 0
    %p287 = por %p285, %p286
    %s289 = sadd.s32 %s288, 1
    %p292 = scmp.eq.s32.totalorder %s23, 1
    %p293 = scmp.ne.s32.totalorder %s288, %s290
    %p294 = scmp.eq.s32.totalorder %s23, 0
    %p295 = por %p293, %p294
    %p296 = scmp.ne.s32.totalorder %s288, %s290
    %p297 = scmp.eq.s32.totalorder %s28, 1
    %p298 = por %p296, %p297
    %p299 = scmp.ne.s32.totalorder %s290, %s291
    %p300 = scmp.eq.s32.totalorder %s28, 0
    %p301 = por %p299, %p300
    %p302 = scmp.ne.s32.totalorder %s290, %s291
    %p303 = scmp.eq.s32.totalorder %s29, 1
    %p304 = por %p302, %p303
    %p306 = scmp.ne.s32.totalorder %s291, %s305
    %p307 = scmp.eq.s32.totalorder %s29, 0
    %p308 = por %p306, %p307
    %s310 = sadd.s32 %s309, 1
    %p313 = scmp.eq.s32.totalorder %s23, 1
    %p314 = scmp.ne.s32.totalorder %s309, %s311
    %p315 = scmp.eq.s32.totalorder %s23, 0
    %p316 = por %p314, %p315
    %p317 = scmp.ne.s32.totalorder %s309, %s311
    %p318 = scmp.eq.s32.totalorder %s28, 1
    %p319 = por %p317, %p318
    %p320 = scmp.ne.s32.totalorder %s311, %s312
    %p321 = scmp.eq.s32.totalorder %s28, 0
    %p322 = por %p320, %p321
    %p323 = scmp.ne.s32.totalorder %s311, %s312
    %p324 = scmp.eq.s32.totalorder %s29, 1
    %p325 = por %p323, %p324
    %p327 = scmp.ne.s32.totalorder %s312, %s326
    %p328 = scmp.eq.s32.totalorder %s29, 0
    %p329 = por %p327, %p328
    %s331 = sadd.s32 %s330, 1
    %p334 = scmp.eq.s32.totalorder %s23, 1
    %p335 = scmp.ne.s32.totalorder %s330, %s332
    %p336 = scmp.eq.s32.totalorder %s23, 0
    %p337 = por %p335, %p336
    %p338 = scmp.ne.s32.totalorder %s330, %s332
    %p339 = scmp.eq.s32.totalorder %s28, 1
    %p340 = por %p338, %p339
    %p341 = scmp.ne.s32.totalorder %s332, %s333
    %p342 = scmp.eq.s32.totalorder %s28, 0
    %p343 = por %p341, %p342
    %p344 = scmp.ne.s32.totalorder %s332, %s333
    %p345 = scmp.eq.s32.totalorder %s29, 1
    %p346 = por %p344, %p345
    %p348 = scmp.ne.s32.totalorder %s333, %s347
    %p349 = scmp.eq.s32.totalorder %s29, 0
    %p350 = por %p348, %p349
    %s352 = sadd.s32 %s351, 1
    %p355 = scmp.eq.s32.totalorder %s23, 1
    %p356 = scmp.ne.s32.totalorder %s351, %s353
    %p357 = scmp.eq.s32.totalorder %s23, 0
    %p358 = por %p356, %p357
    %p359 = scmp.ne.s32.totalorder %s351, %s353
    %p360 = scmp.eq.s32.totalorder %s28, 1
    %p361 = por %p359, %p360
    %p362 = scmp.ne.s32.totalorder %s353, %s354
    %p363 = scmp.eq.s32.totalorder %s28, 0
    %p364 = por %p362, %p363
    %p365 = scmp.ne.s32.totalorder %s353, %s354
    %p366 = scmp.eq.s32.totalorder %s29, 1
    %p367 = por %p365, %p366
    %p369 = scmp.ne.s32.totalorder %s354, %s368
    %p370 = scmp.eq.s32.totalorder %s29, 0
    %p371 = por %p369, %p370
    %s373 = sadd.s32 %s372, 1
    %p376 = scmp.eq.s32.totalorder %s23, 1
    %p377 = scmp.ne.s32.totalorder %s372, %s374
    %p378 = scmp.eq.s32.totalorder %s23, 0
    %p379 = por %p377, %p378
    %p380 = scmp.ne.s32.totalorder %s372, %s374
    %p381 = scmp.eq.s32.totalorder %s28, 1
    %p382 = por %p380, %p381
    %p383 = scmp.ne.s32.totalorder %s374, %s375
    %p384 = scmp.eq.s32.totalorder %s28, 0
    %p385 = por %p383, %p384
    %p386 = scmp.ne.s32.totalorder %s374, %s375
    %p387 = scmp.eq.s32.totalorder %s29, 1
    %p388 = por %p386, %p387
    %p390 = scmp.ne.s32.totalorder %s375, %s389
    %p391 = scmp.eq.s32.totalorder %s29, 0
    %p392 = por %p390, %p391
    %s393 = ssub.s32 %s23, %s30
    %p394 = scmp.eq.s32.totalorder %s393, 0
    %s396 = sadd.s32 %s395, 1
    %s397 = scalar_select %p394, %s395, %s396
    %p400 = pneg %p394
    %p401 = scmp.eq.s32.totalorder %s23, 1
    %p402 = por %p400, %p401
    %p403 = scmp.ne.s32.totalorder %s395, %s398
    %p404 = scmp.eq.s32.totalorder %s23, 0
    %p405 = por %p403, %p404
    %p406 = scmp.ne.s32.totalorder %s395, %s398
    %p407 = scmp.eq.s32.totalorder %s28, 1
    %p408 = por %p406, %p407
    %p409 = scmp.ne.s32.totalorder %s398, %s399
    %p410 = scmp.eq.s32.totalorder %s28, 0
    %p411 = por %p409, %p410
    %p412 = scmp.ne.s32.totalorder %s398, %s399
    %p413 = scmp.eq.s32.totalorder %s29, 1
    %p414 = por %p412, %p413
    %p416 = scmp.ne.s32.totalorder %s399, %s415
    %p417 = scmp.eq.s32.totalorder %s29, 0
    %p418 = por %p416, %p417
    %p419 = scmp.le.s32.totalorder 1, %s23
    %p420 = scmp.lt.s32.totalorder %s23, 3
    %p421 = pnand %p419, %p420
    %p422 = pneg %p421
    // Predicated region
    $region9: #{esm2_embed.1} parent=5 // pred_check
      _
    $region10: #{esm2_embed.1} parent=5 // pred_check_branch
      %424 = sbr.rel (%p421) target = $region12
    $region11: #{esm2_embed.1} parent=5 // pred_region
      %s425 = ssub.s32 %s23, 1
      // Predicated region
      $region13: #{esm2_embed.1} parent=11 // pred_check
        %p426 = pneg %p70
      $region14: #{esm2_embed.1} parent=11 // pred_check_branch
        %428 = sbr.rel (%p426) target = $region16
      $region15: #{esm2_embed.1} parent=11 // pred_region
        _
      $region16: #{esm2_embed.1} parent=11 // pred_fallthru
        _
      // Predicated region
      $region17: #{esm2_embed.1} parent=11 // pred_check
        %p429 = pneg %p91
      $region18: #{esm2_embed.1} parent=11 // pred_check_branch
        %431 = sbr.rel (%p429) target = $region20
      $region19: #{esm2_embed.1} parent=11 // pred_region
        _
      $region20: #{esm2_embed.1} parent=11 // pred_fallthru
        _
      // Predicated region
      $region21: #{esm2_embed.1} parent=11 // pred_check
        %p432 = pneg %p112
      $region22: #{esm2_embed.1} parent=11 // pred_check_branch
        %434 = sbr.rel (%p432) target = $region24
      $region23: #{esm2_embed.1} parent=11 // pred_region
        _
      $region24: #{esm2_embed.1} parent=11 // pred_fallthru
        _
      // Predicated region
      $region25: #{esm2_embed.1} parent=11 // pred_check
        %p435 = pneg %p133
      $region26: #{esm2_embed.1} parent=11 // pred_check_branch
        %437 = sbr.rel (%p435) target = $region28
      $region27: #{esm2_embed.1} parent=11 // pred_region
        _
      $region28: #{esm2_embed.1} parent=11 // pred_fallthru
        _
      // Predicated region
      $region29: #{esm2_embed.1} parent=11 // pred_check
        %p438 = pneg %p154
      $region30: #{esm2_embed.1} parent=11 // pred_check_branch
        %440 = sbr.rel (%p438) target = $region32
      $region31: #{esm2_embed.1} parent=11 // pred_region
        _
      $region32: #{esm2_embed.1} parent=11 // pred_fallthru
        _
      // Predicated region
      $region33: #{esm2_embed.1} parent=11 // pred_check
        %p441 = pneg %p175
      $region34: #{esm2_embed.1} parent=11 // pred_check_branch
        %443 = sbr.rel (%p441) target = $region36
      $region35: #{esm2_embed.1} parent=11 // pred_region
        _
      $region36: #{esm2_embed.1} parent=11 // pred_fallthru
        _
      // Predicated region
      $region37: #{esm2_embed.1} parent=11 // pred_check
        %p444 = pneg %p196
      $region38: #{esm2_embed.1} parent=11 // pred_check_branch
        %446 = sbr.rel (%p444) target = $region40
      $region39: #{esm2_embed.1} parent=11 // pred_region
        _
      $region40: #{esm2_embed.1} parent=11 // pred_fallthru
        _
      // Predicated region
      $region41: #{esm2_embed.1} parent=11 // pred_check
        %p447 = pneg %p217
      $region42: #{esm2_embed.1} parent=11 // pred_check_branch
        %449 = sbr.rel (%p447) target = $region44
      $region43: #{esm2_embed.1} parent=11 // pred_region
        _
      $region44: #{esm2_embed.1} parent=11 // pred_fallthru
        _
      // Predicated region
      $region45: #{esm2_embed.1} parent=11 // pred_check
        %p450 = pneg %p238
      $region46: #{esm2_embed.1} parent=11 // pred_check_branch
        %452 = sbr.rel (%p450) target = $region48
      $region47: #{esm2_embed.1} parent=11 // pred_region
        _
      $region48: #{esm2_embed.1} parent=11 // pred_fallthru
        _
      // Predicated region
      $region49: #{esm2_embed.1} parent=11 // pred_check
        %p453 = pneg %p259
      $region50: #{esm2_embed.1} parent=11 // pred_check_branch
        %455 = sbr.rel (%p453) target = $region52
      $region51: #{esm2_embed.1} parent=11 // pred_region
        _
      $region52: #{esm2_embed.1} parent=11 // pred_fallthru
        _
      // Predicated region
      $region53: #{esm2_embed.1} parent=11 // pred_check
        %p456 = pneg %p280
      $region54: #{esm2_embed.1} parent=11 // pred_check_branch
        %458 = sbr.rel (%p456) target = $region56
      $region55: #{esm2_embed.1} parent=11 // pred_region
        _
      $region56: #{esm2_embed.1} parent=11 // pred_fallthru
        _
      // Predicated region
      $region57: #{esm2_embed.1} parent=11 // pred_check
        %p459 = pneg %p301
      $region58: #{esm2_embed.1} parent=11 // pred_check_branch
        %461 = sbr.rel (%p459) target = $region60
      $region59: #{esm2_embed.1} parent=11 // pred_region
        _
      $region60: #{esm2_embed.1} parent=11 // pred_fallthru
        _
      // Predicated region
      $region61: #{esm2_embed.1} parent=11 // pred_check
        %p462 = pneg %p322
      $region62: #{esm2_embed.1} parent=11 // pred_check_branch
        %464 = sbr.rel (%p462) target = $region64
      $region63: #{esm2_embed.1} parent=11 // pred_region
        _
      $region64: #{esm2_embed.1} parent=11 // pred_fallthru
        _
      // Predicated region
      $region65: #{esm2_embed.1} parent=11 // pred_check
        %p465 = pneg %p343
      $region66: #{esm2_embed.1} parent=11 // pred_check_branch
        %467 = sbr.rel (%p465) target = $region68
      $region67: #{esm2_embed.1} parent=11 // pred_region
        _
      $region68: #{esm2_embed.1} parent=11 // pred_fallthru
        _
      // Predicated region
      $region69: #{esm2_embed.1} parent=11 // pred_check
        %p468 = pneg %p364
      $region70: #{esm2_embed.1} parent=11 // pred_check_branch
        %470 = sbr.rel (%p468) target = $region72
      $region71: #{esm2_embed.1} parent=11 // pred_region
        _
      $region72: #{esm2_embed.1} parent=11 // pred_fallthru
        _
      // Predicated region
      $region73: #{esm2_embed.1} parent=11 // pred_check
        %p471 = pneg %p385
      $region74: #{esm2_embed.1} parent=11 // pred_check_branch
        %473 = sbr.rel (%p471) target = $region76
      $region75: #{esm2_embed.1} parent=11 // pred_region
        _
      $region76: #{esm2_embed.1} parent=11 // pred_fallthru
        _
    $region12: #{esm2_embed.1} parent=5 // pred_fallthru
      _
    %p474 = scmp.lt.s32.totalorder %s23, 2
    // Predicated region
    $region77: #{esm2_embed.1} parent=5 // pred_check
      %p475 = pneg %p474
    $region78: #{esm2_embed.1} parent=5 // pred_check_branch
      %477 = sbr.rel (%p475) target = $region80
    $region79: #{esm2_embed.1} parent=5 // pred_region
      // Predicated region
      $region81: #{esm2_embed.1} parent=79 // pred_check
        %p478 = pneg %p43
      $region82: #{esm2_embed.1} parent=79 // pred_check_branch
        %480 = sbr.rel (%p478) target = $region84
      $region83: #{esm2_embed.1} parent=79 // pred_region
        %p481 = scmp.lt.s32.totalorder %s23, 1
        %s482 = scalar_select %p481, %s23, 1
        %s483 = smul.addr %s482, 2
        %s484 = smul.addr %s483, 4
        %s485 = scalar_lea.vmem %s0, %s484
      $region84: #{esm2_embed.1} parent=79 // pred_fallthru
        _
    $region80: #{esm2_embed.1} parent=5 // pred_fallthru
      _
    %p486 = scmp.le.s32.totalorder 1, %s23
    %p487 = scmp.lt.s32.totalorder %s23, 3
    %p488 = pnand %p486, %p487
    %p489 = pneg %p488
    // Predicated region
    $region85: #{esm2_embed.1} parent=5 // pred_check
      _
    $region86: #{esm2_embed.1} parent=5 // pred_check_branch
      %491 = sbr.rel (%p488) target = $region88
    $region87: #{esm2_embed.1} parent=5 // pred_region
      %s492 = ssub.s32 %s23, 1
      %p493 = scmp.lt.s32.totalorder %s28, 1
      %s494 = scalar_select %p493, %s28, 1
      %s495 = smul.addr %s494, 2
      %s496 = smul.addr %s495, 4
      %s497 = scalar_lea.vmem %s0, %s496
      %p498 = pneg %p49
      %p499 = pneg %p46
      %p500 = pneg %p70
      %p501 = pneg %p67
      %p502 = pneg %p91
      %p503 = pneg %p88
      %p504 = pneg %p112
      %p505 = pneg %p109
      %p506 = pneg %p133
      %p507 = pneg %p130
      %p508 = pneg %p154
      %p509 = pneg %p151
      %p510 = pneg %p175
      %p511 = pneg %p172
      %p512 = pneg %p196
      %p513 = pneg %p193
      %p514 = pneg %p217
      %p515 = pneg %p214
      %p516 = pneg %p238
      %p517 = pneg %p235
      %p518 = pneg %p259
      %p519 = pneg %p256
      %p520 = pneg %p280
      %p521 = pneg %p277
      %p522 = pneg %p301
      %p523 = pneg %p298
      %p524 = pneg %p322
      %p525 = pneg %p319
      %p526 = pneg %p343
      %p527 = pneg %p340
      %p528 = pneg %p364
      %p529 = pneg %p361
      %p530 = pneg %p385
      %p531 = pneg %p382
      %p532 = pneg %p411
      %p533 = pneg %p408
      %p534 = scmp.lt.s32.totalorder %s28, 1
      %s535 = scalar_select %p534, %s28, 1
      %s536 = smul.addr %s535, 2
      %s537 = smul.addr %s536, 8
      %s538 = scalar_lea.vmem %s17, %s537
      %p539 = scmp.lt.s32.totalorder %s28, 1
      %s540 = scalar_select %p539, %s28, 1
      %s541 = smul.addr %s540, 2
      %s542 = smul.addr %s541, 4
      %s543 = scalar_lea.vmem %s0, %s542
      %p544 = scmp.lt.s32.totalorder %s28, 1
      %s545 = scalar_select %p544, %s28, 1
      %s546 = smul.addr %s545, 2
      %s547 = smul.addr %s546, 8
      %s548 = scalar_lea.vmem %s17, %s547
      %v550 = vld [vmem:[%s543] sm:$0xf]
      %v551 = vld [vmem:[%s543 + $0x4] sm:$0xf]
      %v552 = vunpack.c.l.bf16 %v550
      %v553 = vunpack.c.l.bf16 %v551
      %v554 = vld [vmem:[%s1] sm:$0xff]
      %v555 = vld [vmem:[%s1 + $0x8] sm:$0xff]
      %v556 = vld [vmem:[%s2] sm:$0xff]
      %v557 = vld [vmem:[%s2 + $0x8] sm:$0xff]
      %v558 = vmul.f32 %v554, 0.35355338
      %v559 = vmul.f32 %v555, 0.35355338
      %v560 = vmul.f32 %v556, 0.35355338
      %v561 = vmul.f32 %v557, 0.35355338
      %v562 = vlaneseq
      %v563 = vand.u32 %v562, 127
      %vm564 = vcmp.lt.s32.totalorder %v563, 10
      %v565 = vsel %vm564, 0.0, -1e+30
      %v566 = vld [vmem:[%s3] sm:$0x1]
      %v567 = vunpack.c.l.bf16 %v566
      %v568 = vld [vmem:[%s4] sm:$0x1]
      %v569 = vunpack.c.l.bf16 %v568
      %vm570 = vcmask 261120
      %v571 = vsel %vm570, %v552, 0.0
      %572 = vadd.xlane.f32.xlu0 %v571
      %v573 = vpop.xlane.xlu0 %572
      %v574 = vsel %vm570, %v553, 0.0
      %575 = vadd.xlane.f32.xlu0 %v574
      %v576 = vpop.xlane.xlu0 %575
      %v577 = vrcp.pop 32.0
      %v578 = vmul.f32 32.0, %v577
      %v579 = vsub.f32 1.0, %v578
      %v580 = vmul.f32 %v577, %v579
      %v581 = vadd.f32 %v577, %v580
      %vm582 = vweird.f32 %v577
      %v583 = vsel %vm582, %v577, %v581
      %v584 = vmul.f32 %v573, %v583
      %v585 = vmul.f32 %v576, %v583
      %v586 = vsub.f32 %v552, %v584
      %v587 = vsub.f32 %v553, %v585
      %v588 = vmul.f32 %v586, %v586
      %v589 = vmul.f32 %v587, %v587
      %v590 = vsel %vm570, %v588, 0.0
      %591 = vadd.xlane.f32.xlu0 %v590
      %v592 = vpop.xlane.xlu0 %591
      %v593 = vsel %vm570, %v589, 0.0
      %594 = vadd.xlane.f32.xlu0 %v593
      %v595 = vpop.xlane.xlu0 %594
      %v596 = vmul.f32 %v592, %v583
      %v597 = vmul.f32 %v595, %v583
      %v598 = vadd.f32 %v596, 1e-05
      %v599 = vadd.f32 %v597, 1e-05
      %v600 = vrsqrt.pop %v598
      %v601 = vmul.f32 %v600, %v598
      %v602 = vmul.f32 %v601, %v600
      %v603 = vmul.f32 0.5, %v602
      %v604 = vsub.f32 1.5, %v603
      %v605 = vmul.f32 %v600, %v604
      %vm606 = vweird.f32 %v598
      %vm607 = vweird.f32 %v600
      %vm608 = vmor %vm606, %vm607
      %v609 = vsel %vm608, %v600, %v605
      %v610 = vrsqrt.pop %v599
      %v611 = vmul.f32 %v610, %v599
      %v612 = vmul.f32 %v611, %v610
      %v613 = vmul.f32 0.5, %v612
      %v614 = vsub.f32 1.5, %v613
      %v615 = vmul.f32 %v610, %v614
      %vm616 = vweird.f32 %v599
      %vm617 = vweird.f32 %v610
      %vm618 = vmor %vm616, %vm617
      %v619 = vsel %vm618, %v610, %v615
      %v620 = vmul.f32 %v586, %v609
      %v621 = vmul.f32 %v587, %v619
      %v622 = vperm.slane %v567, 0
      %v623 = vmul.f32 %v620, %v622
      %v624 = vmul.f32 %v621, %v622
      %v625 = vperm.slane %v569, 0
      %v626 = vadd.f32 %v623, %v625
      %v627 = vadd.f32 %v624, %v625
      %v628 = vpack.c.bf16 %v627, %v626
      %v629 = vld [vmem:[%s5] sm:$0xf]
      %v630 = vld [vmem:[%s5 + $0x4] sm:$0xf]
      %v631 = vld [vmem:[%s5 + $0x8] sm:$0xf]
      %v632 = vld [vmem:[%s5 + $0xc] sm:$0xf]
      %v633 = vld [vmem:[%s6] sm:$0x1]
      %v634 = vunpack.c.l.bf16 %v633
      %v635 = vperm.slane %v634, 0
      %v640 = vunpack.c.l.b16 %v629
      %v641 = vunpack.c.l.b16 %v630
      %v642 = vunpack.c.l.b16 %v631
      %v643 = vunpack.c.l.b16 %v632
      %v644 = vpack.c.b16 %v641, %v640
      %v645 = vpack.c.b16 %v643, %v642
      %v649 = vsel %vm570, %v628, 0
      %651 = vmatpush.bf16.msra.mxu0 0
      %652 = vmatpush.bf16.msra.mxu0 0
      %653 = vmatpush.bf16.msra.mxu0 0
      %654 = vmatpush.bf16.msra.mxu0 0
      %655 = vmatpush.bf16.msra.mxu0 0
      %656 = vmatpush.bf16.msra.mxu0 0
      %657 = vmatpush.bf16.msra.mxu0 %v645
      %658 = vmatpush.bf16.msra.mxu0 %v644
      %659 = vmatmul.bf16.gmra.mxu0 %v649
      %v660 = vpop.f32.mrf.mxu0
      %v661 = vadd.f32 %v635, %v660
      %v662 = vpop.f32.mrf.mxu0
      %v663 = vadd.f32 %v635, %v662
      %664 = vdwg.mxu0
      %v665 = vmul.f32 %v661, %v558
      %v666 = vmul.f32 %v663, %v559
      %669 = vrot.lane.b32.xlu0 %v560, 16
      %v670 = vpop.permute.xlu0 %669
      %671 = vrot.lane.b32.xlu0 %v561, 16
      %v672 = vpop.permute.xlu0 %671
      %v675 = vmul.f32 %v661, %v670
      %v676 = vmul.f32 %v663, %v672
      %679 = vrot.lane.b32.xlu0 %v675, 112
      %v680 = vpop.permute.xlu0 %679
      %681 = vrot.lane.b32.xlu0 %v676, 112
      %v682 = vpop.permute.xlu0 %681
      %v685 = vsub.f32 %v665, %v680
      %v686 = vsub.f32 %v666, %v682
      %v687 = vpack.c.bf16 %v685, %v685
      %v688 = vpack.c.bf16 %v686, %v686
      %691 = vrot.lane.b32.xlu0 %v558, 16
      %v692 = vpop.permute.xlu0 %691
      %693 = vrot.lane.b32.xlu0 %v559, 16
      %v694 = vpop.permute.xlu0 %693
      %v697 = vmul.f32 %v661, %v692
      %v698 = vmul.f32 %v663, %v694
      %v699 = vmul.f32 %v661, %v560
      %v700 = vmul.f32 %v663, %v561
      %703 = vrot.lane.b32.xlu0 %v699, 16
      %v704 = vpop.permute.xlu0 %703
      %705 = vrot.lane.b32.xlu0 %v700, 16
      %v706 = vpop.permute.xlu0 %705
      %v709 = vadd.f32 %v697, %v704
      %v710 = vadd.f32 %v698, %v706
      %v711 = vpack.c.bf16 %v709, %v709
      %v712 = vpack.c.bf16 %v710, %v710
      %715 = vrot.lane.b32.xlu0 %v554, 32
      %v716 = vpop.permute.xlu0 %715
      %717 = vrot.lane.b32.xlu0 %v555, 32
      %v718 = vpop.permute.xlu0 %717
      %v721 = vmul.f32 %v661, %v716
      %v722 = vmul.f32 %v663, %v718
      %725 = vrot.lane.b32.xlu0 %v556, 48
      %v726 = vpop.permute.xlu0 %725
      %727 = vrot.lane.b32.xlu0 %v557, 48
      %v728 = vpop.permute.xlu0 %727
      %v731 = vmul.f32 %v661, %v726
      %v732 = vmul.f32 %v663, %v728
      %735 = vrot.lane.b32.xlu0 %v731, 112
      %v736 = vpop.permute.xlu0 %735
      %737 = vrot.lane.b32.xlu0 %v732, 112
      %v738 = vpop.permute.xlu0 %737
      %v741 = vsub.f32 %v721, %v736
      %v742 = vsub.f32 %v722, %v738
      %v743 = vpack.c.bf16 %v741, %v741
      %v744 = vpack.c.bf16 %v742, %v742
      %745 = vrot.lane.b32.xlu0 %v554, 48
      %v746 = vpop.permute.xlu0 %745
      %747 = vrot.lane.b32.xlu0 %v555, 48
      %v748 = vpop.permute.xlu0 %747
      %v751 = vmul.f32 %v661, %v746
      %v752 = vmul.f32 %v663, %v748
      %753 = vrot.lane.b32.xlu0 %v556, 32
      %v754 = vpop.permute.xlu0 %753
      %755 = vrot.lane.b32.xlu0 %v557, 32
      %v756 = vpop.permute.xlu0 %755
      %v759 = vmul.f32 %v661, %v754
      %v760 = vmul.f32 %v663, %v756
      %763 = vrot.lane.b32.xlu0 %v759, 16
      %v764 = vpop.permute.xlu0 %763
      %765 = vrot.lane.b32.xlu0 %v760, 16
      %v766 = vpop.permute.xlu0 %765
      %v769 = vadd.f32 %v751, %v764
      %v770 = vadd.f32 %v752, %v766
      %v771 = vpack.c.bf16 %v769, %v769
      %v772 = vpack.c.bf16 %v770, %v770
      %v773 = vpack.c.bf16 %v661, %v661
      %v774 = vpack.c.bf16 %v663, %v663
      %v777 = vunpack.c.l.b16 %v711
      %v778 = vunpack.c.l.b16 %v712
      %v779 = vpack.c.b16 %v778, %v777
      %780 = vrot.lane.b32.xlu0 %v779, 112
      %v781 = vpop.permute.xlu0 %780
      %v784 = vunpack.c.l.b16 %v771
      %v785 = vunpack.c.l.b16 %v772
      %v786 = vpack.c.b16 %v785, %v784
      %787 = vrot.lane.b32.xlu0 %v786, 80
      %v788 = vpop.permute.xlu0 %787
      %vm789 = vcmask 31744
      %v791 = vsel %vm789, %v781, 0
      %v794 = vsel %vm789, %v788, 0
      %796 = vmatpush.bf16.xpose.msra.mxu0 0
      %797 = vmatpush.bf16.xpose.msra.mxu0 0
      %798 = vmatpush.bf16.xpose.msra.mxu0 0
      %799 = vmatpush.bf16.xpose.msra.mxu0 0
      %800 = vmatpush.bf16.xpose.msra.mxu0 0
      %801 = vmatpush.bf16.xpose.msra.mxu0 0
      %802 = vmatpush.bf16.xpose.msra.mxu0 0
      %803 = vmatpush.bf16.xpose.msra.mxu0 %v794
      %804 = vmatmul.bf16.gmra.mxu0 %v791
      %v805 = vpop.f32.mrf.mxu0
      %v806 = vadd.f32 0.0, %v805
      %v807 = vpop.f32.mrf.mxu0
      %v808 = vadd.f32 0.0, %v807
      %809 = vdwg.mxu0
      %v812 = vunpack.c.l.b16 %v687
      %v813 = vunpack.c.l.b16 %v688
      %v814 = vpack.c.b16 %v813, %v812
      %v817 = vunpack.c.l.b16 %v743
      %v818 = vunpack.c.l.b16 %v744
      %v819 = vpack.c.b16 %v818, %v817
      %820 = vrot.lane.b32.xlu0 %v819, 96
      %v821 = vpop.permute.xlu0 %820
      %v823 = vsel %vm789, %v814, 0
      %v826 = vsel %vm789, %v821, 0
      %828 = vmatpush.bf16.xpose.msra.mxu0 0
      %829 = vmatpush.bf16.xpose.msra.mxu0 0
      %830 = vmatpush.bf16.xpose.msra.mxu0 0
      %831 = vmatpush.bf16.xpose.msra.mxu0 0
      %832 = vmatpush.bf16.xpose.msra.mxu0 0
      %833 = vmatpush.bf16.xpose.msra.mxu0 0
      %834 = vmatpush.bf16.xpose.msra.mxu0 0
      %835 = vmatpush.bf16.xpose.msra.mxu0 %v826
      %836 = vmatmul.bf16.gmra.mxu0 %v823
      %v837 = vpop.f32.mrf.mxu0
      %v838 = vadd.f32 %v806, %v837
      %v839 = vpop.f32.mrf.mxu0
      %v840 = vadd.f32 %v808, %v839
      %841 = vdwg.mxu0
      %v842 = vadd.f32 %v838, %v565
      %v843 = vadd.f32 %v840, %v565
      %vm844 = vcmask 130048
      %v845 = vsel %vm844, %v842, -inf
      %846 = vmax.xlane.f32.xlu0 %v845
      %v847 = vpop.xlane.xlu0 %846
      %v848 = vsel %vm844, %v843, -inf
      %849 = vmax.xlane.f32.xlu0 %v848
      %v850 = vpop.xlane.xlu0 %849
      %v851 = vsub.f32 %v842, %v847
      %v852 = vsub.f32 %v843, %v850
      %v853 = vmul.f32 %v851, 1.442695
      %v854 = vpow.pop %v853
      %v855 = vmul.f32 %v852, 1.442695
      %v856 = vpow.pop %v855
      %v857 = vsel %vm844, %v854, 0.0
      %858 = vadd.xlane.f32.xlu0 %v857
      %v859 = vpop.xlane.xlu0 %858
      %v860 = vsel %vm844, %v856, 0.0
      %861 = vadd.xlane.f32.xlu0 %v860
      %v862 = vpop.xlane.xlu0 %861
      %v863 = vrcp.pop %v859
      %v864 = vrcp.pop %v862
      %v865 = vmul.f32 %v854, %v863
      %v866 = vmul.f32 %v856, %v864
      %v867 = vpack.c.bf16 %v865, %v865
      %v868 = vpack.c.bf16 %v866, %v866
      %v871 = vunpack.c.l.b16 %v867
      %v872 = vunpack.c.l.b16 %v868
      %v873 = vpack.c.b16 %v872, %v871
      %v876 = vunpack.c.l.b16 %v773
      %v877 = vunpack.c.l.b16 %v774
      %v878 = vpack.c.b16 %v877, %v876
      %879 = vrot.lane.b32.xlu0 %v878, 64
      %v880 = vpop.permute.xlu0 %879
      %v883 = vsel %vm844, %v873, 0
      %885 = vmatpush.bf16.msra.mxu0 0
      %886 = vmatpush.bf16.msra.mxu0 0
      %887 = vmatpush.bf16.msra.mxu0 0
      %888 = vmatpush.bf16.msra.mxu0 0
      %889 = vmatpush.bf16.msra.mxu0 0
      %890 = vmatpush.bf16.msra.mxu0 0
      %891 = vmatpush.bf16.msra.mxu0 0
      %892 = vmatpush.bf16.msra.mxu0 %v880
      %893 = vmatmul.bf16.gmra.mxu0 %v883
      %v894 = vpop.f32.mrf.mxu0
      %v895 = vadd.f32 0.0, %v894
      %v896 = vpop.f32.mrf.mxu0
      %v897 = vadd.f32 0.0, %v896
      %898 = vdwg.mxu0
      %899 = vrot.lane.b32.xlu0 %v779, 108
      %v900 = vpop.permute.xlu0 %899
      %901 = vrot.lane.b32.xlu0 %v786, 76
      %v902 = vpop.permute.xlu0 %901
      %v904 = vsel %vm789, %v900, 0
      %v907 = vsel %vm789, %v902, 0
      %909 = vmatpush.bf16.xpose.msra.mxu0 0
      %910 = vmatpush.bf16.xpose.msra.mxu0 0
      %911 = vmatpush.bf16.xpose.msra.mxu0 0
      %912 = vmatpush.bf16.xpose.msra.mxu0 0
      %913 = vmatpush.bf16.xpose.msra.mxu0 0
      %914 = vmatpush.bf16.xpose.msra.mxu0 0
      %915 = vmatpush.bf16.xpose.msra.mxu0 0
      %916 = vmatpush.bf16.xpose.msra.mxu0 %v907
      %917 = vmatmul.bf16.gmra.mxu0 %v904
      %v918 = vpop.f32.mrf.mxu0
      %v919 = vadd.f32 0.0, %v918
      %v920 = vpop.f32.mrf.mxu0
      %v921 = vadd.f32 0.0, %v920
      %922 = vdwg.mxu0
      %923 = vrot.lane.b32.xlu0 %v814, 124
      %v924 = vpop.permute.xlu0 %923
      %925 = vrot.lane.b32.xlu0 %v819, 92
      %v926 = vpop.permute.xlu0 %925
      %v928 = vsel %vm789, %v924, 0
      %v931 = vsel %vm789, %v926, 0
      %933 = vmatpush.bf16.xpose.msra.mxu0 0
      %934 = vmatpush.bf16.xpose.msra.mxu0 0
      %935 = vmatpush.bf16.xpose.msra.mxu0 0
      %936 = vmatpush.bf16.xpose.msra.mxu0 0
      %937 = vmatpush.bf16.xpose.msra.mxu0 0
      %938 = vmatpush.bf16.xpose.msra.mxu0 0
      %939 = vmatpush.bf16.xpose.msra.mxu0 0
      %940 = vmatpush.bf16.xpose.msra.mxu0 %v931
      %941 = vmatmul.bf16.gmra.mxu0 %v928
      %v942 = vpop.f32.mrf.mxu0
      %v943 = vadd.f32 %v919, %v942
      %v944 = vpop.f32.mrf.mxu0
      %v945 = vadd.f32 %v921, %v944
      %946 = vdwg.mxu0
      %v947 = vadd.f32 %v943, %v565
      %v948 = vadd.f32 %v945, %v565
      %v949 = vsel %vm844, %v947, -inf
      %950 = vmax.xlane.f32.xlu0 %v949
      %v951 = vpop.xlane.xlu0 %950
      %v952 = vsel %vm844, %v948, -inf
      %953 = vmax.xlane.f32.xlu0 %v952
      %v954 = vpop.xlane.xlu0 %953
      %v955 = vsub.f32 %v947, %v951
      %v956 = vsub.f32 %v948, %v954
      %v957 = vmul.f32 %v955, 1.442695
      %v958 = vpow.pop %v957
      %v959 = vmul.f32 %v956, 1.442695
      %v960 = vpow.pop %v959
      %v961 = vsel %vm844, %v958, 0.0
      %962 = vadd.xlane.f32.xlu0 %v961
      %v963 = vpop.xlane.xlu0 %962
      %v964 = vsel %vm844, %v960, 0.0
      %965 = vadd.xlane.f32.xlu0 %v964
      %v966 = vpop.xlane.xlu0 %965
      %v967 = vrcp.pop %v963
      %v968 = vrcp.pop %v966
      %v969 = vmul.f32 %v958, %v967
      %v970 = vmul.f32 %v960, %v968
      %v971 = vpack.c.bf16 %v969, %v969
      %v972 = vpack.c.bf16 %v970, %v970
      %v975 = vunpack.c.l.b16 %v971
      %v976 = vunpack.c.l.b16 %v972
      %v977 = vpack.c.b16 %v976, %v975
      %978 = vrot.lane.b32.xlu0 %v878, 56
      %v979 = vpop.permute.xlu0 %978
      %v982 = vsel %vm844, %v977, 0
      %984 = vmatpush.bf16.msra.mxu0 0
      %985 = vmatpush.bf16.msra.mxu0 0
      %986 = vmatpush.bf16.msra.mxu0 0
      %987 = vmatpush.bf16.msra.mxu0 0
      %988 = vmatpush.bf16.msra.mxu0 0
      %989 = vmatpush.bf16.msra.mxu0 0
      %990 = vmatpush.bf16.msra.mxu0 0
      %991 = vmatpush.bf16.msra.mxu0 %v979
      %992 = vmatmul.bf16.gmra.mxu0 %v982
      %v993 = vpop.f32.mrf.mxu0
      %v994 = vadd.f32 0.0, %v993
      %v995 = vpop.f32.mrf.mxu0
      %v996 = vadd.f32 0.0, %v995
      %997 = vdwg.mxu0
      %998 = vrot.lane.b32.xlu0 %v779, 104
      %v999 = vpop.permute.xlu0 %998
      %1000 = vrot.lane.b32.xlu0 %v786, 72
      %v1001 = vpop.permute.xlu0 %1000
      %v1003 = vsel %vm789, %v999, 0
      %v1006 = vsel %vm789, %v1001, 0
      %1008 = vmatpush.bf16.xpose.msra.mxu0 0
      %1009 = vmatpush.bf16.xpose.msra.mxu0 0
      %1010 = vmatpush.bf16.xpose.msra.mxu0 0
      %1011 = vmatpush.bf16.xpose.msra.mxu0 0
      %1012 = vmatpush.bf16.xpose.msra.mxu0 0
      %1013 = vmatpush.bf16.xpose.msra.mxu0 0
      %1014 = vmatpush.bf16.xpose.msra.mxu0 0
      %1015 = vmatpush.bf16.xpose.msra.mxu0 %v1006
      %1016 = vmatmul.bf16.gmra.mxu0 %v1003
      %v1017 = vpop.f32.mrf.mxu0
      %v1018 = vadd.f32 0.0, %v1017
      %v1019 = vpop.f32.mrf.mxu0
      %v1020 = vadd.f32 0.0, %v1019
      %1021 = vdwg.mxu0
      %1022 = vrot.lane.b32.xlu0 %v814, 120
      %v1023 = vpop.permute.xlu0 %1022
      %1024 = vrot.lane.b32.xlu0 %v819, 88
      %v1025 = vpop.permute.xlu0 %1024
      %v1027 = vsel %vm789, %v1023, 0
      %v1030 = vsel %vm789, %v1025, 0
      %1032 = vmatpush.bf16.xpose.msra.mxu0 0
      %1033 = vmatpush.bf16.xpose.msra.mxu0 0
      %1034 = vmatpush.bf16.xpose.msra.mxu0 0
      %1035 = vmatpush.bf16.xpose.msra.mxu0 0
      %1036 = vmatpush.bf16.xpose.msra.mxu0 0
      %1037 = vmatpush.bf16.xpose.msra.mxu0 0
      %1038 = vmatpush.bf16.xpose.msra.mxu0 0
      %1039 = vmatpush.bf16.xpose.msra.mxu0 %v1030
      %1040 = vmatmul.bf16.gmra.mxu0 %v1027
      %v1041 = vpop.f32.mrf.mxu0
      %v1042 = vadd.f32 %v1018, %v1041
      %v1043 = vpop.f32.mrf.mxu0
      %v1044 = vadd.f32 %v1020, %v1043
      %1045 = vdwg.mxu0
      %v1046 = vadd.f32 %v1042, %v565
      %v1047 = vadd.f32 %v1044, %v565
      %v1048 = vsel %vm844, %v1046, -inf
      %1049 = vmax.xlane.f32.xlu0 %v1048
      %v1050 = vpop.xlane.xlu0 %1049
      %v1051 = vsel %vm844, %v1047, -inf
      %1052 = vmax.xlane.f32.xlu0 %v1051
      %v1053 = vpop.xlane.xlu0 %1052
      %v1054 = vsub.f32 %v1046, %v1050
      %v1055 = vsub.f32 %v1047, %v1053
      %v1056 = vmul.f32 %v1054, 1.442695
      %v1057 = vpow.pop %v1056
      %v1058 = vmul.f32 %v1055, 1.442695
      %v1059 = vpow.pop %v1058
      %v1060 = vsel %vm844, %v1057, 0.0
      %1061 = vadd.xlane.f32.xlu0 %v1060
      %v1062 = vpop.xlane.xlu0 %1061
      %v1063 = vsel %vm844, %v1059, 0.0
      %1064 = vadd.xlane.f32.xlu0 %v1063
      %v1065 = vpop.xlane.xlu0 %1064
      %v1066 = vrcp.pop %v1062
      %v1067 = vrcp.pop %v1065
      %v1068 = vmul.f32 %v1057, %v1066
      %v1069 = vmul.f32 %v1059, %v1067
      %v1070 = vpack.c.bf16 %v1068, %v1068
      %v1071 = vpack.c.bf16 %v1069, %v1069
      %v1074 = vunpack.c.l.b16 %v1070
      %v1075 = vunpack.c.l.b16 %v1071
      %v1076 = vpack.c.b16 %v1075, %v1074
      %1077 = vrot.lane.b32.xlu0 %v878, 48
      %v1078 = vpop.permute.xlu0 %1077
      %v1081 = vsel %vm844, %v1076, 0
      %1083 = vmatpush.bf16.msra.mxu0 0
      %1084 = vmatpush.bf16.msra.mxu0 0
      %1085 = vmatpush.bf16.msra.mxu0 0
      %1086 = vmatpush.bf16.msra.mxu0 0
      %1087 = vmatpush.bf16.msra.mxu0 0
      %1088 = vmatpush.bf16.msra.mxu0 0
      %1089 = vmatpush.bf16.msra.mxu0 0
      %1090 = vmatpush.bf16.msra.mxu0 %v1078
      %1091 = vmatmul.bf16.gmra.mxu0 %v1081
      %v1092 = vpop.f32.mrf.mxu0
      %v1093 = vadd.f32 0.0, %v1092
      %v1094 = vpop.f32.mrf.mxu0
      %v1095 = vadd.f32 0.0, %v1094
      %1096 = vdwg.mxu0
      %1097 = vrot.lane.b32.xlu0 %v779, 100
      %v1098 = vpop.permute.xlu0 %1097
      %1099 = vrot.lane.b32.xlu0 %v786, 68
      %v1100 = vpop.permute.xlu0 %1099
      %v1102 = vsel %vm789, %v1098, 0
      %v1105 = vsel %vm789, %v1100, 0
      %1107 = vmatpush.bf16.xpose.msra.mxu0 0
      %1108 = vmatpush.bf16.xpose.msra.mxu0 0
      %1109 = vmatpush.bf16.xpose.msra.mxu0 0
      %1110 = vmatpush.bf16.xpose.msra.mxu0 0
      %1111 = vmatpush.bf16.xpose.msra.mxu0 0
      %1112 = vmatpush.bf16.xpose.msra.mxu0 0
      %1113 = vmatpush.bf16.xpose.msra.mxu0 0
      %1114 = vmatpush.bf16.xpose.msra.mxu0 %v1105
      %1115 = vmatmul.bf16.gmra.mxu0 %v1102
      %v1116 = vpop.f32.mrf.mxu0
      %v1117 = vadd.f32 0.0, %v1116
      %v1118 = vpop.f32.mrf.mxu0
      %v1119 = vadd.f32 0.0, %v1118
      %1120 = vdwg.mxu0
      %1121 = vrot.lane.b32.xlu0 %v814, 116
      %v1122 = vpop.permute.xlu0 %1121
      %1123 = vrot.lane.b32.xlu0 %v819, 84
      %v1124 = vpop.permute.xlu0 %1123
      %v1126 = vsel %vm789, %v1122, 0
      %v1129 = vsel %vm789, %v1124, 0
      %1131 = vmatpush.bf16.xpose.msra.mxu0 0
      %1132 = vmatpush.bf16.xpose.msra.mxu0 0
      %1133 = vmatpush.bf16.xpose.msra.mxu0 0
      %1134 = vmatpush.bf16.xpose.msra.mxu0 0
      %1135 = vmatpush.bf16.xpose.msra.mxu0 0
      %1136 = vmatpush.bf16.xpose.msra.mxu0 0
      %1137 = vmatpush.bf16.xpose.msra.mxu0 0
      %1138 = vmatpush.bf16.xpose.msra.mxu0 %v1129
      %1139 = vmatmul.bf16.gmra.mxu0 %v1126
      %v1140 = vpop.f32.mrf.mxu0
      %v1141 = vadd.f32 %v1117, %v1140
      %v1142 = vpop.f32.mrf.mxu0
      %v1143 = vadd.f32 %v1119, %v1142
      %1144 = vdwg.mxu0
      %v1145 = vadd.f32 %v1141, %v565
      %v1146 = vadd.f32 %v1143, %v565
      %v1147 = vsel %vm844, %v1145, -inf
      %1148 = vmax.xlane.f32.xlu0 %v1147
      %v1149 = vpop.xlane.xlu0 %1148
      %v1150 = vsel %vm844, %v1146, -inf
      %1151 = vmax.xlane.f32.xlu0 %v1150
      %v1152 = vpop.xlane.xlu0 %1151
      %v1153 = vsub.f32 %v1145, %v1149
      %v1154 = vsub.f32 %v1146, %v1152
      %v1155 = vmul.f32 %v1153, 1.442695
      %v1156 = vpow.pop %v1155
      %v1157 = vmul.f32 %v1154, 1.442695
      %v1158 = vpow.pop %v1157
      %v1159 = vsel %vm844, %v1156, 0.0
      %1160 = vadd.xlane.f32.xlu0 %v1159
      %v1161 = vpop.xlane.xlu0 %1160
      %v1162 = vsel %vm844, %v1158, 0.0
      %1163 = vadd.xlane.f32.xlu0 %v1162
      %v1164 = vpop.xlane.xlu0 %1163
      %v1165 = vrcp.pop %v1161
      %v1166 = vrcp.pop %v1164
      %v1167 = vmul.f32 %v1156, %v1165
      %v1168 = vmul.f32 %v1158, %v1166
      %v1169 = vpack.c.bf16 %v1167, %v1167
      %v1170 = vpack.c.bf16 %v1168, %v1168
      %v1173 = vunpack.c.l.b16 %v1169
      %v1174 = vunpack.c.l.b16 %v1170
      %v1175 = vpack.c.b16 %v1174, %v1173
      %1176 = vrot.lane.b32.xlu0 %v878, 40
      %v1177 = vpop.permute.xlu0 %1176
      %v1180 = vsel %vm844, %v1175, 0
      %1182 = vmatpush.bf16.msra.mxu0 0
      %1183 = vmatpush.bf16.msra.mxu0 0
      %1184 = vmatpush.bf16.msra.mxu0 0
      %1185 = vmatpush.bf16.msra.mxu0 0
      %1186 = vmatpush.bf16.msra.mxu0 0
      %1187 = vmatpush.bf16.msra.mxu0 0
      %1188 = vmatpush.bf16.msra.mxu0 0
      %1189 = vmatpush.bf16.msra.mxu0 %v1177
      %1190 = vmatmul.bf16.gmra.mxu0 %v1180
      %v1191 = vpop.f32.mrf.mxu0
      %v1192 = vadd.f32 0.0, %v1191
      %v1193 = vpop.f32.mrf.mxu0
      %v1194 = vadd.f32 0.0, %v1193
      %1195 = vdwg.mxu0
      %1198 = vrot.lane.b32.xlu0 %v994, 8
      %v1199 = vpop.permute.xlu0 %1198
      %1200 = vrot.lane.b32.xlu0 %v996, 8
      %v1201 = vpop.permute.xlu0 %1200
      %1206 = vrot.lane.b32.xlu0 %v1093, 16
      %v1207 = vpop.permute.xlu0 %1206
      %1208 = vrot.lane.b32.xlu0 %v1095, 16
      %v1209 = vpop.permute.xlu0 %1208
      %1214 = vrot.lane.b32.xlu0 %v1192, 24
      %v1215 = vpop.permute.xlu0 %1214
      %1216 = vrot.lane.b32.xlu0 %v1194, 24
      %v1217 = vpop.permute.xlu0 %1216
      %vm1220 = vcmask 64512
      %v1221 = vsel %vm1220, %v895, %v1199
      %v1222 = vsel %vm1220, %v897, %v1201
      %v1223 = vsel %vm844, %v1221, %v1207
      %v1224 = vsel %vm844, %v1222, %v1209
      %vm1225 = vcmask 195584
      %v1226 = vsel %vm1225, %v1223, %v1215
      %v1227 = vsel %vm1225, %v1224, %v1217
      %v1228 = vpack.c.bf16 %v1227, %v1226
      %v1229 = vld [vmem:[%s7] sm:$0xf]
      %v1230 = vld [vmem:[%s7 + $0x4] sm:$0xf]
      %v1231 = vld [vmem:[%s7 + $0x8] sm:$0xf]
      %v1232 = vld [vmem:[%s7 + $0xc] sm:$0xf]
      %v1233 = vld [vmem:[%s8] sm:$0x1]
      %v1234 = vunpack.c.l.bf16 %v1233
      %v1235 = vperm.slane %v1234, 0
      %v1240 = vunpack.c.l.b16 %v1229
      %v1241 = vunpack.c.l.b16 %v1230
      %v1242 = vunpack.c.l.b16 %v1231
      %v1243 = vunpack.c.l.b16 %v1232
      %v1244 = vpack.c.b16 %v1241, %v1240
      %v1245 = vpack.c.b16 %v1243, %v1242
      %v1249 = vsel %vm570, %v1228, 0
      %1251 = vmatpush.bf16.msra.mxu0 0
      %1252 = vmatpush.bf16.msra.mxu0 0
      %1253 = vmatpush.bf16.msra.mxu0 0
      %1254 = vmatpush.bf16.msra.mxu0 0
      %1255 = vmatpush.bf16.msra.mxu0 0
      %1256 = vmatpush.bf16.msra.mxu0 0
      %1257 = vmatpush.bf16.msra.mxu0 %v1245
      %1258 = vmatpush.bf16.msra.mxu0 %v1244
      %1259 = vmatmul.bf16.gmra.mxu0 %v1249
      %v1260 = vpop.f32.mrf.mxu0
      %v1261 = vadd.f32 %v1235, %v1260
      %v1262 = vpop.f32.mrf.mxu0
      %v1263 = vadd.f32 %v1235, %v1262
      %1264 = vdwg.mxu0
      %v1265 = vadd.f32 %v552, %v1261
      %v1266 = vadd.f32 %v553, %v1263
      %v1267 = vld [vmem:[%s9] sm:$0x1]
      %v1268 = vunpack.c.l.bf16 %v1267
      %v1269 = vld [vmem:[%s10] sm:$0x1]
      %v1270 = vunpack.c.l.bf16 %v1269
      %v1271 = vsel %vm570, %v1265, 0.0
      %1272 = vadd.xlane.f32.xlu0 %v1271
      %v1273 = vpop.xlane.xlu0 %1272
      %v1274 = vsel %vm570, %v1266, 0.0
      %1275 = vadd.xlane.f32.xlu0 %v1274
      %v1276 = vpop.xlane.xlu0 %1275
      %v1277 = vmul.f32 %v1273, %v583
      %v1278 = vmul.f32 %v1276, %v583
      %v1279 = vsub.f32 %v1265, %v1277
      %v1280 = vsub.f32 %v1266, %v1278
      %v1281 = vmul.f32 %v1279, %v1279
      %v1282 = vmul.f32 %v1280, %v1280
      %v1283 = vsel %vm570, %v1281, 0.0
      %1284 = vadd.xlane.f32.xlu0 %v1283
      %v1285 = vpop.xlane.xlu0 %1284
      %v1286 = vsel %vm570, %v1282, 0.0
      %1287 = vadd.xlane.f32.xlu0 %v1286
      %v1288 = vpop.xlane.xlu0 %1287
      %v1289 = vmul.f32 %v1285, %v583
      %v1290 = vmul.f32 %v1288, %v583
      %v1291 = vadd.f32 %v1289, 1e-05
      %v1292 = vadd.f32 %v1290, 1e-05
      %v1293 = vrsqrt.pop %v1291
      %v1294 = vmul.f32 %v1293, %v1291
      %v1295 = vmul.f32 %v1294, %v1293
      %v1296 = vmul.f32 0.5, %v1295
      %v1297 = vsub.f32 1.5, %v1296
      %v1298 = vmul.f32 %v1293, %v1297
      %vm1299 = vweird.f32 %v1291
      %vm1300 = vweird.f32 %v1293
      %vm1301 = vmor %vm1299, %vm1300
      %v1302 = vsel %vm1301, %v1293, %v1298
      %v1303 = vrsqrt.pop %v1292
      %v1304 = vmul.f32 %v1303, %v1292
      %v1305 = vmul.f32 %v1304, %v1303
      %v1306 = vmul.f32 0.5, %v1305
      %v1307 = vsub.f32 1.5, %v1306
      %v1308 = vmul.f32 %v1303, %v1307
      %vm1309 = vweird.f32 %v1292
      %vm1310 = vweird.f32 %v1303
      %vm1311 = vmor %vm1309, %vm1310
      %v1312 = vsel %vm1311, %v1303, %v1308
      %v1313 = vmul.f32 %v1279, %v1302
      %v1314 = vmul.f32 %v1280, %v1312
      %v1315 = vperm.slane %v1268, 0
      %v1316 = vmul.f32 %v1313, %v1315
      %v1317 = vmul.f32 %v1314, %v1315
      %v1318 = vperm.slane %v1270, 0
      %v1319 = vadd.f32 %v1316, %v1318
      %v1320 = vadd.f32 %v1317, %v1318
      %v1321 = vpack.c.bf16 %v1320, %v1319
      %v1322 = vld [vmem:[%s11] sm:$0xf]
      %v1323 = vld [vmem:[%s11 + $0x4] sm:$0xf]
      %v1324 = vld [vmem:[%s11 + $0x8] sm:$0xf]
      %v1325 = vld [vmem:[%s11 + $0xc] sm:$0xf]
      %v1326 = vld [vmem:[%s12] sm:$0x1]
      %v1327 = vunpack.c.l.bf16 %v1326
      %v1328 = vperm.slane %v1327, 0
      %v1333 = vunpack.c.l.b16 %v1322
      %v1334 = vunpack.c.l.b16 %v1323
      %v1335 = vunpack.c.l.b16 %v1324
      %v1336 = vunpack.c.l.b16 %v1325
      %v1337 = vpack.c.b16 %v1334, %v1333
      %v1338 = vpack.c.b16 %v1336, %v1335
      %v1342 = vsel %vm570, %v1321, 0
      %1344 = vmatpush.bf16.msra.mxu0 0
      %1345 = vmatpush.bf16.msra.mxu0 0
      %1346 = vmatpush.bf16.msra.mxu0 0
      %1347 = vmatpush.bf16.msra.mxu0 0
      %1348 = vmatpush.bf16.msra.mxu0 0
      %1349 = vmatpush.bf16.msra.mxu0 0
      %1350 = vmatpush.bf16.msra.mxu0 %v1338
      %1351 = vmatpush.bf16.msra.mxu0 %v1337
      %1352 = vmatmul.bf16.gmra.mxu0 %v1342
      %v1353 = vpop.f32.mrf.mxu0
      %v1354 = vadd.f32 %v1328, %v1353
      %v1355 = vpop.f32.mrf.mxu0
      %v1356 = vadd.f32 %v1328, %v1355
      %1357 = vdwg.mxu0
      %v1358 = vmul.f32 %v1354, %v1354
      %v1359 = vmul.f32 %v1356, %v1356
      %v1360 = vmul.f32 %v1354, %v1358
      %v1361 = vmul.f32 %v1356, %v1359
      %v1362 = vmul.f32 %v1360, 0.044715
      %v1363 = vmul.f32 %v1361, 0.044715
      %v1364 = vadd.f32 %v1354, %v1362
      %v1365 = vadd.f32 %v1356, %v1363
      %v1366 = vmul.f32 %v1364, 0.7978846
      %v1367 = vmul.f32 %v1365, 0.7978846
      %v1368 = vtanh.pop %v1366
      %v1369 = vtanh.pop %v1367
      %v1370 = vadd.f32 %v1368, 1.0
      %v1371 = vadd.f32 %v1369, 1.0
      %v1372 = vmul.f32 %v1370, 0.5
      %v1373 = vmul.f32 %v1371, 0.5
      %v1374 = vmul.f32 %v1354, %v1372
      %v1375 = vmul.f32 %v1356, %v1373
      %v1376 = vpack.c.bf16 %v1375, %v1374
      %v1377 = vld [vmem:[%s13] sm:$0xf]
      %v1378 = vld [vmem:[%s13 + $0x4] sm:$0xf]
      %v1379 = vld [vmem:[%s13 + $0x8] sm:$0xf]
      %v1380 = vld [vmem:[%s13 + $0xc] sm:$0xf]
      %v1381 = vld [vmem:[%s13 + $0x10] sm:$0xf]
      %v1382 = vld [vmem:[%s13 + $0x14] sm:$0xf]
      %v1383 = vld [vmem:[%s13 + $0x18] sm:$0xf]
      %v1384 = vld [vmem:[%s13 + $0x1c] sm:$0xf]
      %v1393 = vunpack.c.l.b16 %v1377
      %v1394 = vunpack.c.l.b16 %v1378
      %v1395 = vunpack.c.l.b16 %v1379
      %v1396 = vunpack.c.l.b16 %v1380
      %v1397 = vunpack.c.l.b16 %v1381
      %v1398 = vunpack.c.l.b16 %v1382
      %v1399 = vunpack.c.l.b16 %v1383
      %v1400 = vunpack.c.l.b16 %v1384
      %v1401 = vpack.c.b16 %v1394, %v1393
      %v1402 = vpack.c.b16 %v1396, %v1395
      %v1403 = vpack.c.b16 %v1398, %v1397
      %v1404 = vpack.c.b16 %v1400, %v1399
      %vm1409 = vcmask 523264
      %v1411 = vsel %vm1409, %v1376, 0
      %1413 = vmatpush.bf16.msra.mxu0 0
      %1414 = vmatpush.bf16.msra.mxu0 0
      %1415 = vmatpush.bf16.msra.mxu0 0
      %1416 = vmatpush.bf16.msra.mxu0 0
      %1417 = vmatpush.bf16.msra.mxu0 %v1404
      %1418 = vmatpush.bf16.msra.mxu0 %v1403
      %1419 = vmatpush.bf16.msra.mxu0 %v1402
      %1420 = vmatpush.bf16.msra.mxu0 %v1401
      %1421 = vmatmul.bf16.gmra.mxu0 %v1411
      %v1422 = vpop.f32.mrf.mxu0
      %v1423 = vadd.f32 0.0, %v1422
      %v1424 = vpop.f32.mrf.mxu0
      %v1425 = vadd.f32 0.0, %v1424
      %1426 = vdwg.mxu0
      %v1427 = vadd.f32 %v1265, %v1423
      %v1428 = vadd.f32 %v1266, %v1425
      %v1429 = vld [vmem:[%s14] sm:$0x1]
      %v1430 = vunpack.c.l.bf16 %v1429
      %v1431 = vperm.slane %v1430, 0
      %v1432 = vadd.f32 %v1427, %v1431
      %v1433 = vadd.f32 %v1428, %v1431
      %s1434 = scalar_lea.vmem %s3, 1
      %v1435 = vld [vmem:[%s1434] sm:$0x1]
      %v1436 = vunpack.c.l.bf16 %v1435
      %s1437 = scalar_lea.vmem %s4, 1
      %v1438 = vld [vmem:[%s1437] sm:$0x1]
      %v1439 = vunpack.c.l.bf16 %v1438
      %v1440 = vsel %vm570, %v1432, 0.0
      %1441 = vadd.xlane.f32.xlu0 %v1440
      %v1442 = vpop.xlane.xlu0 %1441
      %v1443 = vsel %vm570, %v1433, 0.0
      %1444 = vadd.xlane.f32.xlu0 %v1443
      %v1445 = vpop.xlane.xlu0 %1444
      %v1446 = vmul.f32 %v1442, %v583
      %v1447 = vmul.f32 %v1445, %v583
      %v1448 = vsub.f32 %v1432, %v1446
      %v1449 = vsub.f32 %v1433, %v1447
      %v1450 = vmul.f32 %v1448, %v1448
      %v1451 = vmul.f32 %v1449, %v1449
      %v1452 = vsel %vm570, %v1450, 0.0
      %1453 = vadd.xlane.f32.xlu0 %v1452
      %v1454 = vpop.xlane.xlu0 %1453
      %v1455 = vsel %vm570, %v1451, 0.0
      %1456 = vadd.xlane.f32.xlu0 %v1455
      %v1457 = vpop.xlane.xlu0 %1456
      %v1458 = vmul.f32 %v1454, %v583
      %v1459 = vmul.f32 %v1457, %v583
      %v1460 = vadd.f32 %v1458, 1e-05
      %v1461 = vadd.f32 %v1459, 1e-05
      %v1462 = vrsqrt.pop %v1460
      %v1463 = vmul.f32 %v1462, %v1460
      %v1464 = vmul.f32 %v1463, %v1462
      %v1465 = vmul.f32 0.5, %v1464
      %v1466 = vsub.f32 1.5, %v1465
      %v1467 = vmul.f32 %v1462, %v1466
      %vm1468 = vweird.f32 %v1460
      %vm1469 = vweird.f32 %v1462
      %vm1470 = vmor %vm1468, %vm1469
      %v1471 = vsel %vm1470, %v1462, %v1467
      %v1472 = vrsqrt.pop %v1461
      %v1473 = vmul.f32 %v1472, %v1461
      %v1474 = vmul.f32 %v1473, %v1472
      %v1475 = vmul.f32 0.5, %v1474
      %v1476 = vsub.f32 1.5, %v1475
      %v1477 = vmul.f32 %v1472, %v1476
      %vm1478 = vweird.f32 %v1461
      %vm1479 = vweird.f32 %v1472
      %vm1480 = vmor %vm1478, %vm1479
      %v1481 = vsel %vm1480, %v1472, %v1477
      %v1482 = vmul.f32 %v1448, %v1471
      %v1483 = vmul.f32 %v1449, %v1481
      %v1484 = vperm.slane %v1436, 0
      %v1485 = vmul.f32 %v1482, %v1484
      %v1486 = vmul.f32 %v1483, %v1484
      %v1487 = vperm.slane %v1439, 0
      %v1488 = vadd.f32 %v1485, %v1487
      %v1489 = vadd.f32 %v1486, %v1487
      %v1490 = vpack.c.bf16 %v1489, %v1488
      %s1491 = scalar_lea.vmem %s5, 16
      %v1492 = vld [vmem:[%s1491] sm:$0xf]
      %v1493 = vld [vmem:[%s1491 + $0x4] sm:$0xf]
      %v1494 = vld [vmem:[%s1491 + $0x8] sm:$0xf]
      %v1495 = vld [vmem:[%s1491 + $0xc] sm:$0xf]
      %s1496 = scalar_lea.vmem %s6, 1
      %v1497 = vld [vmem:[%s1496] sm:$0x1]
      %v1498 = vunpack.c.l.bf16 %v1497
      %v1499 = vperm.slane %v1498, 0
      %v1504 = vunpack.c.l.b16 %v1492
      %v1505 = vunpack.c.l.b16 %v1493
      %v1506 = vunpack.c.l.b16 %v1494
      %v1507 = vunpack.c.l.b16 %v1495
      %v1508 = vpack.c.b16 %v1505, %v1504
      %v1509 = vpack.c.b16 %v1507, %v1506
      %v1513 = vsel %vm570, %v1490, 0
      %1515 = vmatpush.bf16.msra.mxu0 0
      %1516 = vmatpush.bf16.msra.mxu0 0
      %1517 = vmatpush.bf16.msra.mxu0 0
      %1518 = vmatpush.bf16.msra.mxu0 0
      %1519 = vmatpush.bf16.msra.mxu0 0
      %1520 = vmatpush.bf16.msra.mxu0 0
      %1521 = vmatpush.bf16.msra.mxu0 %v1509
      %1522 = vmatpush.bf16.msra.mxu0 %v1508
      %1523 = vmatmul.bf16.gmra.mxu0 %v1513
      %v1524 = vpop.f32.mrf.mxu0
      %v1525 = vadd.f32 %v1499, %v1524
      %v1526 = vpop.f32.mrf.mxu0
      %v1527 = vadd.f32 %v1499, %v1526
      %1528 = vdwg.mxu0
      %v1529 = vmul.f32 %v1525, %v558
      %v1530 = vmul.f32 %v1527, %v559
      %v1531 = vmul.f32 %v1525, %v670
      %v1532 = vmul.f32 %v1527, %v672
      %1535 = vrot.lane.b32.xlu0 %v1531, 112
      %v1536 = vpop.permute.xlu0 %1535
      %1537 = vrot.lane.b32.xlu0 %v1532, 112
      %v1538 = vpop.permute.xlu0 %1537
      %v1541 = vsub.f32 %v1529, %v1536
      %v1542 = vsub.f32 %v1530, %v1538
      %v1543 = vpack.c.bf16 %v1541, %v1541
      %v1544 = vpack.c.bf16 %v1542, %v1542
      %v1545 = vmul.f32 %v1525, %v692
      %v1546 = vmul.f32 %v1527, %v694
      %v1547 = vmul.f32 %v1525, %v560
      %v1548 = vmul.f32 %v1527, %v561
      %1551 = vrot.lane.b32.xlu0 %v1547, 16
      %v1552 = vpop.permute.xlu0 %1551
      %1553 = vrot.lane.b32.xlu0 %v1548, 16
      %v1554 = vpop.permute.xlu0 %1553
      %v1557 = vadd.f32 %v1545, %v1552
      %v1558 = vadd.f32 %v1546, %v1554
      %v1559 = vpack.c.bf16 %v1557, %v1557
      %v1560 = vpack.c.bf16 %v1558, %v1558
      %v1561 = vmul.f32 %v1525, %v716
      %v1562 = vmul.f32 %v1527, %v718
      %v1563 = vmul.f32 %v1525, %v726
      %v1564 = vmul.f32 %v1527, %v728
      %1567 = vrot.lane.b32.xlu0 %v1563, 112
      %v1568 = vpop.permute.xlu0 %1567
      %1569 = vrot.lane.b32.xlu0 %v1564, 112
      %v1570 = vpop.permute.xlu0 %1569
      %v1573 = vsub.f32 %v1561, %v1568
      %v1574 = vsub.f32 %v1562, %v1570
      %v1575 = vpack.c.bf16 %v1573, %v1573
      %v1576 = vpack.c.bf16 %v1574, %v1574
      %v1577 = vmul.f32 %v1525, %v746
      %v1578 = vmul.f32 %v1527, %v748
      %v1579 = vmul.f32 %v1525, %v754
      %v1580 = vmul.f32 %v1527, %v756
      %1583 = vrot.lane.b32.xlu0 %v1579, 16
      %v1584 = vpop.permute.xlu0 %1583
      %1585 = vrot.lane.b32.xlu0 %v1580, 16
      %v1586 = vpop.permute.xlu0 %1585
      %v1589 = vadd.f32 %v1577, %v1584
      %v1590 = vadd.f32 %v1578, %v1586
      %v1591 = vpack.c.bf16 %v1589, %v1589
      %v1592 = vpack.c.bf16 %v1590, %v1590
      %v1593 = vpack.c.bf16 %v1525, %v1525
      %v1594 = vpack.c.bf16 %v1527, %v1527
      %v1597 = vunpack.c.l.b16 %v1559
      %v1598 = vunpack.c.l.b16 %v1560
      %v1599 = vpack.c.b16 %v1598, %v1597
      %1600 = vrot.lane.b32.xlu0 %v1599, 112
      %v1601 = vpop.permute.xlu0 %1600
      %v1604 = vunpack.c.l.b16 %v1591
      %v1605 = vunpack.c.l.b16 %v1592
      %v1606 = vpack.c.b16 %v1605, %v1604
      %1607 = vrot.lane.b32.xlu0 %v1606, 80
      %v1608 = vpop.permute.xlu0 %1607
      %v1610 = vsel %vm789, %v1601, 0
      %v1613 = vsel %vm789, %v1608, 0
      %1615 = vmatpush.bf16.xpose.msra.mxu0 0
      %1616 = vmatpush.bf16.xpose.msra.mxu0 0
      %1617 = vmatpush.bf16.xpose.msra.mxu0 0
      %1618 = vmatpush.bf16.xpose.msra.mxu0 0
      %1619 = vmatpush.bf16.xpose.msra.mxu0 0
      %1620 = vmatpush.bf16.xpose.msra.mxu0 0
      %1621 = vmatpush.bf16.xpose.msra.mxu0 0
      %1622 = vmatpush.bf16.xpose.msra.mxu0 %v1613
      %1623 = vmatmul.bf16.gmra.mxu0 %v1610
      %v1624 = vpop.f32.mrf.mxu0
      %v1625 = vadd.f32 0.0, %v1624
      %v1626 = vpop.f32.mrf.mxu0
      %v1627 = vadd.f32 0.0, %v1626
      %1628 = vdwg.mxu0
      %v1631 = vunpack.c.l.b16 %v1543
      %v1632 = vunpack.c.l.b16 %v1544
      %v1633 = vpack.c.b16 %v1632, %v1631
      %v1636 = vunpack.c.l.b16 %v1575
      %v1637 = vunpack.c.l.b16 %v1576
      %v1638 = vpack.c.b16 %v1637, %v1636
      %1639 = vrot.lane.b32.xlu0 %v1638, 96
      %v1640 = vpop.permute.xlu0 %1639
      %v1642 = vsel %vm789, %v1633, 0
      %v1645 = vsel %vm789, %v1640, 0
      %1647 = vmatpush.bf16.xpose.msra.mxu0 0
      %1648 = vmatpush.bf16.xpose.msra.mxu0 0
      %1649 = vmatpush.bf16.xpose.msra.mxu0 0
      %1650 = vmatpush.bf16.xpose.msra.mxu0 0
      %1651 = vmatpush.bf16.xpose.msra.mxu0 0
      %1652 = vmatpush.bf16.xpose.msra.mxu0 0
      %1653 = vmatpush.bf16.xpose.msra.mxu0 0
      %1654 = vmatpush.bf16.xpose.msra.mxu0 %v1645
      %1655 = vmatmul.bf16.gmra.mxu0 %v1642
      %v1656 = vpop.f32.mrf.mxu0
      %v1657 = vadd.f32 %v1625, %v1656
      %v1658 = vpop.f32.mrf.mxu0
      %v1659 = vadd.f32 %v1627, %v1658
      %1660 = vdwg.mxu0
      %v1661 = vadd.f32 %v1657, %v565
      %v1662 = vadd.f32 %v1659, %v565
      %v1663 = vsel %vm844, %v1661, -inf
      %1664 = vmax.xlane.f32.xlu0 %v1663
      %v1665 = vpop.xlane.xlu0 %1664
      %v1666 = vsel %vm844, %v1662, -inf
      %1667 = vmax.xlane.f32.xlu0 %v1666
      %v1668 = vpop.xlane.xlu0 %1667
      %v1669 = vsub.f32 %v1661, %v1665
      %v1670 = vsub.f32 %v1662, %v1668
      %v1671 = vmul.f32 %v1669, 1.442695
      %v1672 = vpow.pop %v1671
      %v1673 = vmul.f32 %v1670, 1.442695
      %v1674 = vpow.pop %v1673
      %v1675 = vsel %vm844, %v1672, 0.0
      %1676 = vadd.xlane.f32.xlu0 %v1675
      %v1677 = vpop.xlane.xlu0 %1676
      %v1678 = vsel %vm844, %v1674, 0.0
      %1679 = vadd.xlane.f32.xlu0 %v1678
      %v1680 = vpop.xlane.xlu0 %1679
      %v1681 = vrcp.pop %v1677
      %v1682 = vrcp.pop %v1680
      %v1683 = vmul.f32 %v1672, %v1681
      %v1684 = vmul.f32 %v1674, %v1682
      %v1685 = vpack.c.bf16 %v1683, %v1683
      %v1686 = vpack.c.bf16 %v1684, %v1684
      %v1689 = vunpack.c.l.b16 %v1685
      %v1690 = vunpack.c.l.b16 %v1686
      %v1691 = vpack.c.b16 %v1690, %v1689
      %v1694 = vunpack.c.l.b16 %v1593
      %v1695 = vunpack.c.l.b16 %v1594
      %v1696 = vpack.c.b16 %v1695, %v1694
      %1697 = vrot.lane.b32.xlu0 %v1696, 64
      %v1698 = vpop.permute.xlu0 %1697
      %v1701 = vsel %vm844, %v1691, 0
      %1703 = vmatpush.bf16.msra.mxu0 0
      %1704 = vmatpush.bf16.msra.mxu0 0
      %1705 = vmatpush.bf16.msra.mxu0 0
      %1706 = vmatpush.bf16.msra.mxu0 0
      %1707 = vmatpush.bf16.msra.mxu0 0
      %1708 = vmatpush.bf16.msra.mxu0 0
      %1709 = vmatpush.bf16.msra.mxu0 0
      %1710 = vmatpush.bf16.msra.mxu0 %v1698
      %1711 = vmatmul.bf16.gmra.mxu0 %v1701
      %v1712 = vpop.f32.mrf.mxu0
      %v1713 = vadd.f32 0.0, %v1712
      %v1714 = vpop.f32.mrf.mxu0
      %v1715 = vadd.f32 0.0, %v1714
      %1716 = vdwg.mxu0
      %1717 = vrot.lane.b32.xlu0 %v1599, 108
      %v1718 = vpop.permute.xlu0 %1717
      %1719 = vrot.lane.b32.xlu0 %v1606, 76
      %v1720 = vpop.permute.xlu0 %1719
      %v1722 = vsel %vm789, %v1718, 0
      %v1725 = vsel %vm789, %v1720, 0
      %1727 = vmatpush.bf16.xpose.msra.mxu0 0
      %1728 = vmatpush.bf16.xpose.msra.mxu0 0
      %1729 = vmatpush.bf16.xpose.msra.mxu0 0
      %1730 = vmatpush.bf16.xpose.msra.mxu0 0
      %1731 = vmatpush.bf16.xpose.msra.mxu0 0
      %1732 = vmatpush.bf16.xpose.msra.mxu0 0
      %1733 = vmatpush.bf16.xpose.msra.mxu0 0
      %1734 = vmatpush.bf16.xpose.msra.mxu0 %v1725
      %1735 = vmatmul.bf16.gmra.mxu0 %v1722
      %v1736 = vpop.f32.mrf.mxu0
      %v1737 = vadd.f32 0.0, %v1736
      %v1738 = vpop.f32.mrf.mxu0
      %v1739 = vadd.f32 0.0, %v1738
      %1740 = vdwg.mxu0
      %1741 = vrot.lane.b32.xlu0 %v1633, 124
      %v1742 = vpop.permute.xlu0 %1741
      %1743 = vrot.lane.b32.xlu0 %v1638, 92
      %v1744 = vpop.permute.xlu0 %1743
      %v1746 = vsel %vm789, %v1742, 0
      %v1749 = vsel %vm789, %v1744, 0
      %1751 = vmatpush.bf16.xpose.msra.mxu0 0
      %1752 = vmatpush.bf16.xpose.msra.mxu0 0
      %1753 = vmatpush.bf16.xpose.msra.mxu0 0
      %1754 = vmatpush.bf16.xpose.msra.mxu0 0
      %1755 = vmatpush.bf16.xpose.msra.mxu0 0
      %1756 = vmatpush.bf16.xpose.msra.mxu0 0
      %1757 = vmatpush.bf16.xpose.msra.mxu0 0
      %1758 = vmatpush.bf16.xpose.msra.mxu0 %v1749
      %1759 = vmatmul.bf16.gmra.mxu0 %v1746
      %v1760 = vpop.f32.mrf.mxu0
      %v1761 = vadd.f32 %v1737, %v1760
      %v1762 = vpop.f32.mrf.mxu0
      %v1763 = vadd.f32 %v1739, %v1762
      %1764 = vdwg.mxu0
      %v1765 = vadd.f32 %v1761, %v565
      %v1766 = vadd.f32 %v1763, %v565
      %v1767 = vsel %vm844, %v1765, -inf
      %1768 = vmax.xlane.f32.xlu0 %v1767
      %v1769 = vpop.xlane.xlu0 %1768
      %v1770 = vsel %vm844, %v1766, -inf
      %1771 = vmax.xlane.f32.xlu0 %v1770
      %v1772 = vpop.xlane.xlu0 %1771
      %v1773 = vsub.f32 %v1765, %v1769
      %v1774 = vsub.f32 %v1766, %v1772
      %v1775 = vmul.f32 %v1773, 1.442695
      %v1776 = vpow.pop %v1775
      %v1777 = vmul.f32 %v1774, 1.442695
      %v1778 = vpow.pop %v1777
      %v1779 = vsel %vm844, %v1776, 0.0
      %1780 = vadd.xlane.f32.xlu0 %v1779
      %v1781 = vpop.xlane.xlu0 %1780
      %v1782 = vsel %vm844, %v1778, 0.0
      %1783 = vadd.xlane.f32.xlu0 %v1782
      %v1784 = vpop.xlane.xlu0 %1783
      %v1785 = vrcp.pop %v1781
      %v1786 = vrcp.pop %v1784
      %v1787 = vmul.f32 %v1776, %v1785
      %v1788 = vmul.f32 %v1778, %v1786
      %v1789 = vpack.c.bf16 %v1787, %v1787
      %v1790 = vpack.c.bf16 %v1788, %v1788
      %v1793 = vunpack.c.l.b16 %v1789
      %v1794 = vunpack.c.l.b16 %v1790
      %v1795 = vpack.c.b16 %v1794, %v1793
      %1796 = vrot.lane.b32.xlu0 %v1696, 56
      %v1797 = vpop.permute.xlu0 %1796
      %v1800 = vsel %vm844, %v1795, 0
      %1802 = vmatpush.bf16.msra.mxu0 0
      %1803 = vmatpush.bf16.msra.mxu0 0
      %1804 = vmatpush.bf16.msra.mxu0 0
      %1805 = vmatpush.bf16.msra.mxu0 0
      %1806 = vmatpush.bf16.msra.mxu0 0
      %1807 = vmatpush.bf16.msra.mxu0 0
      %1808 = vmatpush.bf16.msra.mxu0 0
      %1809 = vmatpush.bf16.msra.mxu0 %v1797
      %1810 = vmatmul.bf16.gmra.mxu0 %v1800
      %v1811 = vpop.f32.mrf.mxu0
      %v1812 = vadd.f32 0.0, %v1811
      %v1813 = vpop.f32.mrf.mxu0
      %v1814 = vadd.f32 0.0, %v1813
      %1815 = vdwg.mxu0
      %1816 = vrot.lane.b32.xlu0 %v1599, 104
      %v1817 = vpop.permute.xlu0 %1816
      %1818 = vrot.lane.b32.xlu0 %v1606, 72
      %v1819 = vpop.permute.xlu0 %1818
      %v1821 = vsel %vm789, %v1817, 0
      %v1824 = vsel %vm789, %v1819, 0
      %1826 = vmatpush.bf16.xpose.msra.mxu0 0
      %1827 = vmatpush.bf16.xpose.msra.mxu0 0
      %1828 = vmatpush.bf16.xpose.msra.mxu0 0
      %1829 = vmatpush.bf16.xpose.msra.mxu0 0
      %1830 = vmatpush.bf16.xpose.msra.mxu0 0
      %1831 = vmatpush.bf16.xpose.msra.mxu0 0
      %1832 = vmatpush.bf16.xpose.msra.mxu0 0
      %1833 = vmatpush.bf16.xpose.msra.mxu0 %v1824
      %1834 = vmatmul.bf16.gmra.mxu0 %v1821
      %v1835 = vpop.f32.mrf.mxu0
      %v1836 = vadd.f32 0.0, %v1835
      %v1837 = vpop.f32.mrf.mxu0
      %v1838 = vadd.f32 0.0, %v1837
      %1839 = vdwg.mxu0
      %1840 = vrot.lane.b32.xlu0 %v1633, 120
      %v1841 = vpop.permute.xlu0 %1840
      %1842 = vrot.lane.b32.xlu0 %v1638, 88
      %v1843 = vpop.permute.xlu0 %1842
      %v1845 = vsel %vm789, %v1841, 0
      %v1848 = vsel %vm789, %v1843, 0
      %1850 = vmatpush.bf16.xpose.msra.mxu0 0
      %1851 = vmatpush.bf16.xpose.msra.mxu0 0
      %1852 = vmatpush.bf16.xpose.msra.mxu0 0
      %1853 = vmatpush.bf16.xpose.msra.mxu0 0
      %1854 = vmatpush.bf16.xpose.msra.mxu0 0
      %1855 = vmatpush.bf16.xpose.msra.mxu0 0
      %1856 = vmatpush.bf16.xpose.msra.mxu0 0
      %1857 = vmatpush.bf16.xpose.msra.mxu0 %v1848
      %1858 = vmatmul.bf16.gmra.mxu0 %v1845
      %v1859 = vpop.f32.mrf.mxu0
      %v1860 = vadd.f32 %v1836, %v1859
      %v1861 = vpop.f32.mrf.mxu0
      %v1862 = vadd.f32 %v1838, %v1861
      %1863 = vdwg.mxu0
      %v1864 = vadd.f32 %v1860, %v565
      %v1865 = vadd.f32 %v1862, %v565
      %v1866 = vsel %vm844, %v1864, -inf
      %1867 = vmax.xlane.f32.xlu0 %v1866
      %v1868 = vpop.xlane.xlu0 %1867
      %v1869 = vsel %vm844, %v1865, -inf
      %1870 = vmax.xlane.f32.xlu0 %v1869
      %v1871 = vpop.xlane.xlu0 %1870
      %v1872 = vsub.f32 %v1864, %v1868
      %v1873 = vsub.f32 %v1865, %v1871
      %v1874 = vmul.f32 %v1872, 1.442695
      %v1875 = vpow.pop %v1874
      %v1876 = vmul.f32 %v1873, 1.442695
      %v1877 = vpow.pop %v1876
      %v1878 = vsel %vm844, %v1875, 0.0
      %1879 = vadd.xlane.f32.xlu0 %v1878
      %v1880 = vpop.xlane.xlu0 %1879
      %v1881 = vsel %vm844, %v1877, 0.0
      %1882 = vadd.xlane.f32.xlu0 %v1881
      %v1883 = vpop.xlane.xlu0 %1882
      %v1884 = vrcp.pop %v1880
      %v1885 = vrcp.pop %v1883
      %v1886 = vmul.f32 %v1875, %v1884
      %v1887 = vmul.f32 %v1877, %v1885
      %v1888 = vpack.c.bf16 %v1886, %v1886
      %v1889 = vpack.c.bf16 %v1887, %v1887
      %v1892 = vunpack.c.l.b16 %v1888
      %v1893 = vunpack.c.l.b16 %v1889
      %v1894 = vpack.c.b16 %v1893, %v1892
      %1895 = vrot.lane.b32.xlu0 %v1696, 48
      %v1896 = vpop.permute.xlu0 %1895
      %v1899 = vsel %vm844, %v1894, 0
      %1901 = vmatpush.bf16.msra.mxu0 0
      %1902 = vmatpush.bf16.msra.mxu0 0
      %1903 = vmatpush.bf16.msra.mxu0 0
      %1904 = vmatpush.bf16.msra.mxu0 0
      %1905 = vmatpush.bf16.msra.mxu0 0
      %1906 = vmatpush.bf16.msra.mxu0 0
      %1907 = vmatpush.bf16.msra.mxu0 0
      %1908 = vmatpush.bf16.msra.mxu0 %v1896
      %1909 = vmatmul.bf16.gmra.mxu0 %v1899
      %v1910 = vpop.f32.mrf.mxu0
      %v1911 = vadd.f32 0.0, %v1910
      %v1912 = vpop.f32.mrf.mxu0
      %v1913 = vadd.f32 0.0, %v1912
      %1914 = vdwg.mxu0
      %1915 = vrot.lane.b32.xlu0 %v1599, 100
      %v1916 = vpop.permute.xlu0 %1915
      %1917 = vrot.lane.b32.xlu0 %v1606, 68
      %v1918 = vpop.permute.xlu0 %1917
      %v1920 = vsel %vm789, %v1916, 0
      %v1923 = vsel %vm789, %v1918, 0
      %1925 = vmatpush.bf16.xpose.msra.mxu0 0
      %1926 = vmatpush.bf16.xpose.msra.mxu0 0
      %1927 = vmatpush.bf16.xpose.msra.mxu0 0
      %1928 = vmatpush.bf16.xpose.msra.mxu0 0
      %1929 = vmatpush.bf16.xpose.msra.mxu0 0
      %1930 = vmatpush.bf16.xpose.msra.mxu0 0
      %1931 = vmatpush.bf16.xpose.msra.mxu0 0
      %1932 = vmatpush.bf16.xpose.msra.mxu0 %v1923
      %1933 = vmatmul.bf16.gmra.mxu0 %v1920
      %v1934 = vpop.f32.mrf.mxu0
      %v1935 = vadd.f32 0.0, %v1934
      %v1936 = vpop.f32.mrf.mxu0
      %v1937 = vadd.f32 0.0, %v1936
      %1938 = vdwg.mxu0
      %1939 = vrot.lane.b32.xlu0 %v1633, 116
      %v1940 = vpop.permute.xlu0 %1939
      %1941 = vrot.lane.b32.xlu0 %v1638, 84
      %v1942 = vpop.permute.xlu0 %1941
      %v1944 = vsel %vm789, %v1940, 0
      %v1947 = vsel %vm789, %v1942, 0
      %1949 = vmatpush.bf16.xpose.msra.mxu0 0
      %1950 = vmatpush.bf16.xpose.msra.mxu0 0
      %1951 = vmatpush.bf16.xpose.msra.mxu0 0
      %1952 = vmatpush.bf16.xpose.msra.mxu0 0
      %1953 = vmatpush.bf16.xpose.msra.mxu0 0
      %1954 = vmatpush.bf16.xpose.msra.mxu0 0
      %1955 = vmatpush.bf16.xpose.msra.mxu0 0
      %1956 = vmatpush.bf16.xpose.msra.mxu0 %v1947
      %1957 = vmatmul.bf16.gmra.mxu0 %v1944
      %v1958 = vpop.f32.mrf.mxu0
      %v1959 = vadd.f32 %v1935, %v1958
      %v1960 = vpop.f32.mrf.mxu0
      %v1961 = vadd.f32 %v1937, %v1960
      %1962 = vdwg.mxu0
      %v1963 = vadd.f32 %v1959, %v565
      %v1964 = vadd.f32 %v1961, %v565
      %v1965 = vsel %vm844, %v1963, -inf
      %1966 = vmax.xlane.f32.xlu0 %v1965
      %v1967 = vpop.xlane.xlu0 %1966
      %v1968 = vsel %vm844, %v1964, -inf
      %1969 = vmax.xlane.f32.xlu0 %v1968
      %v1970 = vpop.xlane.xlu0 %1969
      %v1971 = vsub.f32 %v1963, %v1967
      %v1972 = vsub.f32 %v1964, %v1970
      %v1973 = vmul.f32 %v1971, 1.442695
      %v1974 = vpow.pop %v1973
      %v1975 = vmul.f32 %v1972, 1.442695
      %v1976 = vpow.pop %v1975
      %v1977 = vsel %vm844, %v1974, 0.0
      %1978 = vadd.xlane.f32.xlu0 %v1977
      %v1979 = vpop.xlane.xlu0 %1978
      %v1980 = vsel %vm844, %v1976, 0.0
      %1981 = vadd.xlane.f32.xlu0 %v1980
      %v1982 = vpop.xlane.xlu0 %1981
      %v1983 = vrcp.pop %v1979
      %v1984 = vrcp.pop %v1982
      %v1985 = vmul.f32 %v1974, %v1983
      %v1986 = vmul.f32 %v1976, %v1984
      %v1987 = vpack.c.bf16 %v1985, %v1985
      %v1988 = vpack.c.bf16 %v1986, %v1986
      %v1991 = vunpack.c.l.b16 %v1987
      %v1992 = vunpack.c.l.b16 %v1988
      %v1993 = vpack.c.b16 %v1992, %v1991
      %1994 = vrot.lane.b32.xlu0 %v1696, 40
      %v1995 = vpop.permute.xlu0 %1994
      %v1998 = vsel %vm844, %v1993, 0
      %2000 = vmatpush.bf16.msra.mxu0 0
      %2001 = vmatpush.bf16.msra.mxu0 0
      %2002 = vmatpush.bf16.msra.mxu0 0
      %2003 = vmatpush.bf16.msra.mxu0 0
      %2004 = vmatpush.bf16.msra.mxu0 0
      %2005 = vmatpush.bf16.msra.mxu0 0
      %2006 = vmatpush.bf16.msra.mxu0 0
      %2007 = vmatpush.bf16.msra.mxu0 %v1995
      %2008 = vmatmul.bf16.gmra.mxu0 %v1998
      %v2009 = vpop.f32.mrf.mxu0
      %v2010 = vadd.f32 0.0, %v2009
      %v2011 = vpop.f32.mrf.mxu0
      %v2012 = vadd.f32 0.0, %v2011
      %2013 = vdwg.mxu0
      %2016 = vrot.lane.b32.xlu0 %v1812, 8
      %v2017 = vpop.permute.xlu0 %2016
      %2018 = vrot.lane.b32.xlu0 %v1814, 8
      %v2019 = vpop.permute.xlu0 %2018
      %2024 = vrot.lane.b32.xlu0 %v1911, 16
      %v2025 = vpop.permute.xlu0 %2024
      %2026 = vrot.lane.b32.xlu0 %v1913, 16
      %v2027 = vpop.permute.xlu0 %2026
      %2032 = vrot.lane.b32.xlu0 %v2010, 24
      %v2033 = vpop.permute.xlu0 %2032
      %2034 = vrot.lane.b32.xlu0 %v2012, 24
      %v2035 = vpop.permute.xlu0 %2034
      %v2038 = vsel %vm1220, %v1713, %v2017
      %v2039 = vsel %vm1220, %v1715, %v2019
      %v2040 = vsel %vm844, %v2038, %v2025
      %v2041 = vsel %vm844, %v2039, %v2027
      %v2042 = vsel %vm1225, %v2040, %v2033
      %v2043 = vsel %vm1225, %v2041, %v2035
      %v2044 = vpack.c.bf16 %v2043, %v2042
      %s2045 = scalar_lea.vmem %s7, 16
      %v2046 = vld [vmem:[%s2045] sm:$0xf]
      %v2047 = vld [vmem:[%s2045 + $0x4] sm:$0xf]
      %v2048 = vld [vmem:[%s2045 + $0x8] sm:$0xf]
      %v2049 = vld [vmem:[%s2045 + $0xc] sm:$0xf]
      %s2050 = scalar_lea.vmem %s8, 1
      %v2051 = vld [vmem:[%s2050] sm:$0x1]
      %v2052 = vunpack.c.l.bf16 %v2051
      %v2053 = vperm.slane %v2052, 0
      %v2058 = vunpack.c.l.b16 %v2046
      %v2059 = vunpack.c.l.b16 %v2047
      %v2060 = vunpack.c.l.b16 %v2048
      %v2061 = vunpack.c.l.b16 %v2049
      %v2062 = vpack.c.b16 %v2059, %v2058
      %v2063 = vpack.c.b16 %v2061, %v2060
      %v2067 = vsel %vm570, %v2044, 0
      %2069 = vmatpush.bf16.msra.mxu0 0
      %2070 = vmatpush.bf16.msra.mxu0 0
      %2071 = vmatpush.bf16.msra.mxu0 0
      %2072 = vmatpush.bf16.msra.mxu0 0
      %2073 = vmatpush.bf16.msra.mxu0 0
      %2074 = vmatpush.bf16.msra.mxu0 0
      %2075 = vmatpush.bf16.msra.mxu0 %v2063
      %2076 = vmatpush.bf16.msra.mxu0 %v2062
      %2077 = vmatmul.bf16.gmra.mxu0 %v2067
      %v2078 = vpop.f32.mrf.mxu0
      %v2079 = vadd.f32 %v2053, %v2078
      %v2080 = vpop.f32.mrf.mxu0
      %v2081 = vadd.f32 %v2053, %v2080
      %2082 = vdwg.mxu0
      %v2083 = vadd.f32 %v1432, %v2079
      %v2084 = vadd.f32 %v1433, %v2081
      %s2085 = scalar_lea.vmem %s9, 1
      %v2086 = vld [vmem:[%s2085] sm:$0x1]
      %v2087 = vunpack.c.l.bf16 %v2086
      %s2088 = scalar_lea.vmem %s10, 1
      %v2089 = vld [vmem:[%s2088] sm:$0x1]
      %v2090 = vunpack.c.l.bf16 %v2089
      %v2091 = vsel %vm570, %v2083, 0.0
      %2092 = vadd.xlane.f32.xlu0 %v2091
      %v2093 = vpop.xlane.xlu0 %2092
      %v2094 = vsel %vm570, %v2084, 0.0
      %2095 = vadd.xlane.f32.xlu0 %v2094
      %v2096 = vpop.xlane.xlu0 %2095
      %v2097 = vmul.f32 %v2093, %v583
      %v2098 = vmul.f32 %v2096, %v583
      %v2099 = vsub.f32 %v2083, %v2097
      %v2100 = vsub.f32 %v2084, %v2098
      %v2101 = vmul.f32 %v2099, %v2099
      %v2102 = vmul.f32 %v2100, %v2100
      %v2103 = vsel %vm570, %v2101, 0.0
      %2104 = vadd.xlane.f32.xlu0 %v2103
      %v2105 = vpop.xlane.xlu0 %2104
      %v2106 = vsel %vm570, %v2102, 0.0
      %2107 = vadd.xlane.f32.xlu0 %v2106
      %v2108 = vpop.xlane.xlu0 %2107
      %v2109 = vmul.f32 %v2105, %v583
      %v2110 = vmul.f32 %v2108, %v583
      %v2111 = vadd.f32 %v2109, 1e-05
      %v2112 = vadd.f32 %v2110, 1e-05
      %v2113 = vrsqrt.pop %v2111
      %v2114 = vmul.f32 %v2113, %v2111
      %v2115 = vmul.f32 %v2114, %v2113
      %v2116 = vmul.f32 0.5, %v2115
      %v2117 = vsub.f32 1.5, %v2116
      %v2118 = vmul.f32 %v2113, %v2117
      %vm2119 = vweird.f32 %v2111
      %vm2120 = vweird.f32 %v2113
      %vm2121 = vmor %vm2119, %vm2120
      %v2122 = vsel %vm2121, %v2113, %v2118
      %v2123 = vrsqrt.pop %v2112
      %v2124 = vmul.f32 %v2123, %v2112
      %v2125 = vmul.f32 %v2124, %v2123
      %v2126 = vmul.f32 0.5, %v2125
      %v2127 = vsub.f32 1.5, %v2126
      %v2128 = vmul.f32 %v2123, %v2127
      %vm2129 = vweird.f32 %v2112
      %vm2130 = vweird.f32 %v2123
      %vm2131 = vmor %vm2129, %vm2130
      %v2132 = vsel %vm2131, %v2123, %v2128
      %v2133 = vmul.f32 %v2099, %v2122
      %v2134 = vmul.f32 %v2100, %v2132
      %v2135 = vperm.slane %v2087, 0
      %v2136 = vmul.f32 %v2133, %v2135
      %v2137 = vmul.f32 %v2134, %v2135
      %v2138 = vperm.slane %v2090, 0
      %v2139 = vadd.f32 %v2136, %v2138
      %v2140 = vadd.f32 %v2137, %v2138
      %v2141 = vpack.c.bf16 %v2140, %v2139
      %s2142 = scalar_lea.vmem %s11, 16
      %v2143 = vld [vmem:[%s2142] sm:$0xf]
      %v2144 = vld [vmem:[%s2142 + $0x4] sm:$0xf]
      %v2145 = vld [vmem:[%s2142 + $0x8] sm:$0xf]
      %v2146 = vld [vmem:[%s2142 + $0xc] sm:$0xf]
      %s2147 = scalar_lea.vmem %s12, 1
      %v2148 = vld [vmem:[%s2147] sm:$0x1]
      %v2149 = vunpack.c.l.bf16 %v2148
      %v2150 = vperm.slane %v2149, 0
      %v2155 = vunpack.c.l.b16 %v2143
      %v2156 = vunpack.c.l.b16 %v2144
      %v2157 = vunpack.c.l.b16 %v2145
      %v2158 = vunpack.c.l.b16 %v2146
      %v2159 = vpack.c.b16 %v2156, %v2155
      %v2160 = vpack.c.b16 %v2158, %v2157
      %v2164 = vsel %vm570, %v2141, 0
      %2166 = vmatpush.bf16.msra.mxu0 0
      %2167 = vmatpush.bf16.msra.mxu0 0
      %2168 = vmatpush.bf16.msra.mxu0 0
      %2169 = vmatpush.bf16.msra.mxu0 0
      %2170 = vmatpush.bf16.msra.mxu0 0
      %2171 = vmatpush.bf16.msra.mxu0 0
      %2172 = vmatpush.bf16.msra.mxu0 %v2160
      %2173 = vmatpush.bf16.msra.mxu0 %v2159
      %2174 = vmatmul.bf16.gmra.mxu0 %v2164
      %v2175 = vpop.f32.mrf.mxu0
      %v2176 = vadd.f32 %v2150, %v2175
      %v2177 = vpop.f32.mrf.mxu0
      %v2178 = vadd.f32 %v2150, %v2177
      %2179 = vdwg.mxu0
      %v2180 = vmul.f32 %v2176, %v2176
      %v2181 = vmul.f32 %v2178, %v2178
      %v2182 = vmul.f32 %v2176, %v2180
      %v2183 = vmul.f32 %v2178, %v2181
      %v2184 = vmul.f32 %v2182, 0.044715
      %v2185 = vmul.f32 %v2183, 0.044715
      %v2186 = vadd.f32 %v2176, %v2184
      %v2187 = vadd.f32 %v2178, %v2185
      %v2188 = vmul.f32 %v2186, 0.7978846
      %v2189 = vmul.f32 %v2187, 0.7978846
      %v2190 = vtanh.pop %v2188
      %v2191 = vtanh.pop %v2189
      %v2192 = vadd.f32 %v2190, 1.0
      %v2193 = vadd.f32 %v2191, 1.0
      %v2194 = vmul.f32 %v2192, 0.5
      %v2195 = vmul.f32 %v2193, 0.5
      %v2196 = vmul.f32 %v2176, %v2194
      %v2197 = vmul.f32 %v2178, %v2195
      %v2198 = vpack.c.bf16 %v2197, %v2196
      %s2199 = scalar_lea.vmem %s13, 32
      %v2200 = vld [vmem:[%s2199] sm:$0xf]
      %v2201 = vld [vmem:[%s2199 + $0x4] sm:$0xf]
      %v2202 = vld [vmem:[%s2199 + $0x8] sm:$0xf]
      %v2203 = vld [vmem:[%s2199 + $0xc] sm:$0xf]
      %v2204 = vld [vmem:[%s2199 + $0x10] sm:$0xf]
      %v2205 = vld [vmem:[%s2199 + $0x14] sm:$0xf]
      %v2206 = vld [vmem:[%s2199 + $0x18] sm:$0xf]
      %v2207 = vld [vmem:[%s2199 + $0x1c] sm:$0xf]
      %v2216 = vunpack.c.l.b16 %v2200
      %v2217 = vunpack.c.l.b16 %v2201
      %v2218 = vunpack.c.l.b16 %v2202
      %v2219 = vunpack.c.l.b16 %v2203
      %v2220 = vunpack.c.l.b16 %v2204
      %v2221 = vunpack.c.l.b16 %v2205
      %v2222 = vunpack.c.l.b16 %v2206
      %v2223 = vunpack.c.l.b16 %v2207
      %v2224 = vpack.c.b16 %v2217, %v2216
      %v2225 = vpack.c.b16 %v2219, %v2218
      %v2226 = vpack.c.b16 %v2221, %v2220
      %v2227 = vpack.c.b16 %v2223, %v2222
      %v2233 = vsel %vm1409, %v2198, 0
      %2235 = vmatpush.bf16.msra.mxu0 0
      %2236 = vmatpush.bf16.msra.mxu0 0
      %2237 = vmatpush.bf16.msra.mxu0 0
      %2238 = vmatpush.bf16.msra.mxu0 0
      %2239 = vmatpush.bf16.msra.mxu0 %v2227
      %2240 = vmatpush.bf16.msra.mxu0 %v2226
      %2241 = vmatpush.bf16.msra.mxu0 %v2225
      %2242 = vmatpush.bf16.msra.mxu0 %v2224
      %2243 = vmatmul.bf16.gmra.mxu0 %v2233
      %v2244 = vpop.f32.mrf.mxu0
      %v2245 = vadd.f32 0.0, %v2244
      %v2246 = vpop.f32.mrf.mxu0
      %v2247 = vadd.f32 0.0, %v2246
      %2248 = vdwg.mxu0
      %v2249 = vadd.f32 %v2083, %v2245
      %v2250 = vadd.f32 %v2084, %v2247
      %s2251 = scalar_lea.vmem %s14, 1
      %v2252 = vld [vmem:[%s2251] sm:$0x1]
      %v2253 = vunpack.c.l.bf16 %v2252
      %v2254 = vperm.slane %v2253, 0
      %v2255 = vadd.f32 %v2249, %v2254
      %v2256 = vadd.f32 %v2250, %v2254
      %v2257 = vld [vmem:[%s15] sm:$0x1]
      %v2258 = vunpack.c.l.bf16 %v2257
      %v2259 = vld [vmem:[%s16] sm:$0x1]
      %v2260 = vunpack.c.l.bf16 %v2259
      %v2261 = vsel %vm570, %v2255, 0.0
      %2262 = vadd.xlane.f32.xlu0 %v2261
      %v2263 = vpop.xlane.xlu0 %2262
      %v2264 = vsel %vm570, %v2256, 0.0
      %2265 = vadd.xlane.f32.xlu0 %v2264
      %v2266 = vpop.xlane.xlu0 %2265
      %v2267 = vmul.f32 %v2263, %v583
      %v2268 = vmul.f32 %v2266, %v583
      %v2269 = vsub.f32 %v2255, %v2267
      %v2270 = vsub.f32 %v2256, %v2268
      %v2271 = vmul.f32 %v2269, %v2269
      %v2272 = vmul.f32 %v2270, %v2270
      %v2273 = vsel %vm570, %v2271, 0.0
      %2274 = vadd.xlane.f32.xlu0 %v2273
      %v2275 = vpop.xlane.xlu0 %2274
      %v2276 = vsel %vm570, %v2272, 0.0
      %2277 = vadd.xlane.f32.xlu0 %v2276
      %v2278 = vpop.xlane.xlu0 %2277
      %v2279 = vmul.f32 %v2275, %v583
      %v2280 = vmul.f32 %v2278, %v583
      %v2281 = vadd.f32 %v2279, 1e-05
      %v2282 = vadd.f32 %v2280, 1e-05
      %v2283 = vrsqrt.pop %v2281
      %v2284 = vmul.f32 %v2283, %v2281
      %v2285 = vmul.f32 %v2284, %v2283
      %v2286 = vmul.f32 0.5, %v2285
      %v2287 = vsub.f32 1.5, %v2286
      %v2288 = vmul.f32 %v2283, %v2287
      %vm2289 = vweird.f32 %v2281
      %vm2290 = vweird.f32 %v2283
      %vm2291 = vmor %vm2289, %vm2290
      %v2292 = vsel %vm2291, %v2283, %v2288
      %v2293 = vrsqrt.pop %v2282
      %v2294 = vmul.f32 %v2293, %v2282
      %v2295 = vmul.f32 %v2294, %v2293
      %v2296 = vmul.f32 0.5, %v2295
      %v2297 = vsub.f32 1.5, %v2296
      %v2298 = vmul.f32 %v2293, %v2297
      %vm2299 = vweird.f32 %v2282
      %vm2300 = vweird.f32 %v2293
      %vm2301 = vmor %vm2299, %vm2300
      %v2302 = vsel %vm2301, %v2293, %v2298
      %v2303 = vmul.f32 %v2269, %v2292
      %v2304 = vmul.f32 %v2270, %v2302
      %v2305 = vperm.slane %v2258, 0
      %v2306 = vmul.f32 %v2303, %v2305
      %v2307 = vmul.f32 %v2304, %v2305
      %v2308 = vperm.slane %v2260, 0
      %v2309 = vadd.f32 %v2306, %v2308
      %v2310 = vadd.f32 %v2307, %v2308
      %2311 = vst.msk [vmem:[%s548] sm:$0xff] %vm570, %v2309
      %2312 = vst.msk [vmem:[%s548 + $0x8] sm:$0xff] %vm570, %v2310
      %p2313 = scmp.lt.s32.totalorder %s28, 1
      %s2314 = scalar_select %p2313, %s28, 1
      %s2315 = smul.addr %s2314, 2
      %s2316 = smul.addr %s2315, 8
      %s2317 = scalar_lea.vmem %s17, %s2316
      // Predicated region
      $region89: #{esm2_embed.1} parent=87 // pred_check
        %p2318 = pneg %p408
      $region90: #{esm2_embed.1} parent=87 // pred_check_branch
        %2320 = sbr.rel (%p2318) target = $region92
      $region91: #{esm2_embed.1} parent=87 // pred_region
        _
      $region92: #{esm2_embed.1} parent=87 // pred_fallthru
        _
    $region88: #{esm2_embed.1} parent=5 // pred_fallthru
      _
    %p2321 = scmp.le.s32.totalorder 2, %s23
    // Predicated region
    $region93: #{esm2_embed.1} parent=5 // pred_check
      %p2322 = pneg %p2321
    $region94: #{esm2_embed.1} parent=5 // pred_check_branch
      %2324 = sbr.rel (%p2322) target = $region96
    $region95: #{esm2_embed.1} parent=5 // pred_region
      %s2325 = ssub.s32 %s23, 2
      // Predicated region
      $region97: #{esm2_embed.1} parent=95 // pred_check
        %p2326 = pneg %p414
      $region98: #{esm2_embed.1} parent=95 // pred_check_branch
        %2328 = sbr.rel (%p2326) target = $region100
      $region99: #{esm2_embed.1} parent=95 // pred_region
        %p2329 = scmp.lt.s32.totalorder %s29, 1
        %s2330 = scalar_select %p2329, %s29, 1
        %s2331 = smul.addr %s2330, 2
        %s2332 = smul.addr %s2331, 8
        %s2333 = scalar_lea.vmem %s17, %s2332
      $region100: #{esm2_embed.1} parent=95 // pred_fallthru
        _
    $region96: #{esm2_embed.1} parent=5 // pred_fallthru
      _
  $region6: #{esm2_embed.1} parent=0 // loop_footer
    %s27 = sadd.s32 1, %s23
  $region7: #{esm2_embed.1} parent=0 // loop_footer_branch
    %22 = sbr.rel target = $region3
  $region8: #{esm2_embed.1} parent=0 // loop_exit
    _

</llo_original>
